<compile_context>
chip_gen: v7x
topology: tpu7x:2x2x1
jax: 0.10.0
libtpu: 0.0.40
codegen_flags: <defaults>
</compile_context>

<pallas_src>
import functools

import jax
import jax.numpy as jnp
from jax import lax
from jax.experimental import pallas as pl
from jax.experimental.pallas import tpu as pltpu

EPS = 1e-5


# ----------------------------- Pallas kernels ------------------------------ #

def _matmul_bn_relu_kernel(w_ref, t_ref, b_ref, g_ref, beta_ref, o_ref):
    """out = relu(batchnorm(W @ T + b)); channels on sublanes, B*H*W on lanes."""
    y = jnp.dot(w_ref[...], t_ref[...], preferred_element_type=jnp.float32)
    y = y + b_ref[...]
    mean = jnp.mean(y, axis=1, keepdims=True)            # per-channel batch mean
    d = y - mean
    var = jnp.mean(d * d, axis=1, keepdims=True)         # biased var (torch train mode)
    y = d * lax.rsqrt(var + EPS) * g_ref[...] + beta_ref[...]
    o_ref[...] = jnp.maximum(y, 0.0).astype(o_ref.dtype)


def _matmul_tanh_kernel(w_ref, t_ref, b_ref, o_ref):
    y = jnp.dot(w_ref[...], t_ref[...], preferred_element_type=jnp.float32)
    o_ref[...] = jnp.tanh(y + b_ref[...]).astype(o_ref.dtype)


def _fused_stage(w, taps, bias, gamma=None, beta=None, *, out_dtype=jnp.float32):
    """One fused layer: (Cout, K) @ (K, N) + bias -> BN+ReLU (or tanh if gamma is None)."""
    Cout = w.shape[0]
    N = taps.shape[1]
    if gamma is None:
        kern, args = _matmul_tanh_kernel, (w, taps, bias)
    else:
        kern, args = _matmul_bn_relu_kernel, (w, taps, bias, gamma, beta)
    return pl.pallas_call(
        kern,
        out_shape=jax.ShapeDtypeStruct((Cout, N), out_dtype),
        grid=(1,),
        in_specs=[pl.BlockSpec(a.shape, lambda i: (0, 0)) for a in args],
        out_specs=pl.BlockSpec((Cout, N), lambda i: (0, 0)),
        compiler_params=pltpu.CompilerParams(dimension_semantics=("arbitrary",)),
    )(*args)


# ------------------------------ XLA glue ----------------------------------- #

def _im2col_taps(h, K=4, stride=2, pad=1):
    """h: (Cin, B, H, W) -> bf16 taps (K*K*Cin, B*OH*OW) of the zero-dilated padded input."""
    Cin, B, H, W = h.shape
    OH = (H - 1) * stride - 2 * pad + K
    OW = (W - 1) * stride - 2 * pad + K
    ppad = K - pad - 1
    hb = h.astype(jnp.bfloat16)
    xp = lax.pad(hb, jnp.zeros((), hb.dtype),
                 [(0, 0, 0), (0, 0, 0),
                  (ppad, ppad, stride - 1), (ppad, ppad, stride - 1)])
    taps = [xp[:, :, ky:ky + OH, kx:kx + OW].reshape(Cin, B * OH * OW)
            for ky in range(K) for kx in range(K)]       # tap index t = ky*K + kx
    return jnp.concatenate(taps, axis=0)


# ------------------------------ parameters --------------------------------- #

def init_params(key, nz, ngf, nc):
    ks = list(jax.random.split(key, 24))
    p = {}
    F = 2 * 2 * ngf * 8
    p["lin_w"] = 0.05 * jax.random.normal(ks[0], (nz, F), jnp.float32)
    p["lin_b"] = 0.05 * jax.random.normal(ks[1], (F,), jnp.float32)
    chans = [ngf * 8, ngf * 4, ngf * 2, ngf, nc]
    for i in range(4):
        cin, cout = chans[i], chans[i + 1]
        p[f"ct{i}_w"] = 0.05 * jax.random.normal(ks[2 + 2 * i], (cin, cout, 4, 4),
                                                 jnp.float32)
        p[f"ct{i}_b"] = 0.05 * jax.random.normal(ks[3 + 2 * i], (cout,), jnp.float32)
    for i in range(4):
        c = chans[i]
        p[f"bn{i}_g"] = 1.0 + 0.1 * jax.random.normal(ks[10 + 2 * i], (c,), jnp.float32)
        p[f"bn{i}_b"] = 0.1 * jax.random.normal(ks[11 + 2 * i], (c,), jnp.float32)
    return p


def prepare_params(params, *, nz, ngf, nc):
    """One-time re-layout of PyTorch-layout weights into MXU-friendly bf16 operands."""
    C0 = ngf * 8
    chans = [C0, ngf * 4, ngf * 2, ngf, nc]
    pp = {}
    # Linear (nz, 4*C0) -> channels-first Wp with Wp[c, k*4+s] = W[k, c*4+s]
    Wp = params["lin_w"].reshape(nz, C0, 4).transpose(1, 0, 2).reshape(C0, nz * 4)
    pp["lin_w"] = Wp.astype(jnp.bfloat16)
    pp["lin_b"] = params["lin_b"].reshape(C0, 4)                  # [c, spatial]
    for i in range(4):
        cin, cout = chans[i], chans[i + 1]
        w_t = params[f"ct{i}_w"]                                  # (Cin, Cout, 4, 4)
        wf = jnp.transpose(w_t[:, :, ::-1, ::-1], (2, 3, 0, 1))   # flipped (kH,kW,Cin,Cout)
        pp[f"ct{i}_w"] = wf.reshape(16 * cin, cout).T.astype(jnp.bfloat16)  # (Cout,16*Cin)
        pp[f"ct{i}_b"] = params[f"ct{i}_b"].reshape(cout, 1)
    for i in range(4):
        pp[f"bn{i}_g"] = params[f"bn{i}_g"].reshape(chans[i], 1)
        pp[f"bn{i}_b"] = params[f"bn{i}_b"].reshape(chans[i], 1)
    return pp


# ------------------------------ forward ------------------------------------ #

def netG_v2_forward(pp, x, *, nz, ngf, nc):
    """Matches _netG_v2.forward.  x: (B, nz, 1, 1) NCHW -> (B, nc, 32, 32) NCHW."""
    C0 = ngf * 8
    chans = [C0, ngf * 4, ngf * 2, ngf, nc]
    xb = x.reshape(-1, nz)                                         # Reshape(-1, nz)
    B = xb.shape[0]

    # Stage 0: Linear + BN0 + ReLU, emitted channels-first as (C0, B*2*2).
    #   z[c, b*4+s] = sum_k W[k, c*4+s] x[b, k]  ==  Wp (C0, nz*4) @ kron(x.T, I4)
    xk = jnp.kron(xb.T, jnp.eye(4, dtype=xb.dtype)).astype(jnp.bfloat16)   # (nz*4, B*4)
    bias0 = jnp.tile(pp["lin_b"], (1, B))                          # (C0, B*4)
    h = _fused_stage(pp["lin_w"], xk, bias0, pp["bn0_g"], pp["bn0_b"],
                     out_dtype=jnp.bfloat16)                       # (C0, B*4)
    h = h.reshape(C0, B, 2, 2)

    # ConvT 0..2 (+ BN + ReLU): 2 -> 4 -> 8 -> 16
    for i in range(3):
        taps = _im2col_taps(h)                                     # (16*Cin, B*OH*OW)
        y = _fused_stage(pp[f"ct{i}_w"], taps, pp[f"ct{i}_b"],
                         pp[f"bn{i + 1}_g"], pp[f"bn{i + 1}_b"],
                         out_dtype=jnp.bfloat16)                   # (Cout, B*OH*OW)
        OH = h.shape[2] * 2
        h = y.reshape(chans[i + 1], B, OH, OH)

    # ConvT 3 + tanh: 16 -> 32
    taps = _im2col_taps(h)
    y = _fused_stage(pp["ct3_w"], taps, pp["ct3_b"], out_dtype=jnp.float32)  # (nc, B*1024)
    return jnp.transpose(y.reshape(nc, B, 32, 32), (1, 0, 2, 3))   # NCHW, transpose is tiny


# Pure-jnp f32 reference (same math, no Pallas), used as a runtime sanity check.
def _reference_forward(params, x, *, nz, ngf, nc):
    hp = lax.Precision.HIGHEST

    def bn_relu(h, g, b):
        m = jnp.mean(h, axis=(0, 1, 2), keepdims=True)
        v = jnp.mean((h - m) ** 2, axis=(0, 1, 2), keepdims=True)
        y = (h - m) * lax.rsqrt(v + EPS) * g + b
        return jnp.maximum(y, 0.0)

    def convt(h, w_t, b):
        wf = jnp.transpose(w_t[:, :, ::-1, ::-1], (2, 3, 0, 1))    # HWIO, flipped
        y = lax.conv_general_dilated(
            h, wf, window_strides=(1, 1), padding=[(2, 2), (2, 2)],
            lhs_dilation=(2, 2),
            dimension_numbers=("NHWC", "HWIO", "NHWC"), precision=hp)
        return y + b[None, None, None, :]

    h = x.reshape(-1, nz)
    h = jnp.dot(h, params["lin_w"], precision=hp) + params["lin_b"]
    h = jnp.transpose(h.reshape(-1, ngf * 8, 2, 2), (0, 2, 3, 1))
    for i in range(4):
        h = bn_relu(h, params[f"bn{i}_g"], params[f"bn{i}_b"])
        h = convt(h, params[f"ct{i}_w"], params[f"ct{i}_b"])
    return jnp.transpose(jnp.tanh(h), (0, 3, 1, 2))


if __name__ == "__main__":
    B, nz, ngf, nc = 2, 16, 8, 3
    key = jax.random.PRNGKey(0)
    kp, kx = jax.random.split(key)
    params = init_params(kp, nz, ngf, nc)
    x = jax.random.normal(kx, (B, nz, 1, 1), jnp.float32)          # (B, nz, 1, 1) NCHW

    pp = prepare_params(params, nz=nz, ngf=ngf, nc=nc)             # one-time weight prep
    fwd = jax.jit(functools.partial(netG_v2_forward, nz=nz, ngf=ngf, nc=nc))
    out = jax.block_until_ready(fwd(pp, x))

    assert out.shape == (B, nc, 32, 32), out.shape
    ref = _reference_forward(params, x, nz=nz, ngf=ngf, nc=nc)
    assert jnp.all(jnp.isfinite(out))
    # bf16 MXU operands vs f32 reference -> slightly looser tolerance than pure f32.
    assert jnp.allclose(out, ref, atol=2e-2, rtol=2e-2), float(
        jnp.max(jnp.abs(out - ref)))

    print("KERNEL_OK")
</pallas_src>

<mosaic_0001>
module attributes {stable_mosaic.version = 11 : i64} {
  func.func @_matmul_bn_relu_kernel(%arg0: i32, %arg1: memref<64x64xbf16, #tpu.memory_space<vmem>>, %arg2: memref<64x8xbf16, #tpu.memory_space<vmem>>, %arg3: memref<64x8xf32, #tpu.memory_space<vmem>>, %arg4: memref<64x1xf32, #tpu.memory_space<vmem>>, %arg5: memref<64x1xf32, #tpu.memory_space<vmem>>, %arg6: memref<64x8xbf16, #tpu.memory_space<vmem>>) attributes {dimension_semantics = [#tpu.dimension_semantics<arbitrary>], iteration_bounds = array<i64: 1>, scalar_prefetch = 0 : i64, scratch_operands = 0 : i64, tpu.core_type = #tpu.core_type<tc>, window_params = [{pipeline_mode = #tpu.pipeline_mode<synchronous>, transform_indices = @transform_0, window_bounds = array<i64: 64, 64>}, {pipeline_mode = #tpu.pipeline_mode<synchronous>, transform_indices = @transform_1, window_bounds = array<i64: 64, 8>}, {pipeline_mode = #tpu.pipeline_mode<synchronous>, transform_indices = @transform_2, window_bounds = array<i64: 64, 8>}, {pipeline_mode = #tpu.pipeline_mode<synchronous>, transform_indices = @transform_3, window_bounds = array<i64: 64, 1>}, {pipeline_mode = #tpu.pipeline_mode<synchronous>, transform_indices = @transform_4, window_bounds = array<i64: 64, 1>}, {pipeline_mode = #tpu.pipeline_mode<synchronous>, transform_indices = @transform_5, window_bounds = array<i64: 64, 8>}]} {
    %c0 = arith.constant 0 : index
    %c0_0 = arith.constant 0 : index
    %0 = vector.load %arg1[%c0, %c0_0] : memref<64x64xbf16, #tpu.memory_space<vmem>>, vector<64x64xbf16>
    %c0_1 = arith.constant 0 : index
    %c0_2 = arith.constant 0 : index
    %1 = vector.load %arg2[%c0_1, %c0_2] : memref<64x8xbf16, #tpu.memory_space<vmem>>, vector<64x8xbf16>
    %cst = arith.constant dense<0.000000e+00> : vector<64x8xf32>
    %2 = tpu.matmul %0, %1, %cst {dimension_numbers = #tpu.dot_dimension_numbers<[1], [0], [0], [1], [0, 0, 1, 1], [], []>} : vector<64x64xbf16>, vector<64x8xbf16>, vector<64x8xf32> -> vector<64x8xf32>
    %c0_3 = arith.constant 0 : index
    %c0_4 = arith.constant 0 : index
    %3 = vector.load %arg3[%c0_3, %c0_4] : memref<64x8xf32, #tpu.memory_space<vmem>>, vector<64x8xf32>
    %4 = arith.addf %2, %3 : vector<64x8xf32>
    %cst_5 = arith.constant dense<0.000000e+00> : vector<64xf32>
    %5 = vector.multi_reduction <add>, %4, %cst_5 [1] : vector<64x8xf32> to vector<64xf32>
    %6 = vector.shape_cast %5 : vector<64xf32> to vector<64x1xf32>
    %cst_6 = arith.constant 8.000000e+00 : f32
    %7 = vector.broadcast %cst_6 : f32 to vector<64x1xf32>
    %8 = arith.divf %6, %7 : vector<64x1xf32>
    %9 = vector.broadcast %8 : vector<64x1xf32> to vector<64x8xf32>
    %10 = arith.subf %4, %9 : vector<64x8xf32>
    %11 = arith.mulf %10, %10 : vector<64x8xf32>
    %cst_7 = arith.constant dense<0.000000e+00> : vector<64xf32>
    %12 = vector.multi_reduction <add>, %11, %cst_7 [1] : vector<64x8xf32> to vector<64xf32>
    %13 = vector.shape_cast %12 : vector<64xf32> to vector<64x1xf32>
    %cst_8 = arith.constant 8.000000e+00 : f32
    %14 = vector.broadcast %cst_8 : f32 to vector<64x1xf32>
    %15 = arith.divf %13, %14 : vector<64x1xf32>
    %cst_9 = arith.constant 9.99999974E-6 : f32
    %16 = vector.broadcast %cst_9 : f32 to vector<64x1xf32>
    %17 = arith.addf %15, %16 : vector<64x1xf32>
    %18 = math.rsqrt %17 : vector<64x1xf32>
    %19 = vector.broadcast %18 : vector<64x1xf32> to vector<64x8xf32>
    %20 = arith.mulf %10, %19 : vector<64x8xf32>
    %c0_10 = arith.constant 0 : index
    %c0_11 = arith.constant 0 : index
    %21 = vector.load %arg4[%c0_10, %c0_11] : memref<64x1xf32, #tpu.memory_space<vmem>>, vector<64x1xf32>
    %22 = vector.broadcast %21 : vector<64x1xf32> to vector<64x8xf32>
    %23 = arith.mulf %20, %22 : vector<64x8xf32>
    %c0_12 = arith.constant 0 : index
    %c0_13 = arith.constant 0 : index
    %24 = vector.load %arg5[%c0_12, %c0_13] : memref<64x1xf32, #tpu.memory_space<vmem>>, vector<64x1xf32>
    %25 = vector.broadcast %24 : vector<64x1xf32> to vector<64x8xf32>
    %26 = arith.addf %23, %25 : vector<64x8xf32>
    %cst_14 = arith.constant 0.000000e+00 : f32
    %27 = vector.broadcast %cst_14 : f32 to vector<64x8xf32>
    %28 = arith.maximumf %26, %27 : vector<64x8xf32>
    %29 = arith.truncf %28 : vector<64x8xf32> to vector<64x8xbf16>
    %c0_15 = arith.constant 0 : index
    %c0_16 = arith.constant 0 : index
    %30 = vector.load %arg6[%c0_15, %c0_16] : memref<64x8xbf16, #tpu.memory_space<vmem>>, vector<64x8xbf16>
    tpu.vector_store %arg6[%c0_15, %c0_16], %29 {strides = array<i32>} : memref<64x8xbf16, #tpu.memory_space<vmem>>, vector<64x8xbf16>,
    return
  }
  func.func @transform_0(%arg0: i32) -> (i32, i32) {
    %c0_i32 = arith.constant 0 : i32
    %c0_i32_0 = arith.constant 0 : i32
    %c0_i32_1 = arith.constant 0 : i32
    return %c0_i32, %c0_i32_0 : i32, i32
  }
  func.func @transform_1(%arg0: i32) -> (i32, i32) {
    %c0_i32 = arith.constant 0 : i32
    %c0_i32_0 = arith.constant 0 : i32
    %c0_i32_1 = arith.constant 0 : i32
    return %c0_i32, %c0_i32_0 : i32, i32
  }
  func.func @transform_2(%arg0: i32) -> (i32, i32) {
    %c0_i32 = arith.constant 0 : i32
    %c0_i32_0 = arith.constant 0 : i32
    %c0_i32_1 = arith.constant 0 : i32
    return %c0_i32, %c0_i32_0 : i32, i32
  }
  func.func @transform_3(%arg0: i32) -> (i32, i32) {
    %c0_i32 = arith.constant 0 : i32
    %c0_i32_0 = arith.constant 0 : i32
    %c0_i32_1 = arith.constant 0 : i32
    return %c0_i32, %c0_i32_0 : i32, i32
  }
  func.func @transform_4(%arg0: i32) -> (i32, i32) {
    %c0_i32 = arith.constant 0 : i32
    %c0_i32_0 = arith.constant 0 : i32
    %c0_i32_1 = arith.constant 0 : i32
    return %c0_i32, %c0_i32_0 : i32, i32
  }
  func.func @transform_5(%arg0: i32) -> (i32, i32) {
    %c0_i32 = arith.constant 0 : i32
    %c0_i32_0 = arith.constant 0 : i32
    %c0_i32_1 = arith.constant 0 : i32
    return %c0_i32, %c0_i32_0 : i32, i32
  }
}

module attributes {stable_mosaic.version = 11 : i64} {
  func.func @_matmul_bn_relu_kernel(%arg0: i32, %arg1: memref<32x1024xbf16, #tpu.memory_space<vmem>>, %arg2: memref<1024x32xbf16, #tpu.memory_space<vmem>>, %arg3: memref<32x1xf32, #tpu.memory_space<vmem>>, %arg4: memref<32x1xf32, #tpu.memory_space<vmem>>, %arg5: memref<32x1xf32, #tpu.memory_space<vmem>>, %arg6: memref<32x32xbf16, #tpu.memory_space<vmem>>) attributes {dimension_semantics = [#tpu.dimension_semantics<arbitrary>], iteration_bounds = array<i64: 1>, scalar_prefetch = 0 : i64, scratch_operands = 0 : i64, tpu.core_type = #tpu.core_type<tc>, window_params = [{pipeline_mode = #tpu.pipeline_mode<synchronous>, transform_indices = @transform_0, window_bounds = array<i64: 32, 1024>}, {pipeline_mode = #tpu.pipeline_mode<synchronous>, transform_indices = @transform_1, window_bounds = array<i64: 1024, 32>}, {pipeline_mode = #tpu.pipeline_mode<synchronous>, transform_indices = @transform_2, window_bounds = array<i64: 32, 1>}, {pipeline_mode = #tpu.pipeline_mode<synchronous>, transform_indices = @transform_3, window_bounds = array<i64: 32, 1>}, {pipeline_mode = #tpu.pipeline_mode<synchronous>, transform_indices = @transform_4, window_bounds = array<i64: 32, 1>}, {pipeline_mode = #tpu.pipeline_mode<synchronous>, transform_indices = @transform_5, window_bounds = array<i64: 32, 32>}]} {
    %c0 = arith.constant 0 : index
    %c0_0 = arith.constant 0 : index
    %0 = vector.load %arg1[%c0, %c0_0] : memref<32x1024xbf16, #tpu.memory_space<vmem>>, vector<32x1024xbf16>
    %c0_1 = arith.constant 0 : index
    %c0_2 = arith.constant 0 : index
    %1 = vector.load %arg2[%c0_1, %c0_2] : memref<1024x32xbf16, #tpu.memory_space<vmem>>, vector<1024x32xbf16>
    %cst = arith.constant dense<0.000000e+00> : vector<32x32xf32>
    %2 = tpu.matmul %0, %1, %cst {dimension_numbers = #tpu.dot_dimension_numbers<[1], [0], [0], [1], [0, 0, 1, 1], [], []>} : vector<32x1024xbf16>, vector<1024x32xbf16>, vector<32x32xf32> -> vector<32x32xf32>
    %c0_3 = arith.constant 0 : index
    %c0_4 = arith.constant 0 : index
    %3 = vector.load %arg3[%c0_3, %c0_4] : memref<32x1xf32, #tpu.memory_space<vmem>>, vector<32x1xf32>
    %4 = vector.broadcast %3 : vector<32x1xf32> to vector<32x32xf32>
    %5 = arith.addf %2, %4 : vector<32x32xf32>
    %cst_5 = arith.constant dense<0.000000e+00> : vector<32xf32>
    %6 = vector.multi_reduction <add>, %5, %cst_5 [1] : vector<32x32xf32> to vector<32xf32>
    %7 = vector.shape_cast %6 : vector<32xf32> to vector<32x1xf32>
    %cst_6 = arith.constant 3.200000e+01 : f32
    %8 = vector.broadcast %cst_6 : f32 to vector<32x1xf32>
    %9 = arith.divf %7, %8 : vector<32x1xf32>
    %10 = vector.broadcast %9 : vector<32x1xf32> to vector<32x32xf32>
    %11 = arith.subf %5, %10 : vector<32x32xf32>
    %12 = arith.mulf %11, %11 : vector<32x32xf32>
    %cst_7 = arith.constant dense<0.000000e+00> : vector<32xf32>
    %13 = vector.multi_reduction <add>, %12, %cst_7 [1] : vector<32x32xf32> to vector<32xf32>
    %14 = vector.shape_cast %13 : vector<32xf32> to vector<32x1xf32>
    %cst_8 = arith.constant 3.200000e+01 : f32
    %15 = vector.broadcast %cst_8 : f32 to vector<32x1xf32>
    %16 = arith.divf %14, %15 : vector<32x1xf32>
    %cst_9 = arith.constant 9.99999974E-6 : f32
    %17 = vector.broadcast %cst_9 : f32 to vector<32x1xf32>
    %18 = arith.addf %16, %17 : vector<32x1xf32>
    %19 = math.rsqrt %18 : vector<32x1xf32>
    %20 = vector.broadcast %19 : vector<32x1xf32> to vector<32x32xf32>
    %21 = arith.mulf %11, %20 : vector<32x32xf32>
    %c0_10 = arith.constant 0 : index
    %c0_11 = arith.constant 0 : index
    %22 = vector.load %arg4[%c0_10, %c0_11] : memref<32x1xf32, #tpu.memory_space<vmem>>, vector<32x1xf32>
    %23 = vector.broadcast %22 : vector<32x1xf32> to vector<32x32xf32>
    %24 = arith.mulf %21, %23 : vector<32x32xf32>
    %c0_12 = arith.constant 0 : index
    %c0_13 = arith.constant 0 : index
    %25 = vector.load %arg5[%c0_12, %c0_13] : memref<32x1xf32, #tpu.memory_space<vmem>>, vector<32x1xf32>
    %26 = vector.broadcast %25 : vector<32x1xf32> to vector<32x32xf32>
    %27 = arith.addf %24, %26 : vector<32x32xf32>
    %cst_14 = arith.constant 0.000000e+00 : f32
    %28 = vector.broadcast %cst_14 : f32 to vector<32x32xf32>
    %29 = arith.maximumf %27, %28 : vector<32x32xf32>
    %30 = arith.truncf %29 : vector<32x32xf32> to vector<32x32xbf16>
    %c0_15 = arith.constant 0 : index
    %c0_16 = arith.constant 0 : index
    %31 = vector.load %arg6[%c0_15, %c0_16] : memref<32x32xbf16, #tpu.memory_space<vmem>>, vector<32x32xbf16>
    tpu.vector_store %arg6[%c0_15, %c0_16], %30 {strides = array<i32>} : memref<32x32xbf16, #tpu.memory_space<vmem>>, vector<32x32xbf16>,
    return
  }
  func.func @transform_0(%arg0: i32) -> (i32, i32) {
    %c0_i32 = arith.constant 0 : i32
    %c0_i32_0 = arith.constant 0 : i32
    %c0_i32_1 = arith.constant 0 : i32
    return %c0_i32, %c0_i32_0 : i32, i32
  }
  func.func @transform_1(%arg0: i32) -> (i32, i32) {
    %c0_i32 = arith.constant 0 : i32
    %c0_i32_0 = arith.constant 0 : i32
    %c0_i32_1 = arith.constant 0 : i32
    return %c0_i32, %c0_i32_0 : i32, i32
  }
  func.func @transform_2(%arg0: i32) -> (i32, i32) {
    %c0_i32 = arith.constant 0 : i32
    %c0_i32_0 = arith.constant 0 : i32
    %c0_i32_1 = arith.constant 0 : i32
    return %c0_i32, %c0_i32_0 : i32, i32
  }
  func.func @transform_3(%arg0: i32) -> (i32, i32) {
    %c0_i32 = arith.constant 0 : i32
    %c0_i32_0 = arith.constant 0 : i32
    %c0_i32_1 = arith.constant 0 : i32
    return %c0_i32, %c0_i32_0 : i32, i32
  }
  func.func @transform_4(%arg0: i32) -> (i32, i32) {
    %c0_i32 = arith.constant 0 : i32
    %c0_i32_0 = arith.constant 0 : i32
    %c0_i32_1 = arith.constant 0 : i32
    return %c0_i32, %c0_i32_0 : i32, i32
  }
  func.func @transform_5(%arg0: i32) -> (i32, i32) {
    %c0_i32 = arith.constant 0 : i32
    %c0_i32_0 = arith.constant 0 : i32
    %c0_i32_1 = arith.constant 0 : i32
    return %c0_i32, %c0_i32_0 : i32, i32
  }
}

module attributes {stable_mosaic.version = 11 : i64} {
  func.func @_matmul_bn_relu_kernel(%arg0: i32, %arg1: memref<16x512xbf16, #tpu.memory_space<vmem>>, %arg2: memref<512x128xbf16, #tpu.memory_space<vmem>>, %arg3: memref<16x1xf32, #tpu.memory_space<vmem>>, %arg4: memref<16x1xf32, #tpu.memory_space<vmem>>, %arg5: memref<16x1xf32, #tpu.memory_space<vmem>>, %arg6: memref<16x128xbf16, #tpu.memory_space<vmem>>) attributes {dimension_semantics = [#tpu.dimension_semantics<arbitrary>], iteration_bounds = array<i64: 1>, scalar_prefetch = 0 : i64, scratch_operands = 0 : i64, tpu.core_type = #tpu.core_type<tc>, window_params = [{pipeline_mode = #tpu.pipeline_mode<synchronous>, transform_indices = @transform_0, window_bounds = array<i64: 16, 512>}, {pipeline_mode = #tpu.pipeline_mode<synchronous>, transform_indices = @transform_1, window_bounds = array<i64: 512, 128>}, {pipeline_mode = #tpu.pipeline_mode<synchronous>, transform_indices = @transform_2, window_bounds = array<i64: 16, 1>}, {pipeline_mode = #tpu.pipeline_mode<synchronous>, transform_indices = @transform_3, window_bounds = array<i64: 16, 1>}, {pipeline_mode = #tpu.pipeline_mode<synchronous>, transform_indices = @transform_4, window_bounds = array<i64: 16, 1>}, {pipeline_mode = #tpu.pipeline_mode<synchronous>, transform_indices = @transform_5, window_bounds = array<i64: 16, 128>}]} {
    %c0 = arith.constant 0 : index
    %c0_0 = arith.constant 0 : index
    %0 = vector.load %arg1[%c0, %c0_0] : memref<16x512xbf16, #tpu.memory_space<vmem>>, vector<16x512xbf16>
    %c0_1 = arith.constant 0 : index
    %c0_2 = arith.constant 0 : index
    %1 = vector.load %arg2[%c0_1, %c0_2] : memref<512x128xbf16, #tpu.memory_space<vmem>>, vector<512x128xbf16>
    %cst = arith.constant dense<0.000000e+00> : vector<16x128xf32>
    %2 = tpu.matmul %0, %1, %cst {dimension_numbers = #tpu.dot_dimension_numbers<[1], [0], [0], [1], [0, 0, 1, 1], [], []>} : vector<16x512xbf16>, vector<512x128xbf16>, vector<16x128xf32> -> vector<16x128xf32>
    %c0_3 = arith.constant 0 : index
    %c0_4 = arith.constant 0 : index
    %3 = vector.load %arg3[%c0_3, %c0_4] : memref<16x1xf32, #tpu.memory_space<vmem>>, vector<16x1xf32>
    %4 = vector.broadcast %3 : vector<16x1xf32> to vector<16x128xf32>
    %5 = arith.addf %2, %4 : vector<16x128xf32>
    %cst_5 = arith.constant dense<0.000000e+00> : vector<16xf32>
    %6 = vector.multi_reduction <add>, %5, %cst_5 [1] : vector<16x128xf32> to vector<16xf32>
    %7 = vector.shape_cast %6 : vector<16xf32> to vector<16x1xf32>
    %cst_6 = arith.constant 1.280000e+02 : f32
    %8 = vector.broadcast %cst_6 : f32 to vector<16x1xf32>
    %9 = arith.divf %7, %8 : vector<16x1xf32>
    %10 = vector.broadcast %9 : vector<16x1xf32> to vector<16x128xf32>
    %11 = arith.subf %5, %10 : vector<16x128xf32>
    %12 = arith.mulf %11, %11 : vector<16x128xf32>
    %cst_7 = arith.constant dense<0.000000e+00> : vector<16xf32>
    %13 = vector.multi_reduction <add>, %12, %cst_7 [1] : vector<16x128xf32> to vector<16xf32>
    %14 = vector.shape_cast %13 : vector<16xf32> to vector<16x1xf32>
    %cst_8 = arith.constant 1.280000e+02 : f32
    %15 = vector.broadcast %cst_8 : f32 to vector<16x1xf32>
    %16 = arith.divf %14, %15 : vector<16x1xf32>
    %cst_9 = arith.constant 9.99999974E-6 : f32
    %17 = vector.broadcast %cst_9 : f32 to vector<16x1xf32>
    %18 = arith.addf %16, %17 : vector<16x1xf32>
    %19 = math.rsqrt %18 : vector<16x1xf32>
    %20 = vector.broadcast %19 : vector<16x1xf32> to vector<16x128xf32>
    %21 = arith.mulf %11, %20 : vector<16x128xf32>
    %c0_10 = arith.constant 0 : index
    %c0_11 = arith.constant 0 : index
    %22 = vector.load %arg4[%c0_10, %c0_11] : memref<16x1xf32, #tpu.memory_space<vmem>>, vector<16x1xf32>
    %23 = vector.broadcast %22 : vector<16x1xf32> to vector<16x128xf32>
    %24 = arith.mulf %21, %23 : vector<16x128xf32>
    %c0_12 = arith.constant 0 : index
    %c0_13 = arith.constant 0 : index
    %25 = vector.load %arg5[%c0_12, %c0_13] : memref<16x1xf32, #tpu.memory_space<vmem>>, vector<16x1xf32>
    %26 = vector.broadcast %25 : vector<16x1xf32> to vector<16x128xf32>
    %27 = arith.addf %24, %26 : vector<16x128xf32>
    %cst_14 = arith.constant 0.000000e+00 : f32
    %28 = vector.broadcast %cst_14 : f32 to vector<16x128xf32>
    %29 = arith.maximumf %27, %28 : vector<16x128xf32>
    %30 = arith.truncf %29 : vector<16x128xf32> to vector<16x128xbf16>
    %c0_15 = arith.constant 0 : index
    %c0_16 = arith.constant 0 : index
    %31 = vector.load %arg6[%c0_15, %c0_16] : memref<16x128xbf16, #tpu.memory_space<vmem>>, vector<16x128xbf16>
    tpu.vector_store %arg6[%c0_15, %c0_16], %30 {strides = array<i32>} : memref<16x128xbf16, #tpu.memory_space<vmem>>, vector<16x128xbf16>,
    return
  }
  func.func @transform_0(%arg0: i32) -> (i32, i32) {
    %c0_i32 = arith.constant 0 : i32
    %c0_i32_0 = arith.constant 0 : i32
    %c0_i32_1 = arith.constant 0 : i32
    return %c0_i32, %c0_i32_0 : i32, i32
  }
  func.func @transform_1(%arg0: i32) -> (i32, i32) {
    %c0_i32 = arith.constant 0 : i32
    %c0_i32_0 = arith.constant 0 : i32
    %c0_i32_1 = arith.constant 0 : i32
    return %c0_i32, %c0_i32_0 : i32, i32
  }
  func.func @transform_2(%arg0: i32) -> (i32, i32) {
    %c0_i32 = arith.constant 0 : i32
    %c0_i32_0 = arith.constant 0 : i32
    %c0_i32_1 = arith.constant 0 : i32
    return %c0_i32, %c0_i32_0 : i32, i32
  }
  func.func @transform_3(%arg0: i32) -> (i32, i32) {
    %c0_i32 = arith.constant 0 : i32
    %c0_i32_0 = arith.constant 0 : i32
    %c0_i32_1 = arith.constant 0 : i32
    return %c0_i32, %c0_i32_0 : i32, i32
  }
  func.func @transform_4(%arg0: i32) -> (i32, i32) {
    %c0_i32 = arith.constant 0 : i32
    %c0_i32_0 = arith.constant 0 : i32
    %c0_i32_1 = arith.constant 0 : i32
    return %c0_i32, %c0_i32_0 : i32, i32
  }
  func.func @transform_5(%arg0: i32) -> (i32, i32) {
    %c0_i32 = arith.constant 0 : i32
    %c0_i32_0 = arith.constant 0 : i32
    %c0_i32_1 = arith.constant 0 : i32
    return %c0_i32, %c0_i32_0 : i32, i32
  }
}

module attributes {stable_mosaic.version = 11 : i64} {
  func.func @_matmul_bn_relu_kernel(%arg0: i32, %arg1: memref<8x256xbf16, #tpu.memory_space<vmem>>, %arg2: memref<256x512xbf16, #tpu.memory_space<vmem>>, %arg3: memref<8x1xf32, #tpu.memory_space<vmem>>, %arg4: memref<8x1xf32, #tpu.memory_space<vmem>>, %arg5: memref<8x1xf32, #tpu.memory_space<vmem>>, %arg6: memref<8x512xbf16, #tpu.memory_space<vmem>>) attributes {dimension_semantics = [#tpu.dimension_semantics<arbitrary>], iteration_bounds = array<i64: 1>, scalar_prefetch = 0 : i64, scratch_operands = 0 : i64, tpu.core_type = #tpu.core_type<tc>, window_params = [{pipeline_mode = #tpu.pipeline_mode<synchronous>, transform_indices = @transform_0, window_bounds = array<i64: 8, 256>}, {pipeline_mode = #tpu.pipeline_mode<synchronous>, transform_indices = @transform_1, window_bounds = array<i64: 256, 512>}, {pipeline_mode = #tpu.pipeline_mode<synchronous>, transform_indices = @transform_2, window_bounds = array<i64: 8, 1>}, {pipeline_mode = #tpu.pipeline_mode<synchronous>, transform_indices = @transform_3, window_bounds = array<i64: 8, 1>}, {pipeline_mode = #tpu.pipeline_mode<synchronous>, transform_indices = @transform_4, window_bounds = array<i64: 8, 1>}, {pipeline_mode = #tpu.pipeline_mode<synchronous>, transform_indices = @transform_5, window_bounds = array<i64: 8, 512>}]} {
    %c0 = arith.constant 0 : index
    %c0_0 = arith.constant 0 : index
    %0 = vector.load %arg1[%c0, %c0_0] : memref<8x256xbf16, #tpu.memory_space<vmem>>, vector<8x256xbf16>
    %c0_1 = arith.constant 0 : index
    %c0_2 = arith.constant 0 : index
    %1 = vector.load %arg2[%c0_1, %c0_2] : memref<256x512xbf16, #tpu.memory_space<vmem>>, vector<256x512xbf16>
    %cst = arith.constant dense<0.000000e+00> : vector<8x512xf32>
    %2 = tpu.matmul %0, %1, %cst {dimension_numbers = #tpu.dot_dimension_numbers<[1], [0], [0], [1], [0, 0, 1, 1], [], []>} : vector<8x256xbf16>, vector<256x512xbf16>, vector<8x512xf32> -> vector<8x512xf32>
    %c0_3 = arith.constant 0 : index
    %c0_4 = arith.constant 0 : index
    %3 = vector.load %arg3[%c0_3, %c0_4] : memref<8x1xf32, #tpu.memory_space<vmem>>, vector<8x1xf32>
    %4 = vector.broadcast %3 : vector<8x1xf32> to vector<8x512xf32>
    %5 = arith.addf %2, %4 : vector<8x512xf32>
    %cst_5 = arith.constant dense<0.000000e+00> : vector<8xf32>
    %6 = vector.multi_reduction <add>, %5, %cst_5 [1] : vector<8x512xf32> to vector<8xf32>
    %7 = vector.shape_cast %6 : vector<8xf32> to vector<8x1xf32>
    %cst_6 = arith.constant 5.120000e+02 : f32
    %8 = vector.broadcast %cst_6 : f32 to vector<8x1xf32>
    %9 = arith.divf %7, %8 : vector<8x1xf32>
    %10 = vector.broadcast %9 : vector<8x1xf32> to vector<8x512xf32>
    %11 = arith.subf %5, %10 : vector<8x512xf32>
    %12 = arith.mulf %11, %11 : vector<8x512xf32>
    %cst_7 = arith.constant dense<0.000000e+00> : vector<8xf32>
    %13 = vector.multi_reduction <add>, %12, %cst_7 [1] : vector<8x512xf32> to vector<8xf32>
    %14 = vector.shape_cast %13 : vector<8xf32> to vector<8x1xf32>
    %cst_8 = arith.constant 5.120000e+02 : f32
    %15 = vector.broadcast %cst_8 : f32 to vector<8x1xf32>
    %16 = arith.divf %14, %15 : vector<8x1xf32>
    %cst_9 = arith.constant 9.99999974E-6 : f32
    %17 = vector.broadcast %cst_9 : f32 to vector<8x1xf32>
    %18 = arith.addf %16, %17 : vector<8x1xf32>
    %19 = math.rsqrt %18 : vector<8x1xf32>
    %20 = vector.broadcast %19 : vector<8x1xf32> to vector<8x512xf32>
    %21 = arith.mulf %11, %20 : vector<8x512xf32>
    %c0_10 = arith.constant 0 : index
    %c0_11 = arith.constant 0 : index
    %22 = vector.load %arg4[%c0_10, %c0_11] : memref<8x1xf32, #tpu.memory_space<vmem>>, vector<8x1xf32>
    %23 = vector.broadcast %22 : vector<8x1xf32> to vector<8x512xf32>
    %24 = arith.mulf %21, %23 : vector<8x512xf32>
    %c0_12 = arith.constant 0 : index
    %c0_13 = arith.constant 0 : index
    %25 = vector.load %arg5[%c0_12, %c0_13] : memref<8x1xf32, #tpu.memory_space<vmem>>, vector<8x1xf32>
    %26 = vector.broadcast %25 : vector<8x1xf32> to vector<8x512xf32>
    %27 = arith.addf %24, %26 : vector<8x512xf32>
    %cst_14 = arith.constant 0.000000e+00 : f32
    %28 = vector.broadcast %cst_14 : f32 to vector<8x512xf32>
    %29 = arith.maximumf %27, %28 : vector<8x512xf32>
    %30 = arith.truncf %29 : vector<8x512xf32> to vector<8x512xbf16>
    %c0_15 = arith.constant 0 : index
    %c0_16 = arith.constant 0 : index
    %31 = vector.load %arg6[%c0_15, %c0_16] : memref<8x512xbf16, #tpu.memory_space<vmem>>, vector<8x512xbf16>
    tpu.vector_store %arg6[%c0_15, %c0_16], %30 {strides = array<i32>} : memref<8x512xbf16, #tpu.memory_space<vmem>>, vector<8x512xbf16>,
    return
  }
  func.func @transform_0(%arg0: i32) -> (i32, i32) {
    %c0_i32 = arith.constant 0 : i32
    %c0_i32_0 = arith.constant 0 : i32
    %c0_i32_1 = arith.constant 0 : i32
    return %c0_i32, %c0_i32_0 : i32, i32
  }
  func.func @transform_1(%arg0: i32) -> (i32, i32) {
    %c0_i32 = arith.constant 0 : i32
    %c0_i32_0 = arith.constant 0 : i32
    %c0_i32_1 = arith.constant 0 : i32
    return %c0_i32, %c0_i32_0 : i32, i32
  }
  func.func @transform_2(%arg0: i32) -> (i32, i32) {
    %c0_i32 = arith.constant 0 : i32
    %c0_i32_0 = arith.constant 0 : i32
    %c0_i32_1 = arith.constant 0 : i32
    return %c0_i32, %c0_i32_0 : i32, i32
  }
  func.func @transform_3(%arg0: i32) -> (i32, i32) {
    %c0_i32 = arith.constant 0 : i32
    %c0_i32_0 = arith.constant 0 : i32
    %c0_i32_1 = arith.constant 0 : i32
    return %c0_i32, %c0_i32_0 : i32, i32
  }
  func.func @transform_4(%arg0: i32) -> (i32, i32) {
    %c0_i32 = arith.constant 0 : i32
    %c0_i32_0 = arith.constant 0 : i32
    %c0_i32_1 = arith.constant 0 : i32
    return %c0_i32, %c0_i32_0 : i32, i32
  }
  func.func @transform_5(%arg0: i32) -> (i32, i32) {
    %c0_i32 = arith.constant 0 : i32
    %c0_i32_0 = arith.constant 0 : i32
    %c0_i32_1 = arith.constant 0 : i32
    return %c0_i32, %c0_i32_0 : i32, i32
  }
}

module attributes {stable_mosaic.version = 11 : i64} {
  func.func @_matmul_tanh_kernel(%arg0: i32, %arg1: memref<3x128xbf16, #tpu.memory_space<vmem>>, %arg2: memref<128x2048xbf16, #tpu.memory_space<vmem>>, %arg3: memref<3x1xf32, #tpu.memory_space<vmem>>, %arg4: memref<3x2048xf32, #tpu.memory_space<vmem>>) attributes {dimension_semantics = [#tpu.dimension_semantics<arbitrary>], iteration_bounds = array<i64: 1>, scalar_prefetch = 0 : i64, scratch_operands = 0 : i64, tpu.core_type = #tpu.core_type<tc>, window_params = [{pipeline_mode = #tpu.pipeline_mode<synchronous>, transform_indices = @transform_0, window_bounds = array<i64: 3, 128>}, {pipeline_mode = #tpu.pipeline_mode<synchronous>, transform_indices = @transform_1, window_bounds = array<i64: 128, 2048>}, {pipeline_mode = #tpu.pipeline_mode<synchronous>, transform_indices = @transform_2, window_bounds = array<i64: 3, 1>}, {pipeline_mode = #tpu.pipeline_mode<synchronous>, transform_indices = @transform_3, window_bounds = array<i64: 3, 2048>}]} {
    %c0 = arith.constant 0 : index
    %c0_0 = arith.constant 0 : index
    %0 = vector.load %arg1[%c0, %c0_0] : memref<3x128xbf16, #tpu.memory_space<vmem>>, vector<3x128xbf16>
    %c0_1 = arith.constant 0 : index
    %c0_2 = arith.constant 0 : index
    %1 = vector.load %arg2[%c0_1, %c0_2] : memref<128x2048xbf16, #tpu.memory_space<vmem>>, vector<128x2048xbf16>
    %cst = arith.constant dense<0.000000e+00> : vector<3x2048xf32>
    %2 = tpu.matmul %0, %1, %cst {dimension_numbers = #tpu.dot_dimension_numbers<[1], [0], [0], [1], [0, 0, 1, 1], [], []>} : vector<3x128xbf16>, vector<128x2048xbf16>, vector<3x2048xf32> -> vector<3x2048xf32>
    %c0_3 = arith.constant 0 : index
    %c0_4 = arith.constant 0 : index
    %3 = vector.load %arg3[%c0_3, %c0_4] : memref<3x1xf32, #tpu.memory_space<vmem>>, vector<3x1xf32>
    %4 = vector.broadcast %3 : vector<3x1xf32> to vector<3x2048xf32>
    %5 = arith.addf %2, %4 : vector<3x2048xf32>
    %6 = math.tanh %5 : vector<3x2048xf32>
    %c0_5 = arith.constant 0 : index
    %c0_6 = arith.constant 0 : index
    %7 = vector.load %arg4[%c0_5, %c0_6] : memref<3x2048xf32, #tpu.memory_space<vmem>>, vector<3x2048xf32>
    tpu.vector_store %arg4[%c0_5, %c0_6], %6 {strides = array<i32>} : memref<3x2048xf32, #tpu.memory_space<vmem>>, vector<3x2048xf32>,
    return
  }
  func.func @transform_0(%arg0: i32) -> (i32, i32) {
    %c0_i32 = arith.constant 0 : i32
    %c0_i32_0 = arith.constant 0 : i32
    %c0_i32_1 = arith.constant 0 : i32
    return %c0_i32, %c0_i32_0 : i32, i32
  }
  func.func @transform_1(%arg0: i32) -> (i32, i32) {
    %c0_i32 = arith.constant 0 : i32
    %c0_i32_0 = arith.constant 0 : i32
    %c0_i32_1 = arith.constant 0 : i32
    return %c0_i32, %c0_i32_0 : i32, i32
  }
  func.func @transform_2(%arg0: i32) -> (i32, i32) {
    %c0_i32 = arith.constant 0 : i32
    %c0_i32_0 = arith.constant 0 : i32
    %c0_i32_1 = arith.constant 0 : i32
    return %c0_i32, %c0_i32_0 : i32, i32
  }
  func.func @transform_3(%arg0: i32) -> (i32, i32) {
    %c0_i32 = arith.constant 0 : i32
    %c0_i32_0 = arith.constant 0 : i32
    %c0_i32_1 = arith.constant 0 : i32
    return %c0_i32, %c0_i32_0 : i32, i32
  }
}

</mosaic_0001>

<llo_original>
// kernel: netG_v2_forward.5
$region0: #{netG_v2_forward.5}
  #allocation0 [shape = 'u32[]', space=smem, size = 0x4, offset = 0x4, fixed_abs, tag = 'smem constant byte address 0x4 - core index']
  #allocation1 [shape = 'u32[144,128]{1,0:T(1,128)}', space=vmem, size = 0x12000, scoped, tag = 'internal scratch']
  %s0 = inlined_call_operand.vmem [shape: bf16[64,64], index: 0, kind: input, shape index: {}]
  %s1 = inlined_call_operand.vmem [shape: bf16[64,8], index: 1, kind: input, shape index: {}]
  %s2 = inlined_call_operand.vmem [shape: f32[64,8], index: 2, kind: input, shape index: {}]
  %s3 = inlined_call_operand.vmem [shape: f32[64,1], index: 3, kind: input, shape index: {}]
  %s4 = inlined_call_operand.vmem [shape: f32[64,1], index: 4, kind: input, shape index: {}]
  %s5 = inlined_call_operand.vmem [shape: bf16[64,8], index: 5, kind: output, shape index: {}]
  %s6 = sld [smem:[#allocation0]]
  $region30: #{netG_v2_forward.5} parent=0
    _
  %s8 = ssub.s32 1, %s6
  %s9 = scalar_select 0, %s8, %s6
  // Predicated region
  $region2: #{netG_v2_forward.5} parent=0 // pred_check
    _
  $region3: #{netG_v2_forward.5} parent=0 // pred_check_branch
    %11 = sbr.rel (0) target = $region5
  $region4: #{netG_v2_forward.5} parent=0 // pred_region
    _
  $region5: #{netG_v2_forward.5} parent=0 // pred_fallthru
    _
  // Predicated region
  $region6: #{netG_v2_forward.5} parent=0 // pred_check
    _
  $region7: #{netG_v2_forward.5} parent=0 // pred_check_branch
    %13 = sbr.rel (0) target = $region9
  $region8: #{netG_v2_forward.5} parent=0 // pred_region
    _
  $region9: #{netG_v2_forward.5} parent=0 // pred_fallthru
    _
  // Predicated region
  $region10: #{netG_v2_forward.5} parent=0 // pred_check
    _
  $region11: #{netG_v2_forward.5} parent=0 // pred_check_branch
    %15 = sbr.rel (0) target = $region13
  $region12: #{netG_v2_forward.5} parent=0 // pred_region
    _
  $region13: #{netG_v2_forward.5} parent=0 // pred_fallthru
    _
  // Predicated region
  $region14: #{netG_v2_forward.5} parent=0 // pred_check
    _
  $region15: #{netG_v2_forward.5} parent=0 // pred_check_branch
    %17 = sbr.rel (0) target = $region17
  $region16: #{netG_v2_forward.5} parent=0 // pred_region
    _
  $region17: #{netG_v2_forward.5} parent=0 // pred_fallthru
    _
  // Predicated region
  $region18: #{netG_v2_forward.5} parent=0 // pred_check
    _
  $region19: #{netG_v2_forward.5} parent=0 // pred_check_branch
    %19 = sbr.rel (0) target = $region21
  $region20: #{netG_v2_forward.5} parent=0 // pred_region
    _
  $region21: #{netG_v2_forward.5} parent=0 // pred_fallthru
    _
  %v21 = vld [vmem:[%s0] sm:$0xf]
  %v22 = vld [vmem:[%s0 + $0x4] sm:$0xf]
  %v23 = vld [vmem:[%s0 + $0x8] sm:$0xf]
  %v24 = vld [vmem:[%s0 + $0xc] sm:$0xf]
  %v25 = vld [vmem:[%s0 + $0x10] sm:$0xf]
  %v26 = vld [vmem:[%s0 + $0x14] sm:$0xf]
  %v27 = vld [vmem:[%s0 + $0x18] sm:$0xf]
  %v28 = vld [vmem:[%s0 + $0x1c] sm:$0xf]
  %v29 = vld [vmem:[%s1] sm:$0xf]
  %v30 = vld [vmem:[%s1 + $0x4] sm:$0xf]
  %v31 = vld [vmem:[%s1 + $0x8] sm:$0xf]
  %v32 = vld [vmem:[%s1 + $0xc] sm:$0xf]
  %v33 = vld [vmem:[%s1 + $0x10] sm:$0xf]
  %v34 = vld [vmem:[%s1 + $0x14] sm:$0xf]
  %v35 = vld [vmem:[%s1 + $0x18] sm:$0xf]
  %v36 = vld [vmem:[%s1 + $0x1c] sm:$0xf]
  %v37 = vld [vmem:[%s2] sm:$0xff]
  %v38 = vld [vmem:[%s2 + $0x8] sm:$0xff]
  %v39 = vld [vmem:[%s2 + $0x10] sm:$0xff]
  %v40 = vld [vmem:[%s2 + $0x18] sm:$0xff]
  %v41 = vld [vmem:[%s2 + $0x20] sm:$0xff]
  %v42 = vld [vmem:[%s2 + $0x28] sm:$0xff]
  %v43 = vld [vmem:[%s2 + $0x30] sm:$0xff]
  %v44 = vld [vmem:[%s2 + $0x38] sm:$0xff]
  %v53 = vunpack.c.l.b16 %v21
  %v54 = vunpack.c.l.b16 %v22
  %v55 = vunpack.c.l.b16 %v23
  %v56 = vunpack.c.l.b16 %v24
  %v57 = vunpack.c.l.b16 %v25
  %v58 = vunpack.c.l.b16 %v26
  %v59 = vunpack.c.l.b16 %v27
  %v60 = vunpack.c.l.b16 %v28
  %v61 = vpack.c.b16 %v54, %v53
  %v62 = vpack.c.b16 %v56, %v55
  %v63 = vpack.c.b16 %v58, %v57
  %v64 = vpack.c.b16 %v60, %v59
  %v73 = vunpack.c.l.b16 %v29
  %v74 = vunpack.c.l.b16 %v30
  %v75 = vunpack.c.l.b16 %v31
  %v76 = vunpack.c.l.b16 %v32
  %v77 = vunpack.c.l.b16 %v33
  %v78 = vunpack.c.l.b16 %v34
  %v79 = vunpack.c.l.b16 %v35
  %v80 = vunpack.c.l.b16 %v36
  %v81 = vpack.c.b16 %v74, %v73
  %v82 = vpack.c.b16 %v76, %v75
  %v83 = vpack.c.b16 %v78, %v77
  %v84 = vpack.c.b16 %v80, %v79
  %vm89 = vcmask 523264
  %v91 = vsel %vm89, %v61, 0
  %v94 = vsel %vm89, %v62, 0
  %v97 = vsel %vm89, %v63, 0
  %v100 = vsel %vm89, %v64, 0
  %102 = vmatprep.subr.bf16.mxu0 0
  %103 = vmatpush1.bf16.msra.mxu0 %v81
  %104 = vmatprep.subr.bf16.mxu0 0
  %105 = vmatpush1.bf16.msra.mxu0 %v82
  %106 = vmatprep.subr.bf16.mxu0 0
  %107 = vmatpush1.bf16.msra.mxu0 %v83
  %108 = vmatprep.subr.bf16.mxu0 0
  %109 = vmatpush1.bf16.msra.mxu0 %v84
  %110 = vmatprep.subr.bf16.mxu0 0
  %111 = vmatpush1.bf16.msra.mxu0 0
  %112 = vmatprep.subr.bf16.mxu0 0
  %113 = vmatpush1.bf16.msra.mxu0 0
  %114 = vmatprep.subr.bf16.mxu0 0
  %115 = vmatpush1.bf16.msra.mxu0 0
  %116 = vmatprep.subr.bf16.mxu0 0
  %117 = vmatpush1.bf16.msra.mxu0 0
  %118 = vmatprep.subr.bf16.mxu0 0
  %119 = vmatpush1.bf16.msra.mxu0 0
  %120 = vmatprep.subr.bf16.mxu0 0
  %121 = vmatpush1.bf16.msra.mxu0 0
  %122 = vmatprep.subr.bf16.mxu0 0
  %123 = vmatpush1.bf16.msra.mxu0 0
  %124 = vmatprep.subr.bf16.mxu0 0
  %125 = vmatpush1.bf16.msra.mxu0 0
  %126 = vmatprep.subr.bf16.mxu0 0
  %127 = vmatpush1.bf16.msra.mxu0 0
  %128 = vmatprep.subr.bf16.mxu0 0
  %129 = vmatpush1.bf16.msra.mxu0 0
  %130 = vmatprep.subr.bf16.mxu0 0
  %131 = vmatpush1.bf16.msra.mxu0 0
  %132 = vmatprep.subr.bf16.mxu0 0
  %133 = vmatpush1.bf16.msra.mxu0 0
  %134 = vmatprep.mubr.bf16.mxu0 0
  %135 = vmatmul.mubr.bf16.gmra.mrb[0].mxu0 %v91
  %v136 = vpop.f32.mrb[0].mxu0
  %v137 = vadd.f32 %v37, %v136
  %v138 = vpop.f32.mrb[0].mxu0
  %v139 = vpop.f32.mrb[0].mxu0
  %v140 = vadd.f32 %v38, %v139
  %v141 = vpop.f32.mrb[0].mxu0
  %142 = vmatprep.mubr.bf16.mxu0 0
  %143 = vmatmul.mubr.bf16.gmra.mrb[0].mxu0 %v94
  %v144 = vpop.f32.mrb[0].mxu0
  %v145 = vadd.f32 %v39, %v144
  %v146 = vpop.f32.mrb[0].mxu0
  %v147 = vpop.f32.mrb[0].mxu0
  %v148 = vadd.f32 %v40, %v147
  %v149 = vpop.f32.mrb[0].mxu0
  %150 = vmatprep.mubr.bf16.mxu0 0
  %151 = vmatmul.mubr.bf16.gmra.mrb[0].mxu0 %v97
  %v152 = vpop.f32.mrb[0].mxu0
  %v153 = vadd.f32 %v41, %v152
  %v154 = vpop.f32.mrb[0].mxu0
  %v155 = vpop.f32.mrb[0].mxu0
  %v156 = vadd.f32 %v42, %v155
  %v157 = vpop.f32.mrb[0].mxu0
  %158 = vmatprep.mubr.bf16.mxu0 0
  %159 = vmatmul.mubr.bf16.gmra.mrb[0].mxu0 %v100
  %v160 = vpop.f32.mrb[0].mxu0
  %v161 = vadd.f32 %v43, %v160
  %v162 = vpop.f32.mrb[0].mxu0
  %v163 = vpop.f32.mrb[0].mxu0
  %v164 = vadd.f32 %v44, %v163
  %v165 = vpop.f32.mrb[0].mxu0
  %166 = vdwg.mxu0
  %vm167 = vcmask 64512
  %v168 = vsel %vm167, %v137, 0.0
  %169 = vadd.xlane.f32.xlu0 %v168
  %v170 = vpop.xlane.xlu0 %169
  %v171 = vsel %vm167, %v140, 0.0
  %172 = vadd.xlane.f32.xlu0 %v171
  %v173 = vpop.xlane.xlu0 %172
  %v174 = vsel %vm167, %v145, 0.0
  %175 = vadd.xlane.f32.xlu0 %v174
  %v176 = vpop.xlane.xlu0 %175
  %v177 = vsel %vm167, %v148, 0.0
  %178 = vadd.xlane.f32.xlu0 %v177
  %v179 = vpop.xlane.xlu0 %178
  %v180 = vsel %vm167, %v153, 0.0
  %181 = vadd.xlane.f32.xlu0 %v180
  %v182 = vpop.xlane.xlu0 %181
  %v183 = vsel %vm167, %v156, 0.0
  %184 = vadd.xlane.f32.xlu0 %v183
  %v185 = vpop.xlane.xlu0 %184
  %v186 = vsel %vm167, %v161, 0.0
  %187 = vadd.xlane.f32.xlu0 %v186
  %v188 = vpop.xlane.xlu0 %187
  %v189 = vsel %vm167, %v164, 0.0
  %190 = vadd.xlane.f32.xlu0 %v189
  %v191 = vpop.xlane.xlu0 %190
  %v192 = vrcp.pop 8.0
  %v193 = vmul.f32 %v170, %v192
  %v194 = vmul.f32 %v173, %v192
  %v195 = vmul.f32 %v176, %v192
  %v196 = vmul.f32 %v179, %v192
  %v197 = vmul.f32 %v182, %v192
  %v198 = vmul.f32 %v185, %v192
  %v199 = vmul.f32 %v188, %v192
  %v200 = vmul.f32 %v191, %v192
  %v201 = vsub.f32 %v137, %v193
  %v202 = vsub.f32 %v140, %v194
  %v203 = vsub.f32 %v145, %v195
  %v204 = vsub.f32 %v148, %v196
  %v205 = vsub.f32 %v153, %v197
  %v206 = vsub.f32 %v156, %v198
  %v207 = vsub.f32 %v161, %v199
  %v208 = vsub.f32 %v164, %v200
  %v209 = vmul.f32 %v201, %v201
  %v210 = vmul.f32 %v202, %v202
  %v211 = vmul.f32 %v203, %v203
  %v212 = vmul.f32 %v204, %v204
  %v213 = vmul.f32 %v205, %v205
  %v214 = vmul.f32 %v206, %v206
  %v215 = vmul.f32 %v207, %v207
  %v216 = vmul.f32 %v208, %v208
  %v217 = vsel %vm167, %v209, 0.0
  %218 = vadd.xlane.f32.xlu0 %v217
  %v219 = vpop.xlane.xlu0 %218
  %v220 = vsel %vm167, %v210, 0.0
  %221 = vadd.xlane.f32.xlu0 %v220
  %v222 = vpop.xlane.xlu0 %221
  %v223 = vsel %vm167, %v211, 0.0
  %224 = vadd.xlane.f32.xlu0 %v223
  %v225 = vpop.xlane.xlu0 %224
  %v226 = vsel %vm167, %v212, 0.0
  %227 = vadd.xlane.f32.xlu0 %v226
  %v228 = vpop.xlane.xlu0 %227
  %v229 = vsel %vm167, %v213, 0.0
  %230 = vadd.xlane.f32.xlu0 %v229
  %v231 = vpop.xlane.xlu0 %230
  %v232 = vsel %vm167, %v214, 0.0
  %233 = vadd.xlane.f32.xlu0 %v232
  %v234 = vpop.xlane.xlu0 %233
  %v235 = vsel %vm167, %v215, 0.0
  %236 = vadd.xlane.f32.xlu0 %v235
  %v237 = vpop.xlane.xlu0 %236
  %v238 = vsel %vm167, %v216, 0.0
  %239 = vadd.xlane.f32.xlu0 %v238
  %v240 = vpop.xlane.xlu0 %239
  %v241 = vmul.f32 %v219, %v192
  %v242 = vmul.f32 %v222, %v192
  %v243 = vmul.f32 %v225, %v192
  %v244 = vmul.f32 %v228, %v192
  %v245 = vmul.f32 %v231, %v192
  %v246 = vmul.f32 %v234, %v192
  %v247 = vmul.f32 %v237, %v192
  %v248 = vmul.f32 %v240, %v192
  %v249 = vadd.f32 %v241, 1e-05
  %v250 = vadd.f32 %v242, 1e-05
  %v251 = vadd.f32 %v243, 1e-05
  %v252 = vadd.f32 %v244, 1e-05
  %v253 = vadd.f32 %v245, 1e-05
  %v254 = vadd.f32 %v246, 1e-05
  %v255 = vadd.f32 %v247, 1e-05
  %v256 = vadd.f32 %v248, 1e-05
  %v257 = vrsqrt.pop %v249
  %v258 = vrsqrt.pop %v250
  %v259 = vrsqrt.pop %v251
  %v260 = vrsqrt.pop %v252
  %v261 = vrsqrt.pop %v253
  %v262 = vrsqrt.pop %v254
  %v263 = vrsqrt.pop %v255
  %v264 = vrsqrt.pop %v256
  %v265 = vmul.f32 %v201, %v257
  %v266 = vmul.f32 %v202, %v258
  %v267 = vmul.f32 %v203, %v259
  %v268 = vmul.f32 %v204, %v260
  %v269 = vmul.f32 %v205, %v261
  %v270 = vmul.f32 %v206, %v262
  %v271 = vmul.f32 %v207, %v263
  %v272 = vmul.f32 %v208, %v264
  %v273 = vld [vmem:[%s3] sm:$0xff]
  %v274 = vld [vmem:[%s3 + $0x8] sm:$0xff]
  %v275 = vld [vmem:[%s3 + $0x10] sm:$0xff]
  %v276 = vld [vmem:[%s3 + $0x18] sm:$0xff]
  %v277 = vld [vmem:[%s3 + $0x20] sm:$0xff]
  %v278 = vld [vmem:[%s3 + $0x28] sm:$0xff]
  %v279 = vld [vmem:[%s3 + $0x30] sm:$0xff]
  %v280 = vld [vmem:[%s3 + $0x38] sm:$0xff]
  %282 = vset.pattern.permute.xlu0 0
  %283 = vperm.xlu0 %282, %v273
  %v284 = vpop.permute.xlu0 %283
  %287 = vset.pattern.permute.xlu0 0
  %288 = vperm.xlu0 %287, %v274
  %v289 = vpop.permute.xlu0 %288
  %292 = vset.pattern.permute.xlu0 0
  %293 = vperm.xlu0 %292, %v275
  %v294 = vpop.permute.xlu0 %293
  %297 = vset.pattern.permute.xlu0 0
  %298 = vperm.xlu0 %297, %v276
  %v299 = vpop.permute.xlu0 %298
  %302 = vset.pattern.permute.xlu0 0
  %303 = vperm.xlu0 %302, %v277
  %v304 = vpop.permute.xlu0 %303
  %307 = vset.pattern.permute.xlu0 0
  %308 = vperm.xlu0 %307, %v278
  %v309 = vpop.permute.xlu0 %308
  %312 = vset.pattern.permute.xlu0 0
  %313 = vperm.xlu0 %312, %v279
  %v314 = vpop.permute.xlu0 %313
  %317 = vset.pattern.permute.xlu0 0
  %318 = vperm.xlu0 %317, %v280
  %v319 = vpop.permute.xlu0 %318
  %v321 = vmul.f32 %v265, %v284
  %v322 = vmul.f32 %v266, %v289
  %v323 = vmul.f32 %v267, %v294
  %v324 = vmul.f32 %v268, %v299
  %v325 = vmul.f32 %v269, %v304
  %v326 = vmul.f32 %v270, %v309
  %v327 = vmul.f32 %v271, %v314
  %v328 = vmul.f32 %v272, %v319
  %v329 = vld [vmem:[%s4] sm:$0xff]
  %v330 = vld [vmem:[%s4 + $0x8] sm:$0xff]
  %v331 = vld [vmem:[%s4 + $0x10] sm:$0xff]
  %v332 = vld [vmem:[%s4 + $0x18] sm:$0xff]
  %v333 = vld [vmem:[%s4 + $0x20] sm:$0xff]
  %v334 = vld [vmem:[%s4 + $0x28] sm:$0xff]
  %v335 = vld [vmem:[%s4 + $0x30] sm:$0xff]
  %v336 = vld [vmem:[%s4 + $0x38] sm:$0xff]
  %338 = vset.pattern.permute.xlu0 0
  %339 = vperm.xlu0 %338, %v329
  %v340 = vpop.permute.xlu0 %339
  %343 = vset.pattern.permute.xlu0 0
  %344 = vperm.xlu0 %343, %v330
  %v345 = vpop.permute.xlu0 %344
  %348 = vset.pattern.permute.xlu0 0
  %349 = vperm.xlu0 %348, %v331
  %v350 = vpop.permute.xlu0 %349
  %353 = vset.pattern.permute.xlu0 0
  %354 = vperm.xlu0 %353, %v332
  %v355 = vpop.permute.xlu0 %354
  %358 = vset.pattern.permute.xlu0 0
  %359 = vperm.xlu0 %358, %v333
  %v360 = vpop.permute.xlu0 %359
  %363 = vset.pattern.permute.xlu0 0
  %364 = vperm.xlu0 %363, %v334
  %v365 = vpop.permute.xlu0 %364
  %368 = vset.pattern.permute.xlu0 0
  %369 = vperm.xlu0 %368, %v335
  %v370 = vpop.permute.xlu0 %369
  %373 = vset.pattern.permute.xlu0 0
  %374 = vperm.xlu0 %373, %v336
  %v375 = vpop.permute.xlu0 %374
  %v377 = vadd.f32 %v321, %v340
  %v378 = vadd.f32 %v322, %v345
  %v379 = vadd.f32 %v323, %v350
  %v380 = vadd.f32 %v324, %v355
  %v381 = vadd.f32 %v325, %v360
  %v382 = vadd.f32 %v326, %v365
  %v383 = vadd.f32 %v327, %v370
  %v384 = vadd.f32 %v328, %v375
  %v385 = vmax.f32 %v377, 0.0
  %v386 = vmax.f32 %v378, 0.0
  %v387 = vmax.f32 %v379, 0.0
  %v388 = vmax.f32 %v380, 0.0
  %v389 = vmax.f32 %v381, 0.0
  %v390 = vmax.f32 %v382, 0.0
  %v391 = vmax.f32 %v383, 0.0
  %v392 = vmax.f32 %v384, 0.0
  %v393 = vpack.c.bf16 %v386, %v385
  %v394 = vpack.c.bf16 %v388, %v387
  %v395 = vpack.c.bf16 %v390, %v389
  %v396 = vpack.c.bf16 %v392, %v391
  %v401 = vunpack.c.l.b16 %v393
  %v402 = vunpack.c.h.b16 %v393
  %v403 = vunpack.c.l.b16 %v394
  %v404 = vunpack.c.h.b16 %v394
  %v405 = vunpack.c.l.b16 %v395
  %v406 = vunpack.c.h.b16 %v395
  %v407 = vunpack.c.l.b16 %v396
  %v408 = vunpack.c.h.b16 %v396
  %v409 = vpack.c.b16 %v401, %v401
  %v410 = vpack.c.b16 %v402, %v402
  %v411 = vpack.c.b16 %v403, %v403
  %v412 = vpack.c.b16 %v404, %v404
  %v413 = vpack.c.b16 %v405, %v405
  %v414 = vpack.c.b16 %v406, %v406
  %v415 = vpack.c.b16 %v407, %v407
  %v416 = vpack.c.b16 %v408, %v408
  %vm425 = vcmask 60416
  %426 = vst.msk [vmem:[%s5] sm:$0xf] %vm425, %v409
  %427 = vst.msk [vmem:[%s5 + $0x4] sm:$0xf] %vm425, %v410
  %428 = vst.msk [vmem:[%s5 + $0x8] sm:$0xf] %vm425, %v411
  %429 = vst.msk [vmem:[%s5 + $0xc] sm:$0xf] %vm425, %v412
  %430 = vst.msk [vmem:[%s5 + $0x10] sm:$0xf] %vm425, %v413
  %431 = vst.msk [vmem:[%s5 + $0x14] sm:$0xf] %vm425, %v414
  %432 = vst.msk [vmem:[%s5 + $0x18] sm:$0xf] %vm425, %v415
  %433 = vst.msk [vmem:[%s5 + $0x1c] sm:$0xf] %vm425, %v416
  // Predicated region
  $region22: #{netG_v2_forward.5} parent=0 // pred_check
    _
  $region23: #{netG_v2_forward.5} parent=0 // pred_check_branch
    %435 = sbr.rel (0) target = $region25
  $region24: #{netG_v2_forward.5} parent=0 // pred_region
    _
  $region25: #{netG_v2_forward.5} parent=0 // pred_fallthru
    _
  // Predicated region
  $region26: #{netG_v2_forward.5} parent=0 // pred_check
    _
  $region27: #{netG_v2_forward.5} parent=0 // pred_check_branch
    %437 = sbr.rel (0) target = $region29
  $region28: #{netG_v2_forward.5} parent=0 // pred_region
    _
  $region29: #{netG_v2_forward.5} parent=0 // pred_fallthru
    _

// kernel: netG_v2_forward.6
$region0: #{netG_v2_forward.6}
  #allocation0 [shape = 'u32[]', space=smem, size = 0x4, offset = 0x4, fixed_abs, tag = 'smem constant byte address 0x4 - core index']
  #allocation1 [shape = 'u32[144,128]{1,0:T(1,128)}', space=vmem, size = 0x12000, scoped, tag = 'internal scratch']
  %s0 = inlined_call_operand.vmem [shape: bf16[32,1024], index: 0, kind: input, shape index: {}]
  %s1 = inlined_call_operand.vmem [shape: bf16[1024,32], index: 1, kind: input, shape index: {}]
  %s2 = inlined_call_operand.vmem [shape: f32[32,1], index: 2, kind: input, shape index: {}]
  %s3 = inlined_call_operand.vmem [shape: f32[32,1], index: 3, kind: input, shape index: {}]
  %s4 = inlined_call_operand.vmem [shape: f32[32,1], index: 4, kind: input, shape index: {}]
  %s5 = inlined_call_operand.vmem [shape: bf16[32,32], index: 5, kind: output, shape index: {}]
  %s6 = sld [smem:[#allocation0]]
  $region30: #{netG_v2_forward.6} parent=0
    _
  %s8 = ssub.s32 1, %s6
  %s9 = scalar_select 0, %s8, %s6
  // Predicated region
  $region2: #{netG_v2_forward.6} parent=0 // pred_check
    _
  $region3: #{netG_v2_forward.6} parent=0 // pred_check_branch
    %11 = sbr.rel (0) target = $region5
  $region4: #{netG_v2_forward.6} parent=0 // pred_region
    _
  $region5: #{netG_v2_forward.6} parent=0 // pred_fallthru
    _
  // Predicated region
  $region6: #{netG_v2_forward.6} parent=0 // pred_check
    _
  $region7: #{netG_v2_forward.6} parent=0 // pred_check_branch
    %13 = sbr.rel (0) target = $region9
  $region8: #{netG_v2_forward.6} parent=0 // pred_region
    _
  $region9: #{netG_v2_forward.6} parent=0 // pred_fallthru
    _
  // Predicated region
  $region10: #{netG_v2_forward.6} parent=0 // pred_check
    _
  $region11: #{netG_v2_forward.6} parent=0 // pred_check_branch
    %15 = sbr.rel (0) target = $region13
  $region12: #{netG_v2_forward.6} parent=0 // pred_region
    _
  $region13: #{netG_v2_forward.6} parent=0 // pred_fallthru
    _
  // Predicated region
  $region14: #{netG_v2_forward.6} parent=0 // pred_check
    _
  $region15: #{netG_v2_forward.6} parent=0 // pred_check_branch
    %17 = sbr.rel (0) target = $region17
  $region16: #{netG_v2_forward.6} parent=0 // pred_region
    _
  $region17: #{netG_v2_forward.6} parent=0 // pred_fallthru
    _
  // Predicated region
  $region18: #{netG_v2_forward.6} parent=0 // pred_check
    _
  $region19: #{netG_v2_forward.6} parent=0 // pred_check_branch
    %19 = sbr.rel (0) target = $region21
  $region20: #{netG_v2_forward.6} parent=0 // pred_region
    _
  $region21: #{netG_v2_forward.6} parent=0 // pred_fallthru
    _
  %v21 = vld [vmem:[%s0] sm:$0xff]
  %v22 = vld [vmem:[%s0 + $0x8] sm:$0xff]
  %v23 = vld [vmem:[%s0 + $0x10] sm:$0xff]
  %v24 = vld [vmem:[%s0 + $0x18] sm:$0xff]
  %v25 = vld [vmem:[%s0 + $0x20] sm:$0xff]
  %v26 = vld [vmem:[%s0 + $0x28] sm:$0xff]
  %v27 = vld [vmem:[%s0 + $0x30] sm:$0xff]
  %v28 = vld [vmem:[%s0 + $0x38] sm:$0xff]
  %v29 = vld [vmem:[%s0 + $0x40] sm:$0xff]
  %v30 = vld [vmem:[%s0 + $0x48] sm:$0xff]
  %v31 = vld [vmem:[%s0 + $0x50] sm:$0xff]
  %v32 = vld [vmem:[%s0 + $0x58] sm:$0xff]
  %v33 = vld [vmem:[%s0 + $0x60] sm:$0xff]
  %v34 = vld [vmem:[%s0 + $0x68] sm:$0xff]
  %v35 = vld [vmem:[%s0 + $0x70] sm:$0xff]
  %v36 = vld [vmem:[%s0 + $0x78] sm:$0xff]
  %v37 = vld [vmem:[%s1] sm:$0xf]
  %v38 = vld [vmem:[%s1 + $0x4] sm:$0xf]
  %v39 = vld [vmem:[%s1 + $0x8] sm:$0xf]
  %v40 = vld [vmem:[%s1 + $0xc] sm:$0xf]
  %v41 = vld [vmem:[%s1 + $0x10] sm:$0xf]
  %v42 = vld [vmem:[%s1 + $0x14] sm:$0xf]
  %v43 = vld [vmem:[%s1 + $0x18] sm:$0xf]
  %v44 = vld [vmem:[%s1 + $0x1c] sm:$0xf]
  %v45 = vld [vmem:[%s1 + $0x20] sm:$0xf]
  %v46 = vld [vmem:[%s1 + $0x24] sm:$0xf]
  %v47 = vld [vmem:[%s1 + $0x28] sm:$0xf]
  %v48 = vld [vmem:[%s1 + $0x2c] sm:$0xf]
  %v49 = vld [vmem:[%s1 + $0x30] sm:$0xf]
  %v50 = vld [vmem:[%s1 + $0x34] sm:$0xf]
  %v51 = vld [vmem:[%s1 + $0x38] sm:$0xf]
  %v52 = vld [vmem:[%s1 + $0x3c] sm:$0xf]
  %v53 = vld [vmem:[%s1 + $0x40] sm:$0xf]
  %v54 = vld [vmem:[%s1 + $0x44] sm:$0xf]
  %v55 = vld [vmem:[%s1 + $0x48] sm:$0xf]
  %v56 = vld [vmem:[%s1 + $0x4c] sm:$0xf]
  %v57 = vld [vmem:[%s1 + $0x50] sm:$0xf]
  %v58 = vld [vmem:[%s1 + $0x54] sm:$0xf]
  %v59 = vld [vmem:[%s1 + $0x58] sm:$0xf]
  %v60 = vld [vmem:[%s1 + $0x5c] sm:$0xf]
  %v61 = vld [vmem:[%s1 + $0x60] sm:$0xf]
  %v62 = vld [vmem:[%s1 + $0x64] sm:$0xf]
  %v63 = vld [vmem:[%s1 + $0x68] sm:$0xf]
  %v64 = vld [vmem:[%s1 + $0x6c] sm:$0xf]
  %v65 = vld [vmem:[%s1 + $0x70] sm:$0xf]
  %v66 = vld [vmem:[%s1 + $0x74] sm:$0xf]
  %v67 = vld [vmem:[%s1 + $0x78] sm:$0xf]
  %v68 = vld [vmem:[%s1 + $0x7c] sm:$0xf]
  %v69 = vld [vmem:[%s1 + $0x80] sm:$0xf]
  %v70 = vld [vmem:[%s1 + $0x84] sm:$0xf]
  %v71 = vld [vmem:[%s1 + $0x88] sm:$0xf]
  %v72 = vld [vmem:[%s1 + $0x8c] sm:$0xf]
  %v73 = vld [vmem:[%s1 + $0x90] sm:$0xf]
  %v74 = vld [vmem:[%s1 + $0x94] sm:$0xf]
  %v75 = vld [vmem:[%s1 + $0x98] sm:$0xf]
  %v76 = vld [vmem:[%s1 + $0x9c] sm:$0xf]
  %v77 = vld [vmem:[%s1 + $0xa0] sm:$0xf]
  %v78 = vld [vmem:[%s1 + $0xa4] sm:$0xf]
  %v79 = vld [vmem:[%s1 + $0xa8] sm:$0xf]
  %v80 = vld [vmem:[%s1 + $0xac] sm:$0xf]
  %v81 = vld [vmem:[%s1 + $0xb0] sm:$0xf]
  %v82 = vld [vmem:[%s1 + $0xb4] sm:$0xf]
  %v83 = vld [vmem:[%s1 + $0xb8] sm:$0xf]
  %v84 = vld [vmem:[%s1 + $0xbc] sm:$0xf]
  %v85 = vld [vmem:[%s1 + $0xc0] sm:$0xf]
  %v86 = vld [vmem:[%s1 + $0xc4] sm:$0xf]
  %v87 = vld [vmem:[%s1 + $0xc8] sm:$0xf]
  %v88 = vld [vmem:[%s1 + $0xcc] sm:$0xf]
  %v89 = vld [vmem:[%s1 + $0xd0] sm:$0xf]
  %v90 = vld [vmem:[%s1 + $0xd4] sm:$0xf]
  %v91 = vld [vmem:[%s1 + $0xd8] sm:$0xf]
  %v92 = vld [vmem:[%s1 + $0xdc] sm:$0xf]
  %v93 = vld [vmem:[%s1 + $0xe0] sm:$0xf]
  %v94 = vld [vmem:[%s1 + $0xe4] sm:$0xf]
  %v95 = vld [vmem:[%s1 + $0xe8] sm:$0xf]
  %v96 = vld [vmem:[%s1 + $0xec] sm:$0xf]
  %v97 = vld [vmem:[%s1 + $0xf0] sm:$0xf]
  %v98 = vld [vmem:[%s1 + $0xf4] sm:$0xf]
  %v99 = vld [vmem:[%s1 + $0xf8] sm:$0xf]
  %v100 = vld [vmem:[%s1 + $0xfc] sm:$0xf]
  %v101 = vld [vmem:[%s1 + $0x100] sm:$0xf]
  %v102 = vld [vmem:[%s1 + $0x104] sm:$0xf]
  %v103 = vld [vmem:[%s1 + $0x108] sm:$0xf]
  %v104 = vld [vmem:[%s1 + $0x10c] sm:$0xf]
  %v105 = vld [vmem:[%s1 + $0x110] sm:$0xf]
  %v106 = vld [vmem:[%s1 + $0x114] sm:$0xf]
  %v107 = vld [vmem:[%s1 + $0x118] sm:$0xf]
  %v108 = vld [vmem:[%s1 + $0x11c] sm:$0xf]
  %v109 = vld [vmem:[%s1 + $0x120] sm:$0xf]
  %v110 = vld [vmem:[%s1 + $0x124] sm:$0xf]
  %v111 = vld [vmem:[%s1 + $0x128] sm:$0xf]
  %v112 = vld [vmem:[%s1 + $0x12c] sm:$0xf]
  %v113 = vld [vmem:[%s1 + $0x130] sm:$0xf]
  %v114 = vld [vmem:[%s1 + $0x134] sm:$0xf]
  %v115 = vld [vmem:[%s1 + $0x138] sm:$0xf]
  %v116 = vld [vmem:[%s1 + $0x13c] sm:$0xf]
  %v117 = vld [vmem:[%s1 + $0x140] sm:$0xf]
  %v118 = vld [vmem:[%s1 + $0x144] sm:$0xf]
  %v119 = vld [vmem:[%s1 + $0x148] sm:$0xf]
  %v120 = vld [vmem:[%s1 + $0x14c] sm:$0xf]
  %v121 = vld [vmem:[%s1 + $0x150] sm:$0xf]
  %v122 = vld [vmem:[%s1 + $0x154] sm:$0xf]
  %v123 = vld [vmem:[%s1 + $0x158] sm:$0xf]
  %v124 = vld [vmem:[%s1 + $0x15c] sm:$0xf]
  %v125 = vld [vmem:[%s1 + $0x160] sm:$0xf]
  %v126 = vld [vmem:[%s1 + $0x164] sm:$0xf]
  %v127 = vld [vmem:[%s1 + $0x168] sm:$0xf]
  %v128 = vld [vmem:[%s1 + $0x16c] sm:$0xf]
  %v129 = vld [vmem:[%s1 + $0x170] sm:$0xf]
  %v130 = vld [vmem:[%s1 + $0x174] sm:$0xf]
  %v131 = vld [vmem:[%s1 + $0x178] sm:$0xf]
  %v132 = vld [vmem:[%s1 + $0x17c] sm:$0xf]
  %v133 = vld [vmem:[%s1 + $0x180] sm:$0xf]
  %v134 = vld [vmem:[%s1 + $0x184] sm:$0xf]
  %v135 = vld [vmem:[%s1 + $0x188] sm:$0xf]
  %v136 = vld [vmem:[%s1 + $0x18c] sm:$0xf]
  %v137 = vld [vmem:[%s1 + $0x190] sm:$0xf]
  %v138 = vld [vmem:[%s1 + $0x194] sm:$0xf]
  %v139 = vld [vmem:[%s1 + $0x198] sm:$0xf]
  %v140 = vld [vmem:[%s1 + $0x19c] sm:$0xf]
  %v141 = vld [vmem:[%s1 + $0x1a0] sm:$0xf]
  %v142 = vld [vmem:[%s1 + $0x1a4] sm:$0xf]
  %v143 = vld [vmem:[%s1 + $0x1a8] sm:$0xf]
  %v144 = vld [vmem:[%s1 + $0x1ac] sm:$0xf]
  %v145 = vld [vmem:[%s1 + $0x1b0] sm:$0xf]
  %v146 = vld [vmem:[%s1 + $0x1b4] sm:$0xf]
  %v147 = vld [vmem:[%s1 + $0x1b8] sm:$0xf]
  %v148 = vld [vmem:[%s1 + $0x1bc] sm:$0xf]
  %v149 = vld [vmem:[%s1 + $0x1c0] sm:$0xf]
  %v150 = vld [vmem:[%s1 + $0x1c4] sm:$0xf]
  %v151 = vld [vmem:[%s1 + $0x1c8] sm:$0xf]
  %v152 = vld [vmem:[%s1 + $0x1cc] sm:$0xf]
  %v153 = vld [vmem:[%s1 + $0x1d0] sm:$0xf]
  %v154 = vld [vmem:[%s1 + $0x1d4] sm:$0xf]
  %v155 = vld [vmem:[%s1 + $0x1d8] sm:$0xf]
  %v156 = vld [vmem:[%s1 + $0x1dc] sm:$0xf]
  %v157 = vld [vmem:[%s1 + $0x1e0] sm:$0xf]
  %v158 = vld [vmem:[%s1 + $0x1e4] sm:$0xf]
  %v159 = vld [vmem:[%s1 + $0x1e8] sm:$0xf]
  %v160 = vld [vmem:[%s1 + $0x1ec] sm:$0xf]
  %v161 = vld [vmem:[%s1 + $0x1f0] sm:$0xf]
  %v162 = vld [vmem:[%s1 + $0x1f4] sm:$0xf]
  %v163 = vld [vmem:[%s1 + $0x1f8] sm:$0xf]
  %v164 = vld [vmem:[%s1 + $0x1fc] sm:$0xf]
  %v165 = vld [vmem:[%s2] sm:$0xff]
  %v166 = vld [vmem:[%s2 + $0x8] sm:$0xff]
  %v167 = vld [vmem:[%s2 + $0x10] sm:$0xff]
  %v168 = vld [vmem:[%s2 + $0x18] sm:$0xff]
  %170 = vset.pattern.permute.xlu0 0
  %171 = vperm.xlu0 %170, %v165
  %v172 = vpop.permute.xlu0 %171
  %175 = vset.pattern.permute.xlu0 0
  %176 = vperm.xlu0 %175, %v166
  %v177 = vpop.permute.xlu0 %176
  %180 = vset.pattern.permute.xlu0 0
  %181 = vperm.xlu0 %180, %v167
  %v182 = vpop.permute.xlu0 %181
  %185 = vset.pattern.permute.xlu0 0
  %186 = vperm.xlu0 %185, %v168
  %v187 = vpop.permute.xlu0 %186
  %v205 = vunpack.c.l.b16 %v21
  %v206 = vunpack.c.h.b16 %v21
  %v207 = vunpack.c.l.b16 %v22
  %v208 = vunpack.c.h.b16 %v22
  %v209 = vunpack.c.l.b16 %v23
  %v210 = vunpack.c.h.b16 %v23
  %v211 = vunpack.c.l.b16 %v24
  %v212 = vunpack.c.h.b16 %v24
  %v213 = vunpack.c.l.b16 %v25
  %v214 = vunpack.c.h.b16 %v25
  %v215 = vunpack.c.l.b16 %v26
  %v216 = vunpack.c.h.b16 %v26
  %v217 = vunpack.c.l.b16 %v27
  %v218 = vunpack.c.h.b16 %v27
  %v219 = vunpack.c.l.b16 %v28
  %v220 = vunpack.c.h.b16 %v28
  %v221 = vunpack.c.l.b16 %v29
  %v222 = vunpack.c.h.b16 %v29
  %v223 = vunpack.c.l.b16 %v30
  %v224 = vunpack.c.h.b16 %v30
  %v225 = vunpack.c.l.b16 %v31
  %v226 = vunpack.c.h.b16 %v31
  %v227 = vunpack.c.l.b16 %v32
  %v228 = vunpack.c.h.b16 %v32
  %v229 = vunpack.c.l.b16 %v33
  %v230 = vunpack.c.h.b16 %v33
  %v231 = vunpack.c.l.b16 %v34
  %v232 = vunpack.c.h.b16 %v34
  %v233 = vunpack.c.l.b16 %v35
  %v234 = vunpack.c.h.b16 %v35
  %v235 = vunpack.c.l.b16 %v36
  %v236 = vunpack.c.h.b16 %v36
  %v237 = vpack.c.b16 %v213, %v205
  %v238 = vpack.c.b16 %v214, %v206
  %v239 = vpack.c.b16 %v215, %v207
  %v240 = vpack.c.b16 %v216, %v208
  %v241 = vpack.c.b16 %v217, %v209
  %v242 = vpack.c.b16 %v218, %v210
  %v243 = vpack.c.b16 %v219, %v211
  %v244 = vpack.c.b16 %v220, %v212
  %v245 = vpack.c.b16 %v229, %v221
  %v246 = vpack.c.b16 %v230, %v222
  %v247 = vpack.c.b16 %v231, %v223
  %v248 = vpack.c.b16 %v232, %v224
  %v249 = vpack.c.b16 %v233, %v225
  %v250 = vpack.c.b16 %v234, %v226
  %v251 = vpack.c.b16 %v235, %v227
  %v252 = vpack.c.b16 %v236, %v228
  %v397 = vunpack.c.l.b16 %v37
  %v398 = vunpack.c.l.b16 %v38
  %v399 = vunpack.c.l.b16 %v39
  %v400 = vunpack.c.l.b16 %v40
  %v401 = vunpack.c.l.b16 %v41
  %v402 = vunpack.c.l.b16 %v42
  %v403 = vunpack.c.l.b16 %v43
  %v404 = vunpack.c.l.b16 %v44
  %v405 = vunpack.c.l.b16 %v45
  %v406 = vunpack.c.l.b16 %v46
  %v407 = vunpack.c.l.b16 %v47
  %v408 = vunpack.c.l.b16 %v48
  %v409 = vunpack.c.l.b16 %v49
  %v410 = vunpack.c.l.b16 %v50
  %v411 = vunpack.c.l.b16 %v51
  %v412 = vunpack.c.l.b16 %v52
  %v413 = vunpack.c.l.b16 %v53
  %v414 = vunpack.c.l.b16 %v54
  %v415 = vunpack.c.l.b16 %v55
  %v416 = vunpack.c.l.b16 %v56
  %v417 = vunpack.c.l.b16 %v57
  %v418 = vunpack.c.l.b16 %v58
  %v419 = vunpack.c.l.b16 %v59
  %v420 = vunpack.c.l.b16 %v60
  %v421 = vunpack.c.l.b16 %v61
  %v422 = vunpack.c.l.b16 %v62
  %v423 = vunpack.c.l.b16 %v63
  %v424 = vunpack.c.l.b16 %v64
  %v425 = vunpack.c.l.b16 %v65
  %v426 = vunpack.c.l.b16 %v66
  %v427 = vunpack.c.l.b16 %v67
  %v428 = vunpack.c.l.b16 %v68
  %v429 = vunpack.c.l.b16 %v69
  %v430 = vunpack.c.l.b16 %v70
  %v431 = vunpack.c.l.b16 %v71
  %v432 = vunpack.c.l.b16 %v72
  %v433 = vunpack.c.l.b16 %v73
  %v434 = vunpack.c.l.b16 %v74
  %v435 = vunpack.c.l.b16 %v75
  %v436 = vunpack.c.l.b16 %v76
  %v437 = vunpack.c.l.b16 %v77
  %v438 = vunpack.c.l.b16 %v78
  %v439 = vunpack.c.l.b16 %v79
  %v440 = vunpack.c.l.b16 %v80
  %v441 = vunpack.c.l.b16 %v81
  %v442 = vunpack.c.l.b16 %v82
  %v443 = vunpack.c.l.b16 %v83
  %v444 = vunpack.c.l.b16 %v84
  %v445 = vunpack.c.l.b16 %v85
  %v446 = vunpack.c.l.b16 %v86
  %v447 = vunpack.c.l.b16 %v87
  %v448 = vunpack.c.l.b16 %v88
  %v449 = vunpack.c.l.b16 %v89
  %v450 = vunpack.c.l.b16 %v90
  %v451 = vunpack.c.l.b16 %v91
  %v452 = vunpack.c.l.b16 %v92
  %v453 = vunpack.c.l.b16 %v93
  %v454 = vunpack.c.l.b16 %v94
  %v455 = vunpack.c.l.b16 %v95
  %v456 = vunpack.c.l.b16 %v96
  %v457 = vunpack.c.l.b16 %v97
  %v458 = vunpack.c.l.b16 %v98
  %v459 = vunpack.c.l.b16 %v99
  %v460 = vunpack.c.l.b16 %v100
  %v461 = vunpack.c.l.b16 %v101
  %v462 = vunpack.c.l.b16 %v102
  %v463 = vunpack.c.l.b16 %v103
  %v464 = vunpack.c.l.b16 %v104
  %v465 = vunpack.c.l.b16 %v105
  %v466 = vunpack.c.l.b16 %v106
  %v467 = vunpack.c.l.b16 %v107
  %v468 = vunpack.c.l.b16 %v108
  %v469 = vunpack.c.l.b16 %v109
  %v470 = vunpack.c.l.b16 %v110
  %v471 = vunpack.c.l.b16 %v111
  %v472 = vunpack.c.l.b16 %v112
  %v473 = vunpack.c.l.b16 %v113
  %v474 = vunpack.c.l.b16 %v114
  %v475 = vunpack.c.l.b16 %v115
  %v476 = vunpack.c.l.b16 %v116
  %v477 = vunpack.c.l.b16 %v117
  %v478 = vunpack.c.l.b16 %v118
  %v479 = vunpack.c.l.b16 %v119
  %v480 = vunpack.c.l.b16 %v120
  %v481 = vunpack.c.l.b16 %v121
  %v482 = vunpack.c.l.b16 %v122
  %v483 = vunpack.c.l.b16 %v123
  %v484 = vunpack.c.l.b16 %v124
  %v485 = vunpack.c.l.b16 %v125
  %v486 = vunpack.c.l.b16 %v126
  %v487 = vunpack.c.l.b16 %v127
  %v488 = vunpack.c.l.b16 %v128
  %v489 = vunpack.c.l.b16 %v129
  %v490 = vunpack.c.l.b16 %v130
  %v491 = vunpack.c.l.b16 %v131
  %v492 = vunpack.c.l.b16 %v132
  %v493 = vunpack.c.l.b16 %v133
  %v494 = vunpack.c.l.b16 %v134
  %v495 = vunpack.c.l.b16 %v135
  %v496 = vunpack.c.l.b16 %v136
  %v497 = vunpack.c.l.b16 %v137
  %v498 = vunpack.c.l.b16 %v138
  %v499 = vunpack.c.l.b16 %v139
  %v500 = vunpack.c.l.b16 %v140
  %v501 = vunpack.c.l.b16 %v141
  %v502 = vunpack.c.l.b16 %v142
  %v503 = vunpack.c.l.b16 %v143
  %v504 = vunpack.c.l.b16 %v144
  %v505 = vunpack.c.l.b16 %v145
  %v506 = vunpack.c.l.b16 %v146
  %v507 = vunpack.c.l.b16 %v147
  %v508 = vunpack.c.l.b16 %v148
  %v509 = vunpack.c.l.b16 %v149
  %v510 = vunpack.c.l.b16 %v150
  %v511 = vunpack.c.l.b16 %v151
  %v512 = vunpack.c.l.b16 %v152
  %v513 = vunpack.c.l.b16 %v153
  %v514 = vunpack.c.l.b16 %v154
  %v515 = vunpack.c.l.b16 %v155
  %v516 = vunpack.c.l.b16 %v156
  %v517 = vunpack.c.l.b16 %v157
  %v518 = vunpack.c.l.b16 %v158
  %v519 = vunpack.c.l.b16 %v159
  %v520 = vunpack.c.l.b16 %v160
  %v521 = vunpack.c.l.b16 %v161
  %v522 = vunpack.c.l.b16 %v162
  %v523 = vunpack.c.l.b16 %v163
  %v524 = vunpack.c.l.b16 %v164
  %v525 = vpack.c.b16 %v398, %v397
  %v526 = vpack.c.b16 %v400, %v399
  %v527 = vpack.c.b16 %v402, %v401
  %v528 = vpack.c.b16 %v404, %v403
  %v529 = vpack.c.b16 %v406, %v405
  %v530 = vpack.c.b16 %v408, %v407
  %v531 = vpack.c.b16 %v410, %v409
  %v532 = vpack.c.b16 %v412, %v411
  %v533 = vpack.c.b16 %v414, %v413
  %v534 = vpack.c.b16 %v416, %v415
  %v535 = vpack.c.b16 %v418, %v417
  %v536 = vpack.c.b16 %v420, %v419
  %v537 = vpack.c.b16 %v422, %v421
  %v538 = vpack.c.b16 %v424, %v423
  %v539 = vpack.c.b16 %v426, %v425
  %v540 = vpack.c.b16 %v428, %v427
  %v541 = vpack.c.b16 %v430, %v429
  %v542 = vpack.c.b16 %v432, %v431
  %v543 = vpack.c.b16 %v434, %v433
  %v544 = vpack.c.b16 %v436, %v435
  %v545 = vpack.c.b16 %v438, %v437
  %v546 = vpack.c.b16 %v440, %v439
  %v547 = vpack.c.b16 %v442, %v441
  %v548 = vpack.c.b16 %v444, %v443
  %v549 = vpack.c.b16 %v446, %v445
  %v550 = vpack.c.b16 %v448, %v447
  %v551 = vpack.c.b16 %v450, %v449
  %v552 = vpack.c.b16 %v452, %v451
  %v553 = vpack.c.b16 %v454, %v453
  %v554 = vpack.c.b16 %v456, %v455
  %v555 = vpack.c.b16 %v458, %v457
  %v556 = vpack.c.b16 %v460, %v459
  %v557 = vpack.c.b16 %v462, %v461
  %v558 = vpack.c.b16 %v464, %v463
  %v559 = vpack.c.b16 %v466, %v465
  %v560 = vpack.c.b16 %v468, %v467
  %v561 = vpack.c.b16 %v470, %v469
  %v562 = vpack.c.b16 %v472, %v471
  %v563 = vpack.c.b16 %v474, %v473
  %v564 = vpack.c.b16 %v476, %v475
  %v565 = vpack.c.b16 %v478, %v477
  %v566 = vpack.c.b16 %v480, %v479
  %v567 = vpack.c.b16 %v482, %v481
  %v568 = vpack.c.b16 %v484, %v483
  %v569 = vpack.c.b16 %v486, %v485
  %v570 = vpack.c.b16 %v488, %v487
  %v571 = vpack.c.b16 %v490, %v489
  %v572 = vpack.c.b16 %v492, %v491
  %v573 = vpack.c.b16 %v494, %v493
  %v574 = vpack.c.b16 %v496, %v495
  %v575 = vpack.c.b16 %v498, %v497
  %v576 = vpack.c.b16 %v500, %v499
  %v577 = vpack.c.b16 %v502, %v501
  %v578 = vpack.c.b16 %v504, %v503
  %v579 = vpack.c.b16 %v506, %v505
  %v580 = vpack.c.b16 %v508, %v507
  %v581 = vpack.c.b16 %v510, %v509
  %v582 = vpack.c.b16 %v512, %v511
  %v583 = vpack.c.b16 %v514, %v513
  %v584 = vpack.c.b16 %v516, %v515
  %v585 = vpack.c.b16 %v518, %v517
  %v586 = vpack.c.b16 %v520, %v519
  %v587 = vpack.c.b16 %v522, %v521
  %v588 = vpack.c.b16 %v524, %v523
  %653 = vmatprep.subr.bf16.mxu0 0
  %654 = vmatpush1.bf16.msra.mxu0 %v525
  %655 = vmatprep.subr.bf16.mxu0 0
  %656 = vmatpush1.bf16.msra.mxu0 %v526
  %657 = vmatprep.subr.bf16.mxu0 0
  %658 = vmatpush1.bf16.msra.mxu0 %v527
  %659 = vmatprep.subr.bf16.mxu0 0
  %660 = vmatpush1.bf16.msra.mxu0 %v528
  %661 = vmatprep.subr.bf16.mxu0 0
  %662 = vmatpush1.bf16.msra.mxu0 %v529
  %663 = vmatprep.subr.bf16.mxu0 0
  %664 = vmatpush1.bf16.msra.mxu0 %v530
  %665 = vmatprep.subr.bf16.mxu0 0
  %666 = vmatpush1.bf16.msra.mxu0 %v531
  %667 = vmatprep.subr.bf16.mxu0 0
  %668 = vmatpush1.bf16.msra.mxu0 %v532
  %669 = vmatprep.subr.bf16.mxu0 0
  %670 = vmatpush1.bf16.msra.mxu0 %v533
  %671 = vmatprep.subr.bf16.mxu0 0
  %672 = vmatpush1.bf16.msra.mxu0 %v534
  %673 = vmatprep.subr.bf16.mxu0 0
  %674 = vmatpush1.bf16.msra.mxu0 %v535
  %675 = vmatprep.subr.bf16.mxu0 0
  %676 = vmatpush1.bf16.msra.mxu0 %v536
  %677 = vmatprep.subr.bf16.mxu0 0
  %678 = vmatpush1.bf16.msra.mxu0 %v537
  %679 = vmatprep.subr.bf16.mxu0 0
  %680 = vmatpush1.bf16.msra.mxu0 %v538
  %681 = vmatprep.subr.bf16.mxu0 0
  %682 = vmatpush1.bf16.msra.mxu0 %v539
  %683 = vmatprep.subr.bf16.mxu0 0
  %684 = vmatpush1.bf16.msra.mxu0 %v540
  %685 = vmatprep.mubr.bf16.mxu0 %v238
  %686 = vmatmul.mubr.bf16.gmra.mrb[0].mxu0 %v237
  %v687 = vpop.f32.mrb[0].mxu0
  %v688 = vadd.f32 %v172, %v687
  %v689 = vpop.f32.mrb[0].mxu0
  %v690 = vpop.f32.mrb[0].mxu0
  %v691 = vadd.f32 %v177, %v690
  %v692 = vpop.f32.mrb[0].mxu0
  %693 = vmatprep.mubr.bf16.mxu0 %v246
  %694 = vmatmul.mubr.bf16.gmra.mrb[0].mxu0 %v245
  %v695 = vpop.f32.mrb[0].mxu0
  %v696 = vadd.f32 %v182, %v695
  %v697 = vpop.f32.mrb[0].mxu0
  %v698 = vpop.f32.mrb[0].mxu0
  %v699 = vadd.f32 %v187, %v698
  %v700 = vpop.f32.mrb[0].mxu0
  %701 = vdwg.mxu0
  %702 = vmatprep.subr.bf16.mxu0 0
  %703 = vmatpush1.bf16.msra.mxu0 %v541
  %704 = vmatprep.subr.bf16.mxu0 0
  %705 = vmatpush1.bf16.msra.mxu0 %v542
  %706 = vmatprep.subr.bf16.mxu0 0
  %707 = vmatpush1.bf16.msra.mxu0 %v543
  %708 = vmatprep.subr.bf16.mxu0 0
  %709 = vmatpush1.bf16.msra.mxu0 %v544
  %710 = vmatprep.subr.bf16.mxu0 0
  %711 = vmatpush1.bf16.msra.mxu0 %v545
  %712 = vmatprep.subr.bf16.mxu0 0
  %713 = vmatpush1.bf16.msra.mxu0 %v546
  %714 = vmatprep.subr.bf16.mxu0 0
  %715 = vmatpush1.bf16.msra.mxu0 %v547
  %716 = vmatprep.subr.bf16.mxu0 0
  %717 = vmatpush1.bf16.msra.mxu0 %v548
  %718 = vmatprep.subr.bf16.mxu0 0
  %719 = vmatpush1.bf16.msra.mxu0 %v549
  %720 = vmatprep.subr.bf16.mxu0 0
  %721 = vmatpush1.bf16.msra.mxu0 %v550
  %722 = vmatprep.subr.bf16.mxu0 0
  %723 = vmatpush1.bf16.msra.mxu0 %v551
  %724 = vmatprep.subr.bf16.mxu0 0
  %725 = vmatpush1.bf16.msra.mxu0 %v552
  %726 = vmatprep.subr.bf16.mxu0 0
  %727 = vmatpush1.bf16.msra.mxu0 %v553
  %728 = vmatprep.subr.bf16.mxu0 0
  %729 = vmatpush1.bf16.msra.mxu0 %v554
  %730 = vmatprep.subr.bf16.mxu0 0
  %731 = vmatpush1.bf16.msra.mxu0 %v555
  %732 = vmatprep.subr.bf16.mxu0 0
  %733 = vmatpush1.bf16.msra.mxu0 %v556
  %734 = vmatprep.mubr.bf16.mxu0 %v240
  %735 = vmatmul.mubr.bf16.gmra.mrb[0].mxu0 %v239
  %v736 = vpop.f32.mrb[0].mxu0
  %v737 = vadd.f32 %v688, %v736
  %v738 = vpop.f32.mrb[0].mxu0
  %v739 = vpop.f32.mrb[0].mxu0
  %v740 = vadd.f32 %v691, %v739
  %v741 = vpop.f32.mrb[0].mxu0
  %742 = vmatprep.mubr.bf16.mxu0 %v248
  %743 = vmatmul.mubr.bf16.gmra.mrb[0].mxu0 %v247
  %v744 = vpop.f32.mrb[0].mxu0
  %v745 = vadd.f32 %v696, %v744
  %v746 = vpop.f32.mrb[0].mxu0
  %v747 = vpop.f32.mrb[0].mxu0
  %v748 = vadd.f32 %v699, %v747
  %v749 = vpop.f32.mrb[0].mxu0
  %750 = vdwg.mxu0
  %751 = vmatprep.subr.bf16.mxu0 0
  %752 = vmatpush1.bf16.msra.mxu0 %v557
  %753 = vmatprep.subr.bf16.mxu0 0
  %754 = vmatpush1.bf16.msra.mxu0 %v558
  %755 = vmatprep.subr.bf16.mxu0 0
  %756 = vmatpush1.bf16.msra.mxu0 %v559
  %757 = vmatprep.subr.bf16.mxu0 0
  %758 = vmatpush1.bf16.msra.mxu0 %v560
  %759 = vmatprep.subr.bf16.mxu0 0
  %760 = vmatpush1.bf16.msra.mxu0 %v561
  %761 = vmatprep.subr.bf16.mxu0 0
  %762 = vmatpush1.bf16.msra.mxu0 %v562
  %763 = vmatprep.subr.bf16.mxu0 0
  %764 = vmatpush1.bf16.msra.mxu0 %v563
  %765 = vmatprep.subr.bf16.mxu0 0
  %766 = vmatpush1.bf16.msra.mxu0 %v564
  %767 = vmatprep.subr.bf16.mxu0 0
  %768 = vmatpush1.bf16.msra.mxu0 %v565
  %769 = vmatprep.subr.bf16.mxu0 0
  %770 = vmatpush1.bf16.msra.mxu0 %v566
  %771 = vmatprep.subr.bf16.mxu0 0
  %772 = vmatpush1.bf16.msra.mxu0 %v567
  %773 = vmatprep.subr.bf16.mxu0 0
  %774 = vmatpush1.bf16.msra.mxu0 %v568
  %775 = vmatprep.subr.bf16.mxu0 0
  %776 = vmatpush1.bf16.msra.mxu0 %v569
  %777 = vmatprep.subr.bf16.mxu0 0
  %778 = vmatpush1.bf16.msra.mxu0 %v570
  %779 = vmatprep.subr.bf16.mxu0 0
  %780 = vmatpush1.bf16.msra.mxu0 %v571
  %781 = vmatprep.subr.bf16.mxu0 0
  %782 = vmatpush1.bf16.msra.mxu0 %v572
  %783 = vmatprep.mubr.bf16.mxu0 %v242
  %784 = vmatmul.mubr.bf16.gmra.mrb[0].mxu0 %v241
  %v785 = vpop.f32.mrb[0].mxu0
  %v786 = vadd.f32 %v737, %v785
  %v787 = vpop.f32.mrb[0].mxu0
  %v788 = vpop.f32.mrb[0].mxu0
  %v789 = vadd.f32 %v740, %v788
  %v790 = vpop.f32.mrb[0].mxu0
  %791 = vmatprep.mubr.bf16.mxu0 %v250
  %792 = vmatmul.mubr.bf16.gmra.mrb[0].mxu0 %v249
  %v793 = vpop.f32.mrb[0].mxu0
  %v794 = vadd.f32 %v745, %v793
  %v795 = vpop.f32.mrb[0].mxu0
  %v796 = vpop.f32.mrb[0].mxu0
  %v797 = vadd.f32 %v748, %v796
  %v798 = vpop.f32.mrb[0].mxu0
  %799 = vdwg.mxu0
  %800 = vmatprep.subr.bf16.mxu0 0
  %801 = vmatpush1.bf16.msra.mxu0 %v573
  %802 = vmatprep.subr.bf16.mxu0 0
  %803 = vmatpush1.bf16.msra.mxu0 %v574
  %804 = vmatprep.subr.bf16.mxu0 0
  %805 = vmatpush1.bf16.msra.mxu0 %v575
  %806 = vmatprep.subr.bf16.mxu0 0
  %807 = vmatpush1.bf16.msra.mxu0 %v576
  %808 = vmatprep.subr.bf16.mxu0 0
  %809 = vmatpush1.bf16.msra.mxu0 %v577
  %810 = vmatprep.subr.bf16.mxu0 0
  %811 = vmatpush1.bf16.msra.mxu0 %v578
  %812 = vmatprep.subr.bf16.mxu0 0
  %813 = vmatpush1.bf16.msra.mxu0 %v579
  %814 = vmatprep.subr.bf16.mxu0 0
  %815 = vmatpush1.bf16.msra.mxu0 %v580
  %816 = vmatprep.subr.bf16.mxu0 0
  %817 = vmatpush1.bf16.msra.mxu0 %v581
  %818 = vmatprep.subr.bf16.mxu0 0
  %819 = vmatpush1.bf16.msra.mxu0 %v582
  %820 = vmatprep.subr.bf16.mxu0 0
  %821 = vmatpush1.bf16.msra.mxu0 %v583
  %822 = vmatprep.subr.bf16.mxu0 0
  %823 = vmatpush1.bf16.msra.mxu0 %v584
  %824 = vmatprep.subr.bf16.mxu0 0
  %825 = vmatpush1.bf16.msra.mxu0 %v585
  %826 = vmatprep.subr.bf16.mxu0 0
  %827 = vmatpush1.bf16.msra.mxu0 %v586
  %828 = vmatprep.subr.bf16.mxu0 0
  %829 = vmatpush1.bf16.msra.mxu0 %v587
  %830 = vmatprep.subr.bf16.mxu0 0
  %831 = vmatpush1.bf16.msra.mxu0 %v588
  %832 = vmatprep.mubr.bf16.mxu0 %v244
  %833 = vmatmul.mubr.bf16.gmra.mrb[0].mxu0 %v243
  %v834 = vpop.f32.mrb[0].mxu0
  %v835 = vadd.f32 %v786, %v834
  %v836 = vpop.f32.mrb[0].mxu0
  %v837 = vpop.f32.mrb[0].mxu0
  %v838 = vadd.f32 %v789, %v837
  %v839 = vpop.f32.mrb[0].mxu0
  %840 = vmatprep.mubr.bf16.mxu0 %v252
  %841 = vmatmul.mubr.bf16.gmra.mrb[0].mxu0 %v251
  %v842 = vpop.f32.mrb[0].mxu0
  %v843 = vadd.f32 %v794, %v842
  %v844 = vpop.f32.mrb[0].mxu0
  %v845 = vpop.f32.mrb[0].mxu0
  %v846 = vadd.f32 %v797, %v845
  %v847 = vpop.f32.mrb[0].mxu0
  %848 = vdwg.mxu0
  %vm849 = vcmask 261120
  %v850 = vsel %vm849, %v835, 0.0
  %851 = vadd.xlane.f32.xlu0 %v850
  %v852 = vpop.xlane.xlu0 %851
  %v853 = vsel %vm849, %v838, 0.0
  %854 = vadd.xlane.f32.xlu0 %v853
  %v855 = vpop.xlane.xlu0 %854
  %v856 = vsel %vm849, %v843, 0.0
  %857 = vadd.xlane.f32.xlu0 %v856
  %v858 = vpop.xlane.xlu0 %857
  %v859 = vsel %vm849, %v846, 0.0
  %860 = vadd.xlane.f32.xlu0 %v859
  %v861 = vpop.xlane.xlu0 %860
  %v862 = vrcp.pop 32.0
  %v863 = vmul.f32 %v852, %v862
  %v864 = vmul.f32 %v855, %v862
  %v865 = vmul.f32 %v858, %v862
  %v866 = vmul.f32 %v861, %v862
  %v867 = vsub.f32 %v835, %v863
  %v868 = vsub.f32 %v838, %v864
  %v869 = vsub.f32 %v843, %v865
  %v870 = vsub.f32 %v846, %v866
  %v871 = vmul.f32 %v867, %v867
  %v872 = vmul.f32 %v868, %v868
  %v873 = vmul.f32 %v869, %v869
  %v874 = vmul.f32 %v870, %v870
  %v875 = vsel %vm849, %v871, 0.0
  %876 = vadd.xlane.f32.xlu0 %v875
  %v877 = vpop.xlane.xlu0 %876
  %v878 = vsel %vm849, %v872, 0.0
  %879 = vadd.xlane.f32.xlu0 %v878
  %v880 = vpop.xlane.xlu0 %879
  %v881 = vsel %vm849, %v873, 0.0
  %882 = vadd.xlane.f32.xlu0 %v881
  %v883 = vpop.xlane.xlu0 %882
  %v884 = vsel %vm849, %v874, 0.0
  %885 = vadd.xlane.f32.xlu0 %v884
  %v886 = vpop.xlane.xlu0 %885
  %v887 = vmul.f32 %v877, %v862
  %v888 = vmul.f32 %v880, %v862
  %v889 = vmul.f32 %v883, %v862
  %v890 = vmul.f32 %v886, %v862
  %v891 = vadd.f32 %v887, 1e-05
  %v892 = vadd.f32 %v888, 1e-05
  %v893 = vadd.f32 %v889, 1e-05
  %v894 = vadd.f32 %v890, 1e-05
  %v895 = vrsqrt.pop %v891
  %v896 = vrsqrt.pop %v892
  %v897 = vrsqrt.pop %v893
  %v898 = vrsqrt.pop %v894
  %v899 = vmul.f32 %v867, %v895
  %v900 = vmul.f32 %v868, %v896
  %v901 = vmul.f32 %v869, %v897
  %v902 = vmul.f32 %v870, %v898
  %v903 = vld [vmem:[%s3] sm:$0xff]
  %v904 = vld [vmem:[%s3 + $0x8] sm:$0xff]
  %v905 = vld [vmem:[%s3 + $0x10] sm:$0xff]
  %v906 = vld [vmem:[%s3 + $0x18] sm:$0xff]
  %908 = vset.pattern.permute.xlu0 0
  %909 = vperm.xlu0 %908, %v903
  %v910 = vpop.permute.xlu0 %909
  %913 = vset.pattern.permute.xlu0 0
  %914 = vperm.xlu0 %913, %v904
  %v915 = vpop.permute.xlu0 %914
  %918 = vset.pattern.permute.xlu0 0
  %919 = vperm.xlu0 %918, %v905
  %v920 = vpop.permute.xlu0 %919
  %923 = vset.pattern.permute.xlu0 0
  %924 = vperm.xlu0 %923, %v906
  %v925 = vpop.permute.xlu0 %924
  %v927 = vmul.f32 %v899, %v910
  %v928 = vmul.f32 %v900, %v915
  %v929 = vmul.f32 %v901, %v920
  %v930 = vmul.f32 %v902, %v925
  %v931 = vld [vmem:[%s4] sm:$0xff]
  %v932 = vld [vmem:[%s4 + $0x8] sm:$0xff]
  %v933 = vld [vmem:[%s4 + $0x10] sm:$0xff]
  %v934 = vld [vmem:[%s4 + $0x18] sm:$0xff]
  %936 = vset.pattern.permute.xlu0 0
  %937 = vperm.xlu0 %936, %v931
  %v938 = vpop.permute.xlu0 %937
  %941 = vset.pattern.permute.xlu0 0
  %942 = vperm.xlu0 %941, %v932
  %v943 = vpop.permute.xlu0 %942
  %946 = vset.pattern.permute.xlu0 0
  %947 = vperm.xlu0 %946, %v933
  %v948 = vpop.permute.xlu0 %947
  %951 = vset.pattern.permute.xlu0 0
  %952 = vperm.xlu0 %951, %v934
  %v953 = vpop.permute.xlu0 %952
  %v955 = vadd.f32 %v927, %v938
  %v956 = vadd.f32 %v928, %v943
  %v957 = vadd.f32 %v929, %v948
  %v958 = vadd.f32 %v930, %v953
  %v959 = vmax.f32 %v955, 0.0
  %v960 = vmax.f32 %v956, 0.0
  %v961 = vmax.f32 %v957, 0.0
  %v962 = vmax.f32 %v958, 0.0
  %v963 = vpack.c.bf16 %v960, %v959
  %v964 = vpack.c.bf16 %v962, %v961
  %v967 = vunpack.c.l.b16 %v963
  %v968 = vunpack.c.h.b16 %v963
  %v969 = vunpack.c.l.b16 %v964
  %v970 = vunpack.c.h.b16 %v964
  %v971 = vpack.c.b16 %v967, %v967
  %v972 = vpack.c.b16 %v968, %v968
  %v973 = vpack.c.b16 %v969, %v969
  %v974 = vpack.c.b16 %v970, %v970
  %vm979 = vcmask 257024
  %980 = vst.msk [vmem:[%s5] sm:$0xf] %vm979, %v971
  %981 = vst.msk [vmem:[%s5 + $0x4] sm:$0xf] %vm979, %v972
  %982 = vst.msk [vmem:[%s5 + $0x8] sm:$0xf] %vm979, %v973
  %983 = vst.msk [vmem:[%s5 + $0xc] sm:$0xf] %vm979, %v974
  // Predicated region
  $region22: #{netG_v2_forward.6} parent=0 // pred_check
    _
  $region23: #{netG_v2_forward.6} parent=0 // pred_check_branch
    %985 = sbr.rel (0) target = $region25
  $region24: #{netG_v2_forward.6} parent=0 // pred_region
    _
  $region25: #{netG_v2_forward.6} parent=0 // pred_fallthru
    _
  // Predicated region
  $region26: #{netG_v2_forward.6} parent=0 // pred_check
    _
  $region27: #{netG_v2_forward.6} parent=0 // pred_check_branch
    %987 = sbr.rel (0) target = $region29
  $region28: #{netG_v2_forward.6} parent=0 // pred_region
    _
  $region29: #{netG_v2_forward.6} parent=0 // pred_fallthru
    _

// kernel: netG_v2_forward.7
$region0: #{netG_v2_forward.7}
  #allocation0 [shape = 'u32[]', space=smem, size = 0x4, offset = 0x4, fixed_abs, tag = 'smem constant byte address 0x4 - core index']
  #allocation1 [shape = 'u32[144,128]{1,0:T(1,128)}', space=vmem, size = 0x12000, scoped, tag = 'internal scratch']
  %s0 = inlined_call_operand.vmem [shape: bf16[16,512], index: 0, kind: input, shape index: {}]
  %s1 = inlined_call_operand.vmem [shape: bf16[512,128], index: 1, kind: input, shape index: {}]
  %s2 = inlined_call_operand.vmem [shape: f32[16,1], index: 2, kind: input, shape index: {}]
  %s3 = inlined_call_operand.vmem [shape: f32[16,1], index: 3, kind: input, shape index: {}]
  %s4 = inlined_call_operand.vmem [shape: f32[16,1], index: 4, kind: input, shape index: {}]
  %s5 = inlined_call_operand.vmem [shape: bf16[16,128], index: 5, kind: output, shape index: {}]
  %s6 = sld [smem:[#allocation0]]
  $region30: #{netG_v2_forward.7} parent=0
    _
  %s8 = ssub.s32 1, %s6
  %s9 = scalar_select 0, %s8, %s6
  // Predicated region
  $region2: #{netG_v2_forward.7} parent=0 // pred_check
    _
  $region3: #{netG_v2_forward.7} parent=0 // pred_check_branch
    %11 = sbr.rel (0) target = $region5
  $region4: #{netG_v2_forward.7} parent=0 // pred_region
    _
  $region5: #{netG_v2_forward.7} parent=0 // pred_fallthru
    _
  // Predicated region
  $region6: #{netG_v2_forward.7} parent=0 // pred_check
    _
  $region7: #{netG_v2_forward.7} parent=0 // pred_check_branch
    %13 = sbr.rel (0) target = $region9
  $region8: #{netG_v2_forward.7} parent=0 // pred_region
    _
  $region9: #{netG_v2_forward.7} parent=0 // pred_fallthru
    _
  // Predicated region
  $region10: #{netG_v2_forward.7} parent=0 // pred_check
    _
  $region11: #{netG_v2_forward.7} parent=0 // pred_check_branch
    %15 = sbr.rel (0) target = $region13
  $region12: #{netG_v2_forward.7} parent=0 // pred_region
    _
  $region13: #{netG_v2_forward.7} parent=0 // pred_fallthru
    _
  // Predicated region
  $region14: #{netG_v2_forward.7} parent=0 // pred_check
    _
  $region15: #{netG_v2_forward.7} parent=0 // pred_check_branch
    %17 = sbr.rel (0) target = $region17
  $region16: #{netG_v2_forward.7} parent=0 // pred_region
    _
  $region17: #{netG_v2_forward.7} parent=0 // pred_fallthru
    _
  // Predicated region
  $region18: #{netG_v2_forward.7} parent=0 // pred_check
    _
  $region19: #{netG_v2_forward.7} parent=0 // pred_check_branch
    %19 = sbr.rel (0) target = $region21
  $region20: #{netG_v2_forward.7} parent=0 // pred_region
    _
  $region21: #{netG_v2_forward.7} parent=0 // pred_fallthru
    _
  %v21 = vld [vmem:[%s0] sm:$0xff]
  %v22 = vld [vmem:[%s0 + $0x8] sm:$0xff]
  %v23 = vld [vmem:[%s0 + $0x10] sm:$0xff]
  %v24 = vld [vmem:[%s0 + $0x18] sm:$0xff]
  %v25 = vld [vmem:[%s1] sm:$0xf]
  %v26 = vld [vmem:[%s1 + $0x4] sm:$0xf]
  %v27 = vld [vmem:[%s1 + $0x8] sm:$0xf]
  %v28 = vld [vmem:[%s1 + $0xc] sm:$0xf]
  %v29 = vld [vmem:[%s1 + $0x10] sm:$0xf]
  %v30 = vld [vmem:[%s1 + $0x14] sm:$0xf]
  %v31 = vld [vmem:[%s1 + $0x18] sm:$0xf]
  %v32 = vld [vmem:[%s1 + $0x1c] sm:$0xf]
  %v33 = vld [vmem:[%s1 + $0x20] sm:$0xf]
  %v34 = vld [vmem:[%s1 + $0x24] sm:$0xf]
  %v35 = vld [vmem:[%s1 + $0x28] sm:$0xf]
  %v36 = vld [vmem:[%s1 + $0x2c] sm:$0xf]
  %v37 = vld [vmem:[%s1 + $0x30] sm:$0xf]
  %v38 = vld [vmem:[%s1 + $0x34] sm:$0xf]
  %v39 = vld [vmem:[%s1 + $0x38] sm:$0xf]
  %v40 = vld [vmem:[%s1 + $0x3c] sm:$0xf]
  %v41 = vld [vmem:[%s1 + $0x40] sm:$0xf]
  %v42 = vld [vmem:[%s1 + $0x44] sm:$0xf]
  %v43 = vld [vmem:[%s1 + $0x48] sm:$0xf]
  %v44 = vld [vmem:[%s1 + $0x4c] sm:$0xf]
  %v45 = vld [vmem:[%s1 + $0x50] sm:$0xf]
  %v46 = vld [vmem:[%s1 + $0x54] sm:$0xf]
  %v47 = vld [vmem:[%s1 + $0x58] sm:$0xf]
  %v48 = vld [vmem:[%s1 + $0x5c] sm:$0xf]
  %v49 = vld [vmem:[%s1 + $0x60] sm:$0xf]
  %v50 = vld [vmem:[%s1 + $0x64] sm:$0xf]
  %v51 = vld [vmem:[%s1 + $0x68] sm:$0xf]
  %v52 = vld [vmem:[%s1 + $0x6c] sm:$0xf]
  %v53 = vld [vmem:[%s1 + $0x70] sm:$0xf]
  %v54 = vld [vmem:[%s1 + $0x74] sm:$0xf]
  %v55 = vld [vmem:[%s1 + $0x78] sm:$0xf]
  %v56 = vld [vmem:[%s1 + $0x7c] sm:$0xf]
  %v57 = vld [vmem:[%s1 + $0x80] sm:$0xf]
  %v58 = vld [vmem:[%s1 + $0x84] sm:$0xf]
  %v59 = vld [vmem:[%s1 + $0x88] sm:$0xf]
  %v60 = vld [vmem:[%s1 + $0x8c] sm:$0xf]
  %v61 = vld [vmem:[%s1 + $0x90] sm:$0xf]
  %v62 = vld [vmem:[%s1 + $0x94] sm:$0xf]
  %v63 = vld [vmem:[%s1 + $0x98] sm:$0xf]
  %v64 = vld [vmem:[%s1 + $0x9c] sm:$0xf]
  %v65 = vld [vmem:[%s1 + $0xa0] sm:$0xf]
  %v66 = vld [vmem:[%s1 + $0xa4] sm:$0xf]
  %v67 = vld [vmem:[%s1 + $0xa8] sm:$0xf]
  %v68 = vld [vmem:[%s1 + $0xac] sm:$0xf]
  %v69 = vld [vmem:[%s1 + $0xb0] sm:$0xf]
  %v70 = vld [vmem:[%s1 + $0xb4] sm:$0xf]
  %v71 = vld [vmem:[%s1 + $0xb8] sm:$0xf]
  %v72 = vld [vmem:[%s1 + $0xbc] sm:$0xf]
  %v73 = vld [vmem:[%s1 + $0xc0] sm:$0xf]
  %v74 = vld [vmem:[%s1 + $0xc4] sm:$0xf]
  %v75 = vld [vmem:[%s1 + $0xc8] sm:$0xf]
  %v76 = vld [vmem:[%s1 + $0xcc] sm:$0xf]
  %v77 = vld [vmem:[%s1 + $0xd0] sm:$0xf]
  %v78 = vld [vmem:[%s1 + $0xd4] sm:$0xf]
  %v79 = vld [vmem:[%s1 + $0xd8] sm:$0xf]
  %v80 = vld [vmem:[%s1 + $0xdc] sm:$0xf]
  %v81 = vld [vmem:[%s1 + $0xe0] sm:$0xf]
  %v82 = vld [vmem:[%s1 + $0xe4] sm:$0xf]
  %v83 = vld [vmem:[%s1 + $0xe8] sm:$0xf]
  %v84 = vld [vmem:[%s1 + $0xec] sm:$0xf]
  %v85 = vld [vmem:[%s1 + $0xf0] sm:$0xf]
  %v86 = vld [vmem:[%s1 + $0xf4] sm:$0xf]
  %v87 = vld [vmem:[%s1 + $0xf8] sm:$0xf]
  %v88 = vld [vmem:[%s1 + $0xfc] sm:$0xf]
  %v89 = vld [vmem:[%s2] sm:$0xff]
  %v90 = vld [vmem:[%s2 + $0x8] sm:$0xff]
  %92 = vset.pattern.permute.xlu0 0
  %93 = vperm.xlu0 %92, %v89
  %v94 = vpop.permute.xlu0 %93
  %97 = vset.pattern.permute.xlu0 0
  %98 = vperm.xlu0 %97, %v90
  %v99 = vpop.permute.xlu0 %98
  %v105 = vunpack.c.l.b16 %v21
  %v106 = vunpack.c.h.b16 %v21
  %v107 = vunpack.c.l.b16 %v22
  %v108 = vunpack.c.h.b16 %v22
  %v109 = vunpack.c.l.b16 %v23
  %v110 = vunpack.c.h.b16 %v23
  %v111 = vunpack.c.l.b16 %v24
  %v112 = vunpack.c.h.b16 %v24
  %v113 = vpack.c.b16 %v109, %v105
  %v114 = vpack.c.b16 %v110, %v106
  %v115 = vpack.c.b16 %v111, %v107
  %v116 = vpack.c.b16 %v112, %v108
  %v185 = vunpack.c.l.b16 %v25
  %v186 = vunpack.c.l.b16 %v26
  %v187 = vunpack.c.l.b16 %v27
  %v188 = vunpack.c.l.b16 %v28
  %v189 = vunpack.c.l.b16 %v29
  %v190 = vunpack.c.l.b16 %v30
  %v191 = vunpack.c.l.b16 %v31
  %v192 = vunpack.c.l.b16 %v32
  %v193 = vunpack.c.l.b16 %v33
  %v194 = vunpack.c.l.b16 %v34
  %v195 = vunpack.c.l.b16 %v35
  %v196 = vunpack.c.l.b16 %v36
  %v197 = vunpack.c.l.b16 %v37
  %v198 = vunpack.c.l.b16 %v38
  %v199 = vunpack.c.l.b16 %v39
  %v200 = vunpack.c.l.b16 %v40
  %v201 = vunpack.c.l.b16 %v41
  %v202 = vunpack.c.l.b16 %v42
  %v203 = vunpack.c.l.b16 %v43
  %v204 = vunpack.c.l.b16 %v44
  %v205 = vunpack.c.l.b16 %v45
  %v206 = vunpack.c.l.b16 %v46
  %v207 = vunpack.c.l.b16 %v47
  %v208 = vunpack.c.l.b16 %v48
  %v209 = vunpack.c.l.b16 %v49
  %v210 = vunpack.c.l.b16 %v50
  %v211 = vunpack.c.l.b16 %v51
  %v212 = vunpack.c.l.b16 %v52
  %v213 = vunpack.c.l.b16 %v53
  %v214 = vunpack.c.l.b16 %v54
  %v215 = vunpack.c.l.b16 %v55
  %v216 = vunpack.c.l.b16 %v56
  %v217 = vunpack.c.l.b16 %v57
  %v218 = vunpack.c.l.b16 %v58
  %v219 = vunpack.c.l.b16 %v59
  %v220 = vunpack.c.l.b16 %v60
  %v221 = vunpack.c.l.b16 %v61
  %v222 = vunpack.c.l.b16 %v62
  %v223 = vunpack.c.l.b16 %v63
  %v224 = vunpack.c.l.b16 %v64
  %v225 = vunpack.c.l.b16 %v65
  %v226 = vunpack.c.l.b16 %v66
  %v227 = vunpack.c.l.b16 %v67
  %v228 = vunpack.c.l.b16 %v68
  %v229 = vunpack.c.l.b16 %v69
  %v230 = vunpack.c.l.b16 %v70
  %v231 = vunpack.c.l.b16 %v71
  %v232 = vunpack.c.l.b16 %v72
  %v233 = vunpack.c.l.b16 %v73
  %v234 = vunpack.c.l.b16 %v74
  %v235 = vunpack.c.l.b16 %v75
  %v236 = vunpack.c.l.b16 %v76
  %v237 = vunpack.c.l.b16 %v77
  %v238 = vunpack.c.l.b16 %v78
  %v239 = vunpack.c.l.b16 %v79
  %v240 = vunpack.c.l.b16 %v80
  %v241 = vunpack.c.l.b16 %v81
  %v242 = vunpack.c.l.b16 %v82
  %v243 = vunpack.c.l.b16 %v83
  %v244 = vunpack.c.l.b16 %v84
  %v245 = vunpack.c.l.b16 %v85
  %v246 = vunpack.c.l.b16 %v86
  %v247 = vunpack.c.l.b16 %v87
  %v248 = vunpack.c.l.b16 %v88
  %v249 = vpack.c.b16 %v186, %v185
  %v250 = vpack.c.b16 %v188, %v187
  %v251 = vpack.c.b16 %v190, %v189
  %v252 = vpack.c.b16 %v192, %v191
  %v253 = vpack.c.b16 %v194, %v193
  %v254 = vpack.c.b16 %v196, %v195
  %v255 = vpack.c.b16 %v198, %v197
  %v256 = vpack.c.b16 %v200, %v199
  %v257 = vpack.c.b16 %v202, %v201
  %v258 = vpack.c.b16 %v204, %v203
  %v259 = vpack.c.b16 %v206, %v205
  %v260 = vpack.c.b16 %v208, %v207
  %v261 = vpack.c.b16 %v210, %v209
  %v262 = vpack.c.b16 %v212, %v211
  %v263 = vpack.c.b16 %v214, %v213
  %v264 = vpack.c.b16 %v216, %v215
  %v265 = vpack.c.b16 %v218, %v217
  %v266 = vpack.c.b16 %v220, %v219
  %v267 = vpack.c.b16 %v222, %v221
  %v268 = vpack.c.b16 %v224, %v223
  %v269 = vpack.c.b16 %v226, %v225
  %v270 = vpack.c.b16 %v228, %v227
  %v271 = vpack.c.b16 %v230, %v229
  %v272 = vpack.c.b16 %v232, %v231
  %v273 = vpack.c.b16 %v234, %v233
  %v274 = vpack.c.b16 %v236, %v235
  %v275 = vpack.c.b16 %v238, %v237
  %v276 = vpack.c.b16 %v240, %v239
  %v277 = vpack.c.b16 %v242, %v241
  %v278 = vpack.c.b16 %v244, %v243
  %v279 = vpack.c.b16 %v246, %v245
  %v280 = vpack.c.b16 %v248, %v247
  %313 = vmatprep.subr.bf16.mxu0 0
  %314 = vmatpush1.bf16.msra.mxu0 %v249
  %315 = vmatprep.subr.bf16.mxu0 0
  %316 = vmatpush1.bf16.msra.mxu0 %v250
  %317 = vmatprep.subr.bf16.mxu0 0
  %318 = vmatpush1.bf16.msra.mxu0 %v251
  %319 = vmatprep.subr.bf16.mxu0 0
  %320 = vmatpush1.bf16.msra.mxu0 %v252
  %321 = vmatprep.subr.bf16.mxu0 0
  %322 = vmatpush1.bf16.msra.mxu0 %v253
  %323 = vmatprep.subr.bf16.mxu0 0
  %324 = vmatpush1.bf16.msra.mxu0 %v254
  %325 = vmatprep.subr.bf16.mxu0 0
  %326 = vmatpush1.bf16.msra.mxu0 %v255
  %327 = vmatprep.subr.bf16.mxu0 0
  %328 = vmatpush1.bf16.msra.mxu0 %v256
  %329 = vmatprep.subr.bf16.mxu0 0
  %330 = vmatpush1.bf16.msra.mxu0 %v257
  %331 = vmatprep.subr.bf16.mxu0 0
  %332 = vmatpush1.bf16.msra.mxu0 %v258
  %333 = vmatprep.subr.bf16.mxu0 0
  %334 = vmatpush1.bf16.msra.mxu0 %v259
  %335 = vmatprep.subr.bf16.mxu0 0
  %336 = vmatpush1.bf16.msra.mxu0 %v260
  %337 = vmatprep.subr.bf16.mxu0 0
  %338 = vmatpush1.bf16.msra.mxu0 %v261
  %339 = vmatprep.subr.bf16.mxu0 0
  %340 = vmatpush1.bf16.msra.mxu0 %v262
  %341 = vmatprep.subr.bf16.mxu0 0
  %342 = vmatpush1.bf16.msra.mxu0 %v263
  %343 = vmatprep.subr.bf16.mxu0 0
  %344 = vmatpush1.bf16.msra.mxu0 %v264
  %345 = vmatprep.mubr.bf16.mxu0 %v114
  %346 = vmatmul.mubr.bf16.gmra.mrb[0].mxu0 %v113
  %v347 = vpop.f32.mrb[0].mxu0
  %v348 = vadd.f32 %v94, %v347
  %v349 = vpop.f32.mrb[0].mxu0
  %v350 = vpop.f32.mrb[0].mxu0
  %v351 = vadd.f32 %v99, %v350
  %v352 = vpop.f32.mrb[0].mxu0
  %353 = vdwg.mxu0
  %354 = vmatprep.subr.bf16.mxu0 0
  %355 = vmatpush1.bf16.msra.mxu0 %v265
  %356 = vmatprep.subr.bf16.mxu0 0
  %357 = vmatpush1.bf16.msra.mxu0 %v266
  %358 = vmatprep.subr.bf16.mxu0 0
  %359 = vmatpush1.bf16.msra.mxu0 %v267
  %360 = vmatprep.subr.bf16.mxu0 0
  %361 = vmatpush1.bf16.msra.mxu0 %v268
  %362 = vmatprep.subr.bf16.mxu0 0
  %363 = vmatpush1.bf16.msra.mxu0 %v269
  %364 = vmatprep.subr.bf16.mxu0 0
  %365 = vmatpush1.bf16.msra.mxu0 %v270
  %366 = vmatprep.subr.bf16.mxu0 0
  %367 = vmatpush1.bf16.msra.mxu0 %v271
  %368 = vmatprep.subr.bf16.mxu0 0
  %369 = vmatpush1.bf16.msra.mxu0 %v272
  %370 = vmatprep.subr.bf16.mxu0 0
  %371 = vmatpush1.bf16.msra.mxu0 %v273
  %372 = vmatprep.subr.bf16.mxu0 0
  %373 = vmatpush1.bf16.msra.mxu0 %v274
  %374 = vmatprep.subr.bf16.mxu0 0
  %375 = vmatpush1.bf16.msra.mxu0 %v275
  %376 = vmatprep.subr.bf16.mxu0 0
  %377 = vmatpush1.bf16.msra.mxu0 %v276
  %378 = vmatprep.subr.bf16.mxu0 0
  %379 = vmatpush1.bf16.msra.mxu0 %v277
  %380 = vmatprep.subr.bf16.mxu0 0
  %381 = vmatpush1.bf16.msra.mxu0 %v278
  %382 = vmatprep.subr.bf16.mxu0 0
  %383 = vmatpush1.bf16.msra.mxu0 %v279
  %384 = vmatprep.subr.bf16.mxu0 0
  %385 = vmatpush1.bf16.msra.mxu0 %v280
  %386 = vmatprep.mubr.bf16.mxu0 %v116
  %387 = vmatmul.mubr.bf16.gmra.mrb[0].mxu0 %v115
  %v388 = vpop.f32.mrb[0].mxu0
  %v389 = vadd.f32 %v348, %v388
  %v390 = vpop.f32.mrb[0].mxu0
  %v391 = vpop.f32.mrb[0].mxu0
  %v392 = vadd.f32 %v351, %v391
  %v393 = vpop.f32.mrb[0].mxu0
  %394 = vdwg.mxu0
  %395 = vadd.xlane.f32.xlu0 %v389
  %v396 = vpop.xlane.xlu0 %395
  %397 = vadd.xlane.f32.xlu0 %v392
  %v398 = vpop.xlane.xlu0 %397
  %v399 = vrcp.pop 128.0
  %v400 = vmul.f32 %v396, %v399
  %v401 = vmul.f32 %v398, %v399
  %v402 = vsub.f32 %v389, %v400
  %v403 = vsub.f32 %v392, %v401
  %v404 = vmul.f32 %v402, %v402
  %v405 = vmul.f32 %v403, %v403
  %406 = vadd.xlane.f32.xlu0 %v404
  %v407 = vpop.xlane.xlu0 %406
  %408 = vadd.xlane.f32.xlu0 %v405
  %v409 = vpop.xlane.xlu0 %408
  %v410 = vmul.f32 %v407, %v399
  %v411 = vmul.f32 %v409, %v399
  %v412 = vadd.f32 %v410, 1e-05
  %v413 = vadd.f32 %v411, 1e-05
  %v414 = vrsqrt.pop %v412
  %v415 = vrsqrt.pop %v413
  %v416 = vmul.f32 %v402, %v414
  %v417 = vmul.f32 %v403, %v415
  %v418 = vld [vmem:[%s3] sm:$0xff]
  %v419 = vld [vmem:[%s3 + $0x8] sm:$0xff]
  %421 = vset.pattern.permute.xlu0 0
  %422 = vperm.xlu0 %421, %v418
  %v423 = vpop.permute.xlu0 %422
  %426 = vset.pattern.permute.xlu0 0
  %427 = vperm.xlu0 %426, %v419
  %v428 = vpop.permute.xlu0 %427
  %v430 = vmul.f32 %v416, %v423
  %v431 = vmul.f32 %v417, %v428
  %v432 = vld [vmem:[%s4] sm:$0xff]
  %v433 = vld [vmem:[%s4 + $0x8] sm:$0xff]
  %435 = vset.pattern.permute.xlu0 0
  %436 = vperm.xlu0 %435, %v432
  %v437 = vpop.permute.xlu0 %436
  %440 = vset.pattern.permute.xlu0 0
  %441 = vperm.xlu0 %440, %v433
  %v442 = vpop.permute.xlu0 %441
  %v444 = vadd.f32 %v430, %v437
  %v445 = vadd.f32 %v431, %v442
  %v446 = vmax.f32 %v444, 0.0
  %v447 = vmax.f32 %v445, 0.0
  %v448 = vpack.c.bf16 %v447, %v446
  %v450 = vunpack.c.l.b16 %v448
  %v451 = vunpack.c.h.b16 %v448
  %v452 = vpack.c.b16 %v450, %v450
  %v453 = vpack.c.b16 %v451, %v451
  %456 = vst [vmem:[%s5] sm:$0xf] %v452
  %457 = vst [vmem:[%s5 + $0x4] sm:$0xf] %v453
  // Predicated region
  $region22: #{netG_v2_forward.7} parent=0 // pred_check
    _
  $region23: #{netG_v2_forward.7} parent=0 // pred_check_branch
    %459 = sbr.rel (0) target = $region25
  $region24: #{netG_v2_forward.7} parent=0 // pred_region
    _
  $region25: #{netG_v2_forward.7} parent=0 // pred_fallthru
    _
  // Predicated region
  $region26: #{netG_v2_forward.7} parent=0 // pred_check
    _
  $region27: #{netG_v2_forward.7} parent=0 // pred_check_branch
    %461 = sbr.rel (0) target = $region29
  $region28: #{netG_v2_forward.7} parent=0 // pred_region
    _
  $region29: #{netG_v2_forward.7} parent=0 // pred_fallthru
    _

// kernel: netG_v2_forward.8
$region0: #{netG_v2_forward.8}
  #allocation0 [shape = 'u32[]', space=smem, size = 0x4, offset = 0x4, fixed_abs, tag = 'smem constant byte address 0x4 - core index']
  #allocation1 [shape = 'u32[144,128]{1,0:T(1,128)}', space=vmem, size = 0x12000, scoped, tag = 'internal scratch']
  %s0 = inlined_call_operand.vmem [shape: bf16[8,256], index: 0, kind: input, shape index: {}]
  %s1 = inlined_call_operand.vmem [shape: bf16[256,512], index: 1, kind: input, shape index: {}]
  %s2 = inlined_call_operand.vmem [shape: f32[8,1], index: 2, kind: input, shape index: {}]
  %s3 = inlined_call_operand.vmem [shape: f32[8,1], index: 3, kind: input, shape index: {}]
  %s4 = inlined_call_operand.vmem [shape: f32[8,1], index: 4, kind: input, shape index: {}]
  %s5 = inlined_call_operand.vmem [shape: bf16[8,512], index: 5, kind: output, shape index: {}]
  %s6 = sld [smem:[#allocation0]]
  $region30: #{netG_v2_forward.8} parent=0
    _
  %s8 = ssub.s32 1, %s6
  %s9 = scalar_select 0, %s8, %s6
  // Predicated region
  $region2: #{netG_v2_forward.8} parent=0 // pred_check
    _
  $region3: #{netG_v2_forward.8} parent=0 // pred_check_branch
    %11 = sbr.rel (0) target = $region5
  $region4: #{netG_v2_forward.8} parent=0 // pred_region
    _
  $region5: #{netG_v2_forward.8} parent=0 // pred_fallthru
    _
  // Predicated region
  $region6: #{netG_v2_forward.8} parent=0 // pred_check
    _
  $region7: #{netG_v2_forward.8} parent=0 // pred_check_branch
    %13 = sbr.rel (0) target = $region9
  $region8: #{netG_v2_forward.8} parent=0 // pred_region
    _
  $region9: #{netG_v2_forward.8} parent=0 // pred_fallthru
    _
  // Predicated region
  $region10: #{netG_v2_forward.8} parent=0 // pred_check
    _
  $region11: #{netG_v2_forward.8} parent=0 // pred_check_branch
    %15 = sbr.rel (0) target = $region13
  $region12: #{netG_v2_forward.8} parent=0 // pred_region
    _
  $region13: #{netG_v2_forward.8} parent=0 // pred_fallthru
    _
  // Predicated region
  $region14: #{netG_v2_forward.8} parent=0 // pred_check
    _
  $region15: #{netG_v2_forward.8} parent=0 // pred_check_branch
    %17 = sbr.rel (0) target = $region17
  $region16: #{netG_v2_forward.8} parent=0 // pred_region
    _
  $region17: #{netG_v2_forward.8} parent=0 // pred_fallthru
    _
  // Predicated region
  $region18: #{netG_v2_forward.8} parent=0 // pred_check
    _
  $region19: #{netG_v2_forward.8} parent=0 // pred_check_branch
    %19 = sbr.rel (0) target = $region21
  $region20: #{netG_v2_forward.8} parent=0 // pred_region
    _
  $region21: #{netG_v2_forward.8} parent=0 // pred_fallthru
    _
  %v20 = vld [vmem:[%s0] sm:$0xff]
  %v21 = vld [vmem:[%s1] sm:$0xff]
  %v22 = vld [vmem:[%s1 + $0x8] sm:$0xff]
  %v23 = vld [vmem:[%s1 + $0x10] sm:$0xff]
  %v24 = vld [vmem:[%s1 + $0x18] sm:$0xff]
  %v25 = vld [vmem:[%s1 + $0x20] sm:$0xff]
  %v26 = vld [vmem:[%s1 + $0x28] sm:$0xff]
  %v27 = vld [vmem:[%s1 + $0x30] sm:$0xff]
  %v28 = vld [vmem:[%s1 + $0x38] sm:$0xff]
  %v29 = vld [vmem:[%s1 + $0x40] sm:$0xff]
  %v30 = vld [vmem:[%s1 + $0x48] sm:$0xff]
  %v31 = vld [vmem:[%s1 + $0x50] sm:$0xff]
  %v32 = vld [vmem:[%s1 + $0x58] sm:$0xff]
  %v33 = vld [vmem:[%s1 + $0x60] sm:$0xff]
  %v34 = vld [vmem:[%s1 + $0x68] sm:$0xff]
  %v35 = vld [vmem:[%s1 + $0x70] sm:$0xff]
  %v36 = vld [vmem:[%s1 + $0x78] sm:$0xff]
  %v37 = vld [vmem:[%s1 + $0x80] sm:$0xff]
  %v38 = vld [vmem:[%s1 + $0x88] sm:$0xff]
  %v39 = vld [vmem:[%s1 + $0x90] sm:$0xff]
  %v40 = vld [vmem:[%s1 + $0x98] sm:$0xff]
  %v41 = vld [vmem:[%s1 + $0xa0] sm:$0xff]
  %v42 = vld [vmem:[%s1 + $0xa8] sm:$0xff]
  %v43 = vld [vmem:[%s1 + $0xb0] sm:$0xff]
  %v44 = vld [vmem:[%s1 + $0xb8] sm:$0xff]
  %v45 = vld [vmem:[%s1 + $0xc0] sm:$0xff]
  %v46 = vld [vmem:[%s1 + $0xc8] sm:$0xff]
  %v47 = vld [vmem:[%s1 + $0xd0] sm:$0xff]
  %v48 = vld [vmem:[%s1 + $0xd8] sm:$0xff]
  %v49 = vld [vmem:[%s1 + $0xe0] sm:$0xff]
  %v50 = vld [vmem:[%s1 + $0xe8] sm:$0xff]
  %v51 = vld [vmem:[%s1 + $0xf0] sm:$0xff]
  %v52 = vld [vmem:[%s1 + $0xf8] sm:$0xff]
  %v53 = vld [vmem:[%s1 + $0x100] sm:$0xff]
  %v54 = vld [vmem:[%s1 + $0x108] sm:$0xff]
  %v55 = vld [vmem:[%s1 + $0x110] sm:$0xff]
  %v56 = vld [vmem:[%s1 + $0x118] sm:$0xff]
  %v57 = vld [vmem:[%s1 + $0x120] sm:$0xff]
  %v58 = vld [vmem:[%s1 + $0x128] sm:$0xff]
  %v59 = vld [vmem:[%s1 + $0x130] sm:$0xff]
  %v60 = vld [vmem:[%s1 + $0x138] sm:$0xff]
  %v61 = vld [vmem:[%s1 + $0x140] sm:$0xff]
  %v62 = vld [vmem:[%s1 + $0x148] sm:$0xff]
  %v63 = vld [vmem:[%s1 + $0x150] sm:$0xff]
  %v64 = vld [vmem:[%s1 + $0x158] sm:$0xff]
  %v65 = vld [vmem:[%s1 + $0x160] sm:$0xff]
  %v66 = vld [vmem:[%s1 + $0x168] sm:$0xff]
  %v67 = vld [vmem:[%s1 + $0x170] sm:$0xff]
  %v68 = vld [vmem:[%s1 + $0x178] sm:$0xff]
  %v69 = vld [vmem:[%s1 + $0x180] sm:$0xff]
  %v70 = vld [vmem:[%s1 + $0x188] sm:$0xff]
  %v71 = vld [vmem:[%s1 + $0x190] sm:$0xff]
  %v72 = vld [vmem:[%s1 + $0x198] sm:$0xff]
  %v73 = vld [vmem:[%s1 + $0x1a0] sm:$0xff]
  %v74 = vld [vmem:[%s1 + $0x1a8] sm:$0xff]
  %v75 = vld [vmem:[%s1 + $0x1b0] sm:$0xff]
  %v76 = vld [vmem:[%s1 + $0x1b8] sm:$0xff]
  %v77 = vld [vmem:[%s1 + $0x1c0] sm:$0xff]
  %v78 = vld [vmem:[%s1 + $0x1c8] sm:$0xff]
  %v79 = vld [vmem:[%s1 + $0x1d0] sm:$0xff]
  %v80 = vld [vmem:[%s1 + $0x1d8] sm:$0xff]
  %v81 = vld [vmem:[%s1 + $0x1e0] sm:$0xff]
  %v82 = vld [vmem:[%s1 + $0x1e8] sm:$0xff]
  %v83 = vld [vmem:[%s1 + $0x1f0] sm:$0xff]
  %v84 = vld [vmem:[%s1 + $0x1f8] sm:$0xff]
  %v85 = vld [vmem:[%s2] sm:$0xff]
  %87 = vset.pattern.permute.xlu0 0
  %88 = vperm.xlu0 %87, %v85
  %v89 = vpop.permute.xlu0 %88
  %v92 = vunpack.c.l.b16 %v20
  %v93 = vunpack.c.h.b16 %v20
  %v94 = vpack.c.b16 %v92, %v92
  %v95 = vpack.c.b16 %v93, %v93
  %v162 = vunpack.c.l.b16 %v21
  %v163 = vunpack.c.h.b16 %v21
  %v164 = vunpack.c.l.b16 %v22
  %v165 = vunpack.c.h.b16 %v22
  %v166 = vunpack.c.l.b16 %v23
  %v167 = vunpack.c.h.b16 %v23
  %v168 = vunpack.c.l.b16 %v24
  %v169 = vunpack.c.h.b16 %v24
  %v170 = vunpack.c.l.b16 %v25
  %v171 = vunpack.c.h.b16 %v25
  %v172 = vunpack.c.l.b16 %v26
  %v173 = vunpack.c.h.b16 %v26
  %v174 = vunpack.c.l.b16 %v27
  %v175 = vunpack.c.h.b16 %v27
  %v176 = vunpack.c.l.b16 %v28
  %v177 = vunpack.c.h.b16 %v28
  %v178 = vunpack.c.l.b16 %v29
  %v179 = vunpack.c.h.b16 %v29
  %v180 = vunpack.c.l.b16 %v30
  %v181 = vunpack.c.h.b16 %v30
  %v182 = vunpack.c.l.b16 %v31
  %v183 = vunpack.c.h.b16 %v31
  %v184 = vunpack.c.l.b16 %v32
  %v185 = vunpack.c.h.b16 %v32
  %v186 = vunpack.c.l.b16 %v33
  %v187 = vunpack.c.h.b16 %v33
  %v188 = vunpack.c.l.b16 %v34
  %v189 = vunpack.c.h.b16 %v34
  %v190 = vunpack.c.l.b16 %v35
  %v191 = vunpack.c.h.b16 %v35
  %v192 = vunpack.c.l.b16 %v36
  %v193 = vunpack.c.h.b16 %v36
  %v194 = vunpack.c.l.b16 %v37
  %v195 = vunpack.c.h.b16 %v37
  %v196 = vunpack.c.l.b16 %v38
  %v197 = vunpack.c.h.b16 %v38
  %v198 = vunpack.c.l.b16 %v39
  %v199 = vunpack.c.h.b16 %v39
  %v200 = vunpack.c.l.b16 %v40
  %v201 = vunpack.c.h.b16 %v40
  %v202 = vunpack.c.l.b16 %v41
  %v203 = vunpack.c.h.b16 %v41
  %v204 = vunpack.c.l.b16 %v42
  %v205 = vunpack.c.h.b16 %v42
  %v206 = vunpack.c.l.b16 %v43
  %v207 = vunpack.c.h.b16 %v43
  %v208 = vunpack.c.l.b16 %v44
  %v209 = vunpack.c.h.b16 %v44
  %v210 = vunpack.c.l.b16 %v45
  %v211 = vunpack.c.h.b16 %v45
  %v212 = vunpack.c.l.b16 %v46
  %v213 = vunpack.c.h.b16 %v46
  %v214 = vunpack.c.l.b16 %v47
  %v215 = vunpack.c.h.b16 %v47
  %v216 = vunpack.c.l.b16 %v48
  %v217 = vunpack.c.h.b16 %v48
  %v218 = vunpack.c.l.b16 %v49
  %v219 = vunpack.c.h.b16 %v49
  %v220 = vunpack.c.l.b16 %v50
  %v221 = vunpack.c.h.b16 %v50
  %v222 = vunpack.c.l.b16 %v51
  %v223 = vunpack.c.h.b16 %v51
  %v224 = vunpack.c.l.b16 %v52
  %v225 = vunpack.c.h.b16 %v52
  %v226 = vunpack.c.l.b16 %v53
  %v227 = vunpack.c.h.b16 %v53
  %v228 = vunpack.c.l.b16 %v54
  %v229 = vunpack.c.h.b16 %v54
  %v230 = vunpack.c.l.b16 %v55
  %v231 = vunpack.c.h.b16 %v55
  %v232 = vunpack.c.l.b16 %v56
  %v233 = vunpack.c.h.b16 %v56
  %v234 = vunpack.c.l.b16 %v57
  %v235 = vunpack.c.h.b16 %v57
  %v236 = vunpack.c.l.b16 %v58
  %v237 = vunpack.c.h.b16 %v58
  %v238 = vunpack.c.l.b16 %v59
  %v239 = vunpack.c.h.b16 %v59
  %v240 = vunpack.c.l.b16 %v60
  %v241 = vunpack.c.h.b16 %v60
  %v242 = vunpack.c.l.b16 %v61
  %v243 = vunpack.c.h.b16 %v61
  %v244 = vunpack.c.l.b16 %v62
  %v245 = vunpack.c.h.b16 %v62
  %v246 = vunpack.c.l.b16 %v63
  %v247 = vunpack.c.h.b16 %v63
  %v248 = vunpack.c.l.b16 %v64
  %v249 = vunpack.c.h.b16 %v64
  %v250 = vunpack.c.l.b16 %v65
  %v251 = vunpack.c.h.b16 %v65
  %v252 = vunpack.c.l.b16 %v66
  %v253 = vunpack.c.h.b16 %v66
  %v254 = vunpack.c.l.b16 %v67
  %v255 = vunpack.c.h.b16 %v67
  %v256 = vunpack.c.l.b16 %v68
  %v257 = vunpack.c.h.b16 %v68
  %v258 = vunpack.c.l.b16 %v69
  %v259 = vunpack.c.h.b16 %v69
  %v260 = vunpack.c.l.b16 %v70
  %v261 = vunpack.c.h.b16 %v70
  %v262 = vunpack.c.l.b16 %v71
  %v263 = vunpack.c.h.b16 %v71
  %v264 = vunpack.c.l.b16 %v72
  %v265 = vunpack.c.h.b16 %v72
  %v266 = vunpack.c.l.b16 %v73
  %v267 = vunpack.c.h.b16 %v73
  %v268 = vunpack.c.l.b16 %v74
  %v269 = vunpack.c.h.b16 %v74
  %v270 = vunpack.c.l.b16 %v75
  %v271 = vunpack.c.h.b16 %v75
  %v272 = vunpack.c.l.b16 %v76
  %v273 = vunpack.c.h.b16 %v76
  %v274 = vunpack.c.l.b16 %v77
  %v275 = vunpack.c.h.b16 %v77
  %v276 = vunpack.c.l.b16 %v78
  %v277 = vunpack.c.h.b16 %v78
  %v278 = vunpack.c.l.b16 %v79
  %v279 = vunpack.c.h.b16 %v79
  %v280 = vunpack.c.l.b16 %v80
  %v281 = vunpack.c.h.b16 %v80
  %v282 = vunpack.c.l.b16 %v81
  %v283 = vunpack.c.h.b16 %v81
  %v284 = vunpack.c.l.b16 %v82
  %v285 = vunpack.c.h.b16 %v82
  %v286 = vunpack.c.l.b16 %v83
  %v287 = vunpack.c.h.b16 %v83
  %v288 = vunpack.c.l.b16 %v84
  %v289 = vunpack.c.h.b16 %v84
  %v290 = vpack.c.b16 %v166, %v162
  %v291 = vpack.c.b16 %v167, %v163
  %v292 = vpack.c.b16 %v168, %v164
  %v293 = vpack.c.b16 %v169, %v165
  %v294 = vpack.c.b16 %v174, %v170
  %v295 = vpack.c.b16 %v175, %v171
  %v296 = vpack.c.b16 %v176, %v172
  %v297 = vpack.c.b16 %v177, %v173
  %v298 = vpack.c.b16 %v182, %v178
  %v299 = vpack.c.b16 %v183, %v179
  %v300 = vpack.c.b16 %v184, %v180
  %v301 = vpack.c.b16 %v185, %v181
  %v302 = vpack.c.b16 %v190, %v186
  %v303 = vpack.c.b16 %v191, %v187
  %v304 = vpack.c.b16 %v192, %v188
  %v305 = vpack.c.b16 %v193, %v189
  %v306 = vpack.c.b16 %v198, %v194
  %v307 = vpack.c.b16 %v199, %v195
  %v308 = vpack.c.b16 %v200, %v196
  %v309 = vpack.c.b16 %v201, %v197
  %v310 = vpack.c.b16 %v206, %v202
  %v311 = vpack.c.b16 %v207, %v203
  %v312 = vpack.c.b16 %v208, %v204
  %v313 = vpack.c.b16 %v209, %v205
  %v314 = vpack.c.b16 %v214, %v210
  %v315 = vpack.c.b16 %v215, %v211
  %v316 = vpack.c.b16 %v216, %v212
  %v317 = vpack.c.b16 %v217, %v213
  %v318 = vpack.c.b16 %v222, %v218
  %v319 = vpack.c.b16 %v223, %v219
  %v320 = vpack.c.b16 %v224, %v220
  %v321 = vpack.c.b16 %v225, %v221
  %v322 = vpack.c.b16 %v230, %v226
  %v323 = vpack.c.b16 %v231, %v227
  %v324 = vpack.c.b16 %v232, %v228
  %v325 = vpack.c.b16 %v233, %v229
  %v326 = vpack.c.b16 %v238, %v234
  %v327 = vpack.c.b16 %v239, %v235
  %v328 = vpack.c.b16 %v240, %v236
  %v329 = vpack.c.b16 %v241, %v237
  %v330 = vpack.c.b16 %v246, %v242
  %v331 = vpack.c.b16 %v247, %v243
  %v332 = vpack.c.b16 %v248, %v244
  %v333 = vpack.c.b16 %v249, %v245
  %v334 = vpack.c.b16 %v254, %v250
  %v335 = vpack.c.b16 %v255, %v251
  %v336 = vpack.c.b16 %v256, %v252
  %v337 = vpack.c.b16 %v257, %v253
  %v338 = vpack.c.b16 %v262, %v258
  %v339 = vpack.c.b16 %v263, %v259
  %v340 = vpack.c.b16 %v264, %v260
  %v341 = vpack.c.b16 %v265, %v261
  %v342 = vpack.c.b16 %v270, %v266
  %v343 = vpack.c.b16 %v271, %v267
  %v344 = vpack.c.b16 %v272, %v268
  %v345 = vpack.c.b16 %v273, %v269
  %v346 = vpack.c.b16 %v278, %v274
  %v347 = vpack.c.b16 %v279, %v275
  %v348 = vpack.c.b16 %v280, %v276
  %v349 = vpack.c.b16 %v281, %v277
  %v350 = vpack.c.b16 %v286, %v282
  %v351 = vpack.c.b16 %v287, %v283
  %v352 = vpack.c.b16 %v288, %v284
  %v353 = vpack.c.b16 %v289, %v285
  %418 = vmatprep.subr.bf16.mxu0 %v291
  %419 = vmatpush1.bf16.msra.mxu0 %v290
  %420 = vmatprep.subr.bf16.mxu0 %v295
  %421 = vmatpush1.bf16.msra.mxu0 %v294
  %422 = vmatprep.subr.bf16.mxu0 %v299
  %423 = vmatpush1.bf16.msra.mxu0 %v298
  %424 = vmatprep.subr.bf16.mxu0 %v303
  %425 = vmatpush1.bf16.msra.mxu0 %v302
  %426 = vmatprep.subr.bf16.mxu0 %v307
  %427 = vmatpush1.bf16.msra.mxu0 %v306
  %428 = vmatprep.subr.bf16.mxu0 %v311
  %429 = vmatpush1.bf16.msra.mxu0 %v310
  %430 = vmatprep.subr.bf16.mxu0 %v315
  %431 = vmatpush1.bf16.msra.mxu0 %v314
  %432 = vmatprep.subr.bf16.mxu0 %v319
  %433 = vmatpush1.bf16.msra.mxu0 %v318
  %434 = vmatprep.subr.bf16.mxu0 %v323
  %435 = vmatpush1.bf16.msra.mxu0 %v322
  %436 = vmatprep.subr.bf16.mxu0 %v327
  %437 = vmatpush1.bf16.msra.mxu0 %v326
  %438 = vmatprep.subr.bf16.mxu0 %v331
  %439 = vmatpush1.bf16.msra.mxu0 %v330
  %440 = vmatprep.subr.bf16.mxu0 %v335
  %441 = vmatpush1.bf16.msra.mxu0 %v334
  %442 = vmatprep.subr.bf16.mxu0 %v339
  %443 = vmatpush1.bf16.msra.mxu0 %v338
  %444 = vmatprep.subr.bf16.mxu0 %v343
  %445 = vmatpush1.bf16.msra.mxu0 %v342
  %446 = vmatprep.subr.bf16.mxu0 %v347
  %447 = vmatpush1.bf16.msra.mxu0 %v346
  %448 = vmatprep.subr.bf16.mxu0 %v351
  %449 = vmatpush1.bf16.msra.mxu0 %v350
  %450 = vmatprep.mubr.bf16.mxu0 %v95
  %451 = vmatmul.mubr.bf16.gmra.mrb[0].mxu0 %v94
  %v452 = vpop.f32.mrb[0].mxu0
  %v453 = vadd.f32 %v89, %v452
  %v454 = vpop.f32.mrb[0].mxu0
  %v455 = vadd.f32 %v89, %v454
  %v456 = vpop.f32.mrb[0].mxu0
  %v457 = vpop.f32.mrb[0].mxu0
  %458 = vdwg.mxu0
  %459 = vmatprep.subr.bf16.mxu0 %v293
  %460 = vmatpush1.bf16.msra.mxu0 %v292
  %461 = vmatprep.subr.bf16.mxu0 %v297
  %462 = vmatpush1.bf16.msra.mxu0 %v296
  %463 = vmatprep.subr.bf16.mxu0 %v301
  %464 = vmatpush1.bf16.msra.mxu0 %v300
  %465 = vmatprep.subr.bf16.mxu0 %v305
  %466 = vmatpush1.bf16.msra.mxu0 %v304
  %467 = vmatprep.subr.bf16.mxu0 %v309
  %468 = vmatpush1.bf16.msra.mxu0 %v308
  %469 = vmatprep.subr.bf16.mxu0 %v313
  %470 = vmatpush1.bf16.msra.mxu0 %v312
  %471 = vmatprep.subr.bf16.mxu0 %v317
  %472 = vmatpush1.bf16.msra.mxu0 %v316
  %473 = vmatprep.subr.bf16.mxu0 %v321
  %474 = vmatpush1.bf16.msra.mxu0 %v320
  %475 = vmatprep.subr.bf16.mxu0 %v325
  %476 = vmatpush1.bf16.msra.mxu0 %v324
  %477 = vmatprep.subr.bf16.mxu0 %v329
  %478 = vmatpush1.bf16.msra.mxu0 %v328
  %479 = vmatprep.subr.bf16.mxu0 %v333
  %480 = vmatpush1.bf16.msra.mxu0 %v332
  %481 = vmatprep.subr.bf16.mxu0 %v337
  %482 = vmatpush1.bf16.msra.mxu0 %v336
  %483 = vmatprep.subr.bf16.mxu0 %v341
  %484 = vmatpush1.bf16.msra.mxu0 %v340
  %485 = vmatprep.subr.bf16.mxu0 %v345
  %486 = vmatpush1.bf16.msra.mxu0 %v344
  %487 = vmatprep.subr.bf16.mxu0 %v349
  %488 = vmatpush1.bf16.msra.mxu0 %v348
  %489 = vmatprep.subr.bf16.mxu0 %v353
  %490 = vmatpush1.bf16.msra.mxu0 %v352
  %491 = vmatprep.mubr.bf16.mxu0 %v95
  %492 = vmatmul.mubr.bf16.gmra.mrb[0].mxu0 %v94
  %v493 = vpop.f32.mrb[0].mxu0
  %v494 = vadd.f32 %v89, %v493
  %v495 = vpop.f32.mrb[0].mxu0
  %v496 = vadd.f32 %v89, %v495
  %v497 = vpop.f32.mrb[0].mxu0
  %v498 = vpop.f32.mrb[0].mxu0
  %499 = vdwg.mxu0
  %v500 = vadd.f32 %v453, %v455
  %v501 = vadd.f32 %v500, %v494
  %v502 = vadd.f32 %v501, %v496
  %503 = vadd.xlane.f32.xlu0 %v502
  %v504 = vpop.xlane.xlu0 %503
  %v505 = vrcp.pop 512.0
  %v506 = vmul.f32 %v504, %v505
  %v507 = vsub.f32 %v453, %v506
  %v508 = vsub.f32 %v455, %v506
  %v509 = vsub.f32 %v494, %v506
  %v510 = vsub.f32 %v496, %v506
  %v511 = vmul.f32 %v507, %v507
  %v512 = vmul.f32 %v508, %v508
  %v513 = vmul.f32 %v509, %v509
  %v514 = vmul.f32 %v510, %v510
  %v515 = vadd.f32 %v511, %v512
  %v516 = vadd.f32 %v515, %v513
  %v517 = vadd.f32 %v516, %v514
  %518 = vadd.xlane.f32.xlu0 %v517
  %v519 = vpop.xlane.xlu0 %518
  %v520 = vmul.f32 %v519, %v505
  %v521 = vadd.f32 %v520, 1e-05
  %v522 = vrsqrt.pop %v521
  %v523 = vmul.f32 %v507, %v522
  %v524 = vmul.f32 %v508, %v522
  %v525 = vmul.f32 %v509, %v522
  %v526 = vmul.f32 %v510, %v522
  %v527 = vld [vmem:[%s3] sm:$0xff]
  %529 = vset.pattern.permute.xlu0 0
  %530 = vperm.xlu0 %529, %v527
  %v531 = vpop.permute.xlu0 %530
  %v533 = vmul.f32 %v523, %v531
  %v534 = vmul.f32 %v524, %v531
  %v535 = vmul.f32 %v525, %v531
  %v536 = vmul.f32 %v526, %v531
  %v537 = vld [vmem:[%s4] sm:$0xff]
  %539 = vset.pattern.permute.xlu0 0
  %540 = vperm.xlu0 %539, %v537
  %v541 = vpop.permute.xlu0 %540
  %v543 = vadd.f32 %v533, %v541
  %v544 = vadd.f32 %v534, %v541
  %v545 = vadd.f32 %v535, %v541
  %v546 = vadd.f32 %v536, %v541
  %v547 = vmax.f32 %v543, 0.0
  %v548 = vmax.f32 %v544, 0.0
  %v549 = vmax.f32 %v545, 0.0
  %v550 = vmax.f32 %v546, 0.0
  %v551 = vpack.c.bf16 %v547, %v547
  %v552 = vpack.c.bf16 %v548, %v548
  %v553 = vpack.c.bf16 %v549, %v549
  %v554 = vpack.c.bf16 %v550, %v550
  %v559 = vunpack.c.l.b16 %v551
  %v560 = vunpack.c.l.b16 %v552
  %v561 = vunpack.c.l.b16 %v553
  %v562 = vunpack.c.l.b16 %v554
  %v563 = vpack.c.b16 %v560, %v559
  %v564 = vpack.c.b16 %v562, %v561
  %567 = vst [vmem:[%s5] sm:$0xff] %v563
  %568 = vst [vmem:[%s5 + $0x8] sm:$0xff] %v564
  // Predicated region
  $region22: #{netG_v2_forward.8} parent=0 // pred_check
    _
  $region23: #{netG_v2_forward.8} parent=0 // pred_check_branch
    %570 = sbr.rel (0) target = $region25
  $region24: #{netG_v2_forward.8} parent=0 // pred_region
    _
  $region25: #{netG_v2_forward.8} parent=0 // pred_fallthru
    _
  // Predicated region
  $region26: #{netG_v2_forward.8} parent=0 // pred_check
    _
  $region27: #{netG_v2_forward.8} parent=0 // pred_check_branch
    %572 = sbr.rel (0) target = $region29
  $region28: #{netG_v2_forward.8} parent=0 // pred_region
    _
  $region29: #{netG_v2_forward.8} parent=0 // pred_fallthru
    _

// kernel: netG_v2_forward.9
$region0: #{netG_v2_forward.9}
  #allocation0 [shape = 'u32[]', space=smem, size = 0x4, offset = 0x4, fixed_abs, tag = 'smem constant byte address 0x4 - core index']
  #allocation1 [shape = 'u32[144,128]{1,0:T(1,128)}', space=vmem, size = 0x12000, scoped, tag = 'internal scratch']
  %s0 = inlined_call_operand.vmem [shape: bf16[3,128], index: 0, kind: input, shape index: {}]
  %s1 = inlined_call_operand.vmem [shape: bf16[128,2048], index: 1, kind: input, shape index: {}]
  %s2 = inlined_call_operand.vmem [shape: f32[3,1], index: 2, kind: input, shape index: {}]
  %s3 = inlined_call_operand.vmem [shape: f32[3,2048], index: 3, kind: output, shape index: {}]
  %s4 = sld [smem:[#allocation0]]
  $region22: #{netG_v2_forward.9} parent=0
    _
  %s6 = ssub.s32 1, %s4
  %s7 = scalar_select 0, %s6, %s4
  // Predicated region
  $region2: #{netG_v2_forward.9} parent=0 // pred_check
    _
  $region3: #{netG_v2_forward.9} parent=0 // pred_check_branch
    %9 = sbr.rel (0) target = $region5
  $region4: #{netG_v2_forward.9} parent=0 // pred_region
    _
  $region5: #{netG_v2_forward.9} parent=0 // pred_fallthru
    _
  // Predicated region
  $region6: #{netG_v2_forward.9} parent=0 // pred_check
    _
  $region7: #{netG_v2_forward.9} parent=0 // pred_check_branch
    %11 = sbr.rel (0) target = $region9
  $region8: #{netG_v2_forward.9} parent=0 // pred_region
    _
  $region9: #{netG_v2_forward.9} parent=0 // pred_fallthru
    _
  // Predicated region
  $region10: #{netG_v2_forward.9} parent=0 // pred_check
    _
  $region11: #{netG_v2_forward.9} parent=0 // pred_check_branch
    %13 = sbr.rel (0) target = $region13
  $region12: #{netG_v2_forward.9} parent=0 // pred_region
    _
  $region13: #{netG_v2_forward.9} parent=0 // pred_fallthru
    _
  %v15 = vld [vmem:[%s0] sm:$0x3]
  %v16 = vld [vmem:[%s1] sm:$0xff]
  %v17 = vld [vmem:[%s1 + $0x8] sm:$0xff]
  %v18 = vld [vmem:[%s1 + $0x10] sm:$0xff]
  %v19 = vld [vmem:[%s1 + $0x18] sm:$0xff]
  %v20 = vld [vmem:[%s1 + $0x20] sm:$0xff]
  %v21 = vld [vmem:[%s1 + $0x28] sm:$0xff]
  %v22 = vld [vmem:[%s1 + $0x30] sm:$0xff]
  %v23 = vld [vmem:[%s1 + $0x38] sm:$0xff]
  %v24 = vld [vmem:[%s1 + $0x40] sm:$0xff]
  %v25 = vld [vmem:[%s1 + $0x48] sm:$0xff]
  %v26 = vld [vmem:[%s1 + $0x50] sm:$0xff]
  %v27 = vld [vmem:[%s1 + $0x58] sm:$0xff]
  %v28 = vld [vmem:[%s1 + $0x60] sm:$0xff]
  %v29 = vld [vmem:[%s1 + $0x68] sm:$0xff]
  %v30 = vld [vmem:[%s1 + $0x70] sm:$0xff]
  %v31 = vld [vmem:[%s1 + $0x78] sm:$0xff]
  %v32 = vld [vmem:[%s1 + $0x80] sm:$0xff]
  %v33 = vld [vmem:[%s1 + $0x88] sm:$0xff]
  %v34 = vld [vmem:[%s1 + $0x90] sm:$0xff]
  %v35 = vld [vmem:[%s1 + $0x98] sm:$0xff]
  %v36 = vld [vmem:[%s1 + $0xa0] sm:$0xff]
  %v37 = vld [vmem:[%s1 + $0xa8] sm:$0xff]
  %v38 = vld [vmem:[%s1 + $0xb0] sm:$0xff]
  %v39 = vld [vmem:[%s1 + $0xb8] sm:$0xff]
  %v40 = vld [vmem:[%s1 + $0xc0] sm:$0xff]
  %v41 = vld [vmem:[%s1 + $0xc8] sm:$0xff]
  %v42 = vld [vmem:[%s1 + $0xd0] sm:$0xff]
  %v43 = vld [vmem:[%s1 + $0xd8] sm:$0xff]
  %v44 = vld [vmem:[%s1 + $0xe0] sm:$0xff]
  %v45 = vld [vmem:[%s1 + $0xe8] sm:$0xff]
  %v46 = vld [vmem:[%s1 + $0xf0] sm:$0xff]
  %v47 = vld [vmem:[%s1 + $0xf8] sm:$0xff]
  %v48 = vld [vmem:[%s1 + $0x100] sm:$0xff]
  %v49 = vld [vmem:[%s1 + $0x108] sm:$0xff]
  %v50 = vld [vmem:[%s1 + $0x110] sm:$0xff]
  %v51 = vld [vmem:[%s1 + $0x118] sm:$0xff]
  %v52 = vld [vmem:[%s1 + $0x120] sm:$0xff]
  %v53 = vld [vmem:[%s1 + $0x128] sm:$0xff]
  %v54 = vld [vmem:[%s1 + $0x130] sm:$0xff]
  %v55 = vld [vmem:[%s1 + $0x138] sm:$0xff]
  %v56 = vld [vmem:[%s1 + $0x140] sm:$0xff]
  %v57 = vld [vmem:[%s1 + $0x148] sm:$0xff]
  %v58 = vld [vmem:[%s1 + $0x150] sm:$0xff]
  %v59 = vld [vmem:[%s1 + $0x158] sm:$0xff]
  %v60 = vld [vmem:[%s1 + $0x160] sm:$0xff]
  %v61 = vld [vmem:[%s1 + $0x168] sm:$0xff]
  %v62 = vld [vmem:[%s1 + $0x170] sm:$0xff]
  %v63 = vld [vmem:[%s1 + $0x178] sm:$0xff]
  %v64 = vld [vmem:[%s1 + $0x180] sm:$0xff]
  %v65 = vld [vmem:[%s1 + $0x188] sm:$0xff]
  %v66 = vld [vmem:[%s1 + $0x190] sm:$0xff]
  %v67 = vld [vmem:[%s1 + $0x198] sm:$0xff]
  %v68 = vld [vmem:[%s1 + $0x1a0] sm:$0xff]
  %v69 = vld [vmem:[%s1 + $0x1a8] sm:$0xff]
  %v70 = vld [vmem:[%s1 + $0x1b0] sm:$0xff]
  %v71 = vld [vmem:[%s1 + $0x1b8] sm:$0xff]
  %v72 = vld [vmem:[%s1 + $0x1c0] sm:$0xff]
  %v73 = vld [vmem:[%s1 + $0x1c8] sm:$0xff]
  %v74 = vld [vmem:[%s1 + $0x1d0] sm:$0xff]
  %v75 = vld [vmem:[%s1 + $0x1d8] sm:$0xff]
  %v76 = vld [vmem:[%s1 + $0x1e0] sm:$0xff]
  %v77 = vld [vmem:[%s1 + $0x1e8] sm:$0xff]
  %v78 = vld [vmem:[%s1 + $0x1f0] sm:$0xff]
  %v79 = vld [vmem:[%s1 + $0x1f8] sm:$0xff]
  %v80 = vld [vmem:[%s1 + $0x200] sm:$0xff]
  %v81 = vld [vmem:[%s1 + $0x208] sm:$0xff]
  %v82 = vld [vmem:[%s1 + $0x210] sm:$0xff]
  %v83 = vld [vmem:[%s1 + $0x218] sm:$0xff]
  %v84 = vld [vmem:[%s1 + $0x220] sm:$0xff]
  %v85 = vld [vmem:[%s1 + $0x228] sm:$0xff]
  %v86 = vld [vmem:[%s1 + $0x230] sm:$0xff]
  %v87 = vld [vmem:[%s1 + $0x238] sm:$0xff]
  %v88 = vld [vmem:[%s1 + $0x240] sm:$0xff]
  %v89 = vld [vmem:[%s1 + $0x248] sm:$0xff]
  %v90 = vld [vmem:[%s1 + $0x250] sm:$0xff]
  %v91 = vld [vmem:[%s1 + $0x258] sm:$0xff]
  %v92 = vld [vmem:[%s1 + $0x260] sm:$0xff]
  %v93 = vld [vmem:[%s1 + $0x268] sm:$0xff]
  %v94 = vld [vmem:[%s1 + $0x270] sm:$0xff]
  %v95 = vld [vmem:[%s1 + $0x278] sm:$0xff]
  %v96 = vld [vmem:[%s1 + $0x280] sm:$0xff]
  %v97 = vld [vmem:[%s1 + $0x288] sm:$0xff]
  %v98 = vld [vmem:[%s1 + $0x290] sm:$0xff]
  %v99 = vld [vmem:[%s1 + $0x298] sm:$0xff]
  %v100 = vld [vmem:[%s1 + $0x2a0] sm:$0xff]
  %v101 = vld [vmem:[%s1 + $0x2a8] sm:$0xff]
  %v102 = vld [vmem:[%s1 + $0x2b0] sm:$0xff]
  %v103 = vld [vmem:[%s1 + $0x2b8] sm:$0xff]
  %v104 = vld [vmem:[%s1 + $0x2c0] sm:$0xff]
  %v105 = vld [vmem:[%s1 + $0x2c8] sm:$0xff]
  %v106 = vld [vmem:[%s1 + $0x2d0] sm:$0xff]
  %v107 = vld [vmem:[%s1 + $0x2d8] sm:$0xff]
  %v108 = vld [vmem:[%s1 + $0x2e0] sm:$0xff]
  %v109 = vld [vmem:[%s1 + $0x2e8] sm:$0xff]
  %v110 = vld [vmem:[%s1 + $0x2f0] sm:$0xff]
  %v111 = vld [vmem:[%s1 + $0x2f8] sm:$0xff]
  %v112 = vld [vmem:[%s1 + $0x300] sm:$0xff]
  %v113 = vld [vmem:[%s1 + $0x308] sm:$0xff]
  %v114 = vld [vmem:[%s1 + $0x310] sm:$0xff]
  %v115 = vld [vmem:[%s1 + $0x318] sm:$0xff]
  %v116 = vld [vmem:[%s1 + $0x320] sm:$0xff]
  %v117 = vld [vmem:[%s1 + $0x328] sm:$0xff]
  %v118 = vld [vmem:[%s1 + $0x330] sm:$0xff]
  %v119 = vld [vmem:[%s1 + $0x338] sm:$0xff]
  %v120 = vld [vmem:[%s1 + $0x340] sm:$0xff]
  %v121 = vld [vmem:[%s1 + $0x348] sm:$0xff]
  %v122 = vld [vmem:[%s1 + $0x350] sm:$0xff]
  %v123 = vld [vmem:[%s1 + $0x358] sm:$0xff]
  %v124 = vld [vmem:[%s1 + $0x360] sm:$0xff]
  %v125 = vld [vmem:[%s1 + $0x368] sm:$0xff]
  %v126 = vld [vmem:[%s1 + $0x370] sm:$0xff]
  %v127 = vld [vmem:[%s1 + $0x378] sm:$0xff]
  %v128 = vld [vmem:[%s1 + $0x380] sm:$0xff]
  %v129 = vld [vmem:[%s1 + $0x388] sm:$0xff]
  %v130 = vld [vmem:[%s1 + $0x390] sm:$0xff]
  %v131 = vld [vmem:[%s1 + $0x398] sm:$0xff]
  %v132 = vld [vmem:[%s1 + $0x3a0] sm:$0xff]
  %v133 = vld [vmem:[%s1 + $0x3a8] sm:$0xff]
  %v134 = vld [vmem:[%s1 + $0x3b0] sm:$0xff]
  %v135 = vld [vmem:[%s1 + $0x3b8] sm:$0xff]
  %v136 = vld [vmem:[%s1 + $0x3c0] sm:$0xff]
  %v137 = vld [vmem:[%s1 + $0x3c8] sm:$0xff]
  %v138 = vld [vmem:[%s1 + $0x3d0] sm:$0xff]
  %v139 = vld [vmem:[%s1 + $0x3d8] sm:$0xff]
  %v140 = vld [vmem:[%s1 + $0x3e0] sm:$0xff]
  %v141 = vld [vmem:[%s1 + $0x3e8] sm:$0xff]
  %v142 = vld [vmem:[%s1 + $0x3f0] sm:$0xff]
  %v143 = vld [vmem:[%s1 + $0x3f8] sm:$0xff]
  %v144 = vld [vmem:[%s2] sm:$0x7]
  %146 = vset.pattern.permute.xlu0 0
  %147 = vperm.xlu0 %146, %v144
  %v148 = vpop.permute.xlu0 %147
  %v278 = vunpack.c.l.b16 %v16
  %v279 = vunpack.c.h.b16 %v16
  %v280 = vunpack.c.l.b16 %v17
  %v281 = vunpack.c.h.b16 %v17
  %v282 = vunpack.c.l.b16 %v18
  %v283 = vunpack.c.h.b16 %v18
  %v284 = vunpack.c.l.b16 %v19
  %v285 = vunpack.c.h.b16 %v19
  %v286 = vunpack.c.l.b16 %v20
  %v287 = vunpack.c.h.b16 %v20
  %v288 = vunpack.c.l.b16 %v21
  %v289 = vunpack.c.h.b16 %v21
  %v290 = vunpack.c.l.b16 %v22
  %v291 = vunpack.c.h.b16 %v22
  %v292 = vunpack.c.l.b16 %v23
  %v293 = vunpack.c.h.b16 %v23
  %v294 = vunpack.c.l.b16 %v24
  %v295 = vunpack.c.h.b16 %v24
  %v296 = vunpack.c.l.b16 %v25
  %v297 = vunpack.c.h.b16 %v25
  %v298 = vunpack.c.l.b16 %v26
  %v299 = vunpack.c.h.b16 %v26
  %v300 = vunpack.c.l.b16 %v27
  %v301 = vunpack.c.h.b16 %v27
  %v302 = vunpack.c.l.b16 %v28
  %v303 = vunpack.c.h.b16 %v28
  %v304 = vunpack.c.l.b16 %v29
  %v305 = vunpack.c.h.b16 %v29
  %v306 = vunpack.c.l.b16 %v30
  %v307 = vunpack.c.h.b16 %v30
  %v308 = vunpack.c.l.b16 %v31
  %v309 = vunpack.c.h.b16 %v31
  %v310 = vunpack.c.l.b16 %v32
  %v311 = vunpack.c.h.b16 %v32
  %v312 = vunpack.c.l.b16 %v33
  %v313 = vunpack.c.h.b16 %v33
  %v314 = vunpack.c.l.b16 %v34
  %v315 = vunpack.c.h.b16 %v34
  %v316 = vunpack.c.l.b16 %v35
  %v317 = vunpack.c.h.b16 %v35
  %v318 = vunpack.c.l.b16 %v36
  %v319 = vunpack.c.h.b16 %v36
  %v320 = vunpack.c.l.b16 %v37
  %v321 = vunpack.c.h.b16 %v37
  %v322 = vunpack.c.l.b16 %v38
  %v323 = vunpack.c.h.b16 %v38
  %v324 = vunpack.c.l.b16 %v39
  %v325 = vunpack.c.h.b16 %v39
  %v326 = vunpack.c.l.b16 %v40
  %v327 = vunpack.c.h.b16 %v40
  %v328 = vunpack.c.l.b16 %v41
  %v329 = vunpack.c.h.b16 %v41
  %v330 = vunpack.c.l.b16 %v42
  %v331 = vunpack.c.h.b16 %v42
  %v332 = vunpack.c.l.b16 %v43
  %v333 = vunpack.c.h.b16 %v43
  %v334 = vunpack.c.l.b16 %v44
  %v335 = vunpack.c.h.b16 %v44
  %v336 = vunpack.c.l.b16 %v45
  %v337 = vunpack.c.h.b16 %v45
  %v338 = vunpack.c.l.b16 %v46
  %v339 = vunpack.c.h.b16 %v46
  %v340 = vunpack.c.l.b16 %v47
  %v341 = vunpack.c.h.b16 %v47
  %v342 = vunpack.c.l.b16 %v48
  %v343 = vunpack.c.h.b16 %v48
  %v344 = vunpack.c.l.b16 %v49
  %v345 = vunpack.c.h.b16 %v49
  %v346 = vunpack.c.l.b16 %v50
  %v347 = vunpack.c.h.b16 %v50
  %v348 = vunpack.c.l.b16 %v51
  %v349 = vunpack.c.h.b16 %v51
  %v350 = vunpack.c.l.b16 %v52
  %v351 = vunpack.c.h.b16 %v52
  %v352 = vunpack.c.l.b16 %v53
  %v353 = vunpack.c.h.b16 %v53
  %v354 = vunpack.c.l.b16 %v54
  %v355 = vunpack.c.h.b16 %v54
  %v356 = vunpack.c.l.b16 %v55
  %v357 = vunpack.c.h.b16 %v55
  %v358 = vunpack.c.l.b16 %v56
  %v359 = vunpack.c.h.b16 %v56
  %v360 = vunpack.c.l.b16 %v57
  %v361 = vunpack.c.h.b16 %v57
  %v362 = vunpack.c.l.b16 %v58
  %v363 = vunpack.c.h.b16 %v58
  %v364 = vunpack.c.l.b16 %v59
  %v365 = vunpack.c.h.b16 %v59
  %v366 = vunpack.c.l.b16 %v60
  %v367 = vunpack.c.h.b16 %v60
  %v368 = vunpack.c.l.b16 %v61
  %v369 = vunpack.c.h.b16 %v61
  %v370 = vunpack.c.l.b16 %v62
  %v371 = vunpack.c.h.b16 %v62
  %v372 = vunpack.c.l.b16 %v63
  %v373 = vunpack.c.h.b16 %v63
  %v374 = vunpack.c.l.b16 %v64
  %v375 = vunpack.c.h.b16 %v64
  %v376 = vunpack.c.l.b16 %v65
  %v377 = vunpack.c.h.b16 %v65
  %v378 = vunpack.c.l.b16 %v66
  %v379 = vunpack.c.h.b16 %v66
  %v380 = vunpack.c.l.b16 %v67
  %v381 = vunpack.c.h.b16 %v67
  %v382 = vunpack.c.l.b16 %v68
  %v383 = vunpack.c.h.b16 %v68
  %v384 = vunpack.c.l.b16 %v69
  %v385 = vunpack.c.h.b16 %v69
  %v386 = vunpack.c.l.b16 %v70
  %v387 = vunpack.c.h.b16 %v70
  %v388 = vunpack.c.l.b16 %v71
  %v389 = vunpack.c.h.b16 %v71
  %v390 = vunpack.c.l.b16 %v72
  %v391 = vunpack.c.h.b16 %v72
  %v392 = vunpack.c.l.b16 %v73
  %v393 = vunpack.c.h.b16 %v73
  %v394 = vunpack.c.l.b16 %v74
  %v395 = vunpack.c.h.b16 %v74
  %v396 = vunpack.c.l.b16 %v75
  %v397 = vunpack.c.h.b16 %v75
  %v398 = vunpack.c.l.b16 %v76
  %v399 = vunpack.c.h.b16 %v76
  %v400 = vunpack.c.l.b16 %v77
  %v401 = vunpack.c.h.b16 %v77
  %v402 = vunpack.c.l.b16 %v78
  %v403 = vunpack.c.h.b16 %v78
  %v404 = vunpack.c.l.b16 %v79
  %v405 = vunpack.c.h.b16 %v79
  %v406 = vunpack.c.l.b16 %v80
  %v407 = vunpack.c.h.b16 %v80
  %v408 = vunpack.c.l.b16 %v81
  %v409 = vunpack.c.h.b16 %v81
  %v410 = vunpack.c.l.b16 %v82
  %v411 = vunpack.c.h.b16 %v82
  %v412 = vunpack.c.l.b16 %v83
  %v413 = vunpack.c.h.b16 %v83
  %v414 = vunpack.c.l.b16 %v84
  %v415 = vunpack.c.h.b16 %v84
  %v416 = vunpack.c.l.b16 %v85
  %v417 = vunpack.c.h.b16 %v85
  %v418 = vunpack.c.l.b16 %v86
  %v419 = vunpack.c.h.b16 %v86
  %v420 = vunpack.c.l.b16 %v87
  %v421 = vunpack.c.h.b16 %v87
  %v422 = vunpack.c.l.b16 %v88
  %v423 = vunpack.c.h.b16 %v88
  %v424 = vunpack.c.l.b16 %v89
  %v425 = vunpack.c.h.b16 %v89
  %v426 = vunpack.c.l.b16 %v90
  %v427 = vunpack.c.h.b16 %v90
  %v428 = vunpack.c.l.b16 %v91
  %v429 = vunpack.c.h.b16 %v91
  %v430 = vunpack.c.l.b16 %v92
  %v431 = vunpack.c.h.b16 %v92
  %v432 = vunpack.c.l.b16 %v93
  %v433 = vunpack.c.h.b16 %v93
  %v434 = vunpack.c.l.b16 %v94
  %v435 = vunpack.c.h.b16 %v94
  %v436 = vunpack.c.l.b16 %v95
  %v437 = vunpack.c.h.b16 %v95
  %v438 = vunpack.c.l.b16 %v96
  %v439 = vunpack.c.h.b16 %v96
  %v440 = vunpack.c.l.b16 %v97
  %v441 = vunpack.c.h.b16 %v97
  %v442 = vunpack.c.l.b16 %v98
  %v443 = vunpack.c.h.b16 %v98
  %v444 = vunpack.c.l.b16 %v99
  %v445 = vunpack.c.h.b16 %v99
  %v446 = vunpack.c.l.b16 %v100
  %v447 = vunpack.c.h.b16 %v100
  %v448 = vunpack.c.l.b16 %v101
  %v449 = vunpack.c.h.b16 %v101
  %v450 = vunpack.c.l.b16 %v102
  %v451 = vunpack.c.h.b16 %v102
  %v452 = vunpack.c.l.b16 %v103
  %v453 = vunpack.c.h.b16 %v103
  %v454 = vunpack.c.l.b16 %v104
  %v455 = vunpack.c.h.b16 %v104
  %v456 = vunpack.c.l.b16 %v105
  %v457 = vunpack.c.h.b16 %v105
  %v458 = vunpack.c.l.b16 %v106
  %v459 = vunpack.c.h.b16 %v106
  %v460 = vunpack.c.l.b16 %v107
  %v461 = vunpack.c.h.b16 %v107
  %v462 = vunpack.c.l.b16 %v108
  %v463 = vunpack.c.h.b16 %v108
  %v464 = vunpack.c.l.b16 %v109
  %v465 = vunpack.c.h.b16 %v109
  %v466 = vunpack.c.l.b16 %v110
  %v467 = vunpack.c.h.b16 %v110
  %v468 = vunpack.c.l.b16 %v111
  %v469 = vunpack.c.h.b16 %v111
  %v470 = vunpack.c.l.b16 %v112
  %v471 = vunpack.c.h.b16 %v112
  %v472 = vunpack.c.l.b16 %v113
  %v473 = vunpack.c.h.b16 %v113
  %v474 = vunpack.c.l.b16 %v114
  %v475 = vunpack.c.h.b16 %v114
  %v476 = vunpack.c.l.b16 %v115
  %v477 = vunpack.c.h.b16 %v115
  %v478 = vunpack.c.l.b16 %v116
  %v479 = vunpack.c.h.b16 %v116
  %v480 = vunpack.c.l.b16 %v117
  %v481 = vunpack.c.h.b16 %v117
  %v482 = vunpack.c.l.b16 %v118
  %v483 = vunpack.c.h.b16 %v118
  %v484 = vunpack.c.l.b16 %v119
  %v485 = vunpack.c.h.b16 %v119
  %v486 = vunpack.c.l.b16 %v120
  %v487 = vunpack.c.h.b16 %v120
  %v488 = vunpack.c.l.b16 %v121
  %v489 = vunpack.c.h.b16 %v121
  %v490 = vunpack.c.l.b16 %v122
  %v491 = vunpack.c.h.b16 %v122
  %v492 = vunpack.c.l.b16 %v123
  %v493 = vunpack.c.h.b16 %v123
  %v494 = vunpack.c.l.b16 %v124
  %v495 = vunpack.c.h.b16 %v124
  %v496 = vunpack.c.l.b16 %v125
  %v497 = vunpack.c.h.b16 %v125
  %v498 = vunpack.c.l.b16 %v126
  %v499 = vunpack.c.h.b16 %v126
  %v500 = vunpack.c.l.b16 %v127
  %v501 = vunpack.c.h.b16 %v127
  %v502 = vunpack.c.l.b16 %v128
  %v503 = vunpack.c.h.b16 %v128
  %v504 = vunpack.c.l.b16 %v129
  %v505 = vunpack.c.h.b16 %v129
  %v506 = vunpack.c.l.b16 %v130
  %v507 = vunpack.c.h.b16 %v130
  %v508 = vunpack.c.l.b16 %v131
  %v509 = vunpack.c.h.b16 %v131
  %v510 = vunpack.c.l.b16 %v132
  %v511 = vunpack.c.h.b16 %v132
  %v512 = vunpack.c.l.b16 %v133
  %v513 = vunpack.c.h.b16 %v133
  %v514 = vunpack.c.l.b16 %v134
  %v515 = vunpack.c.h.b16 %v134
  %v516 = vunpack.c.l.b16 %v135
  %v517 = vunpack.c.h.b16 %v135
  %v518 = vunpack.c.l.b16 %v136
  %v519 = vunpack.c.h.b16 %v136
  %v520 = vunpack.c.l.b16 %v137
  %v521 = vunpack.c.h.b16 %v137
  %v522 = vunpack.c.l.b16 %v138
  %v523 = vunpack.c.h.b16 %v138
  %v524 = vunpack.c.l.b16 %v139
  %v525 = vunpack.c.h.b16 %v139
  %v526 = vunpack.c.l.b16 %v140
  %v527 = vunpack.c.h.b16 %v140
  %v528 = vunpack.c.l.b16 %v141
  %v529 = vunpack.c.h.b16 %v141
  %v530 = vunpack.c.l.b16 %v142
  %v531 = vunpack.c.h.b16 %v142
  %v532 = vunpack.c.l.b16 %v143
  %v533 = vunpack.c.h.b16 %v143
  %v534 = vpack.c.b16 %v294, %v278
  %v535 = vpack.c.b16 %v295, %v279
  %v536 = vpack.c.b16 %v296, %v280
  %v537 = vpack.c.b16 %v297, %v281
  %v538 = vpack.c.b16 %v298, %v282
  %v539 = vpack.c.b16 %v299, %v283
  %v540 = vpack.c.b16 %v300, %v284
  %v541 = vpack.c.b16 %v301, %v285
  %v542 = vpack.c.b16 %v302, %v286
  %v543 = vpack.c.b16 %v303, %v287
  %v544 = vpack.c.b16 %v304, %v288
  %v545 = vpack.c.b16 %v305, %v289
  %v546 = vpack.c.b16 %v306, %v290
  %v547 = vpack.c.b16 %v307, %v291
  %v548 = vpack.c.b16 %v308, %v292
  %v549 = vpack.c.b16 %v309, %v293
  %v550 = vpack.c.b16 %v326, %v310
  %v551 = vpack.c.b16 %v327, %v311
  %v552 = vpack.c.b16 %v328, %v312
  %v553 = vpack.c.b16 %v329, %v313
  %v554 = vpack.c.b16 %v330, %v314
  %v555 = vpack.c.b16 %v331, %v315
  %v556 = vpack.c.b16 %v332, %v316
  %v557 = vpack.c.b16 %v333, %v317
  %v558 = vpack.c.b16 %v334, %v318
  %v559 = vpack.c.b16 %v335, %v319
  %v560 = vpack.c.b16 %v336, %v320
  %v561 = vpack.c.b16 %v337, %v321
  %v562 = vpack.c.b16 %v338, %v322
  %v563 = vpack.c.b16 %v339, %v323
  %v564 = vpack.c.b16 %v340, %v324
  %v565 = vpack.c.b16 %v341, %v325
  %v566 = vpack.c.b16 %v358, %v342
  %v567 = vpack.c.b16 %v359, %v343
  %v568 = vpack.c.b16 %v360, %v344
  %v569 = vpack.c.b16 %v361, %v345
  %v570 = vpack.c.b16 %v362, %v346
  %v571 = vpack.c.b16 %v363, %v347
  %v572 = vpack.c.b16 %v364, %v348
  %v573 = vpack.c.b16 %v365, %v349
  %v574 = vpack.c.b16 %v366, %v350
  %v575 = vpack.c.b16 %v367, %v351
  %v576 = vpack.c.b16 %v368, %v352
  %v577 = vpack.c.b16 %v369, %v353
  %v578 = vpack.c.b16 %v370, %v354
  %v579 = vpack.c.b16 %v371, %v355
  %v580 = vpack.c.b16 %v372, %v356
  %v581 = vpack.c.b16 %v373, %v357
  %v582 = vpack.c.b16 %v390, %v374
  %v583 = vpack.c.b16 %v391, %v375
  %v584 = vpack.c.b16 %v392, %v376
  %v585 = vpack.c.b16 %v393, %v377
  %v586 = vpack.c.b16 %v394, %v378
  %v587 = vpack.c.b16 %v395, %v379
  %v588 = vpack.c.b16 %v396, %v380
  %v589 = vpack.c.b16 %v397, %v381
  %v590 = vpack.c.b16 %v398, %v382
  %v591 = vpack.c.b16 %v399, %v383
  %v592 = vpack.c.b16 %v400, %v384
  %v593 = vpack.c.b16 %v401, %v385
  %v594 = vpack.c.b16 %v402, %v386
  %v595 = vpack.c.b16 %v403, %v387
  %v596 = vpack.c.b16 %v404, %v388
  %v597 = vpack.c.b16 %v405, %v389
  %v598 = vpack.c.b16 %v422, %v406
  %v599 = vpack.c.b16 %v423, %v407
  %v600 = vpack.c.b16 %v424, %v408
  %v601 = vpack.c.b16 %v425, %v409
  %v602 = vpack.c.b16 %v426, %v410
  %v603 = vpack.c.b16 %v427, %v411
  %v604 = vpack.c.b16 %v428, %v412
  %v605 = vpack.c.b16 %v429, %v413
  %v606 = vpack.c.b16 %v430, %v414
  %v607 = vpack.c.b16 %v431, %v415
  %v608 = vpack.c.b16 %v432, %v416
  %v609 = vpack.c.b16 %v433, %v417
  %v610 = vpack.c.b16 %v434, %v418
  %v611 = vpack.c.b16 %v435, %v419
  %v612 = vpack.c.b16 %v436, %v420
  %v613 = vpack.c.b16 %v437, %v421
  %v614 = vpack.c.b16 %v454, %v438
  %v615 = vpack.c.b16 %v455, %v439
  %v616 = vpack.c.b16 %v456, %v440
  %v617 = vpack.c.b16 %v457, %v441
  %v618 = vpack.c.b16 %v458, %v442
  %v619 = vpack.c.b16 %v459, %v443
  %v620 = vpack.c.b16 %v460, %v444
  %v621 = vpack.c.b16 %v461, %v445
  %v622 = vpack.c.b16 %v462, %v446
  %v623 = vpack.c.b16 %v463, %v447
  %v624 = vpack.c.b16 %v464, %v448
  %v625 = vpack.c.b16 %v465, %v449
  %v626 = vpack.c.b16 %v466, %v450
  %v627 = vpack.c.b16 %v467, %v451
  %v628 = vpack.c.b16 %v468, %v452
  %v629 = vpack.c.b16 %v469, %v453
  %v630 = vpack.c.b16 %v486, %v470
  %v631 = vpack.c.b16 %v487, %v471
  %v632 = vpack.c.b16 %v488, %v472
  %v633 = vpack.c.b16 %v489, %v473
  %v634 = vpack.c.b16 %v490, %v474
  %v635 = vpack.c.b16 %v491, %v475
  %v636 = vpack.c.b16 %v492, %v476
  %v637 = vpack.c.b16 %v493, %v477
  %v638 = vpack.c.b16 %v494, %v478
  %v639 = vpack.c.b16 %v495, %v479
  %v640 = vpack.c.b16 %v496, %v480
  %v641 = vpack.c.b16 %v497, %v481
  %v642 = vpack.c.b16 %v498, %v482
  %v643 = vpack.c.b16 %v499, %v483
  %v644 = vpack.c.b16 %v500, %v484
  %v645 = vpack.c.b16 %v501, %v485
  %v646 = vpack.c.b16 %v518, %v502
  %v647 = vpack.c.b16 %v519, %v503
  %v648 = vpack.c.b16 %v520, %v504
  %v649 = vpack.c.b16 %v521, %v505
  %v650 = vpack.c.b16 %v522, %v506
  %v651 = vpack.c.b16 %v523, %v507
  %v652 = vpack.c.b16 %v524, %v508
  %v653 = vpack.c.b16 %v525, %v509
  %v654 = vpack.c.b16 %v526, %v510
  %v655 = vpack.c.b16 %v527, %v511
  %v656 = vpack.c.b16 %v528, %v512
  %v657 = vpack.c.b16 %v529, %v513
  %v658 = vpack.c.b16 %v530, %v514
  %v659 = vpack.c.b16 %v531, %v515
  %v660 = vpack.c.b16 %v532, %v516
  %v661 = vpack.c.b16 %v533, %v517
  %790 = vmatprep.subr.bf16.mxu0 %v535
  %791 = vmatpush1.bf16.msra.mxu0 %v534
  %792 = vmatprep.subr.bf16.mxu0 %v551
  %793 = vmatpush1.bf16.msra.mxu0 %v550
  %794 = vmatprep.subr.bf16.mxu0 %v567
  %795 = vmatpush1.bf16.msra.mxu0 %v566
  %796 = vmatprep.subr.bf16.mxu0 %v583
  %797 = vmatpush1.bf16.msra.mxu0 %v582
  %798 = vmatprep.subr.bf16.mxu0 %v599
  %799 = vmatpush1.bf16.msra.mxu0 %v598
  %800 = vmatprep.subr.bf16.mxu0 %v615
  %801 = vmatpush1.bf16.msra.mxu0 %v614
  %802 = vmatprep.subr.bf16.mxu0 %v631
  %803 = vmatpush1.bf16.msra.mxu0 %v630
  %804 = vmatprep.subr.bf16.mxu0 %v647
  %805 = vmatpush1.bf16.msra.mxu0 %v646
  %806 = vmatprep.subr.bf16.mxu0 0
  %807 = vmatpush1.bf16.msra.mxu0 0
  %808 = vmatprep.subr.bf16.mxu0 0
  %809 = vmatpush1.bf16.msra.mxu0 0
  %810 = vmatprep.subr.bf16.mxu0 0
  %811 = vmatpush1.bf16.msra.mxu0 0
  %812 = vmatprep.subr.bf16.mxu0 0
  %813 = vmatpush1.bf16.msra.mxu0 0
  %814 = vmatprep.subr.bf16.mxu0 0
  %815 = vmatpush1.bf16.msra.mxu0 0
  %816 = vmatprep.subr.bf16.mxu0 0
  %817 = vmatpush1.bf16.msra.mxu0 0
  %818 = vmatprep.subr.bf16.mxu0 0
  %819 = vmatpush1.bf16.msra.mxu0 0
  %820 = vmatprep.subr.bf16.mxu0 0
  %821 = vmatpush1.bf16.msra.mxu0 0
  %822 = vmatprep.mubr.bf16.mxu0 0
  %823 = vmatmul.mubr.bf16.gmra.mrb[0].mxu0 %v15
  %v824 = vpop.f32.mrb[0].mxu0
  %v825 = vadd.f32 %v148, %v824
  %v826 = vpop.f32.mrb[0].mxu0
  %v827 = vadd.f32 %v148, %v826
  %v828 = vpop.f32.mrb[0].mxu0
  %v829 = vpop.f32.mrb[0].mxu0
  %830 = vdwg.mxu0
  %831 = vmatprep.subr.bf16.mxu0 %v537
  %832 = vmatpush1.bf16.msra.mxu0 %v536
  %833 = vmatprep.subr.bf16.mxu0 %v553
  %834 = vmatpush1.bf16.msra.mxu0 %v552
  %835 = vmatprep.subr.bf16.mxu0 %v569
  %836 = vmatpush1.bf16.msra.mxu0 %v568
  %837 = vmatprep.subr.bf16.mxu0 %v585
  %838 = vmatpush1.bf16.msra.mxu0 %v584
  %839 = vmatprep.subr.bf16.mxu0 %v601
  %840 = vmatpush1.bf16.msra.mxu0 %v600
  %841 = vmatprep.subr.bf16.mxu0 %v617
  %842 = vmatpush1.bf16.msra.mxu0 %v616
  %843 = vmatprep.subr.bf16.mxu0 %v633
  %844 = vmatpush1.bf16.msra.mxu0 %v632
  %845 = vmatprep.subr.bf16.mxu0 %v649
  %846 = vmatpush1.bf16.msra.mxu0 %v648
  %847 = vmatprep.subr.bf16.mxu0 0
  %848 = vmatpush1.bf16.msra.mxu0 0
  %849 = vmatprep.subr.bf16.mxu0 0
  %850 = vmatpush1.bf16.msra.mxu0 0
  %851 = vmatprep.subr.bf16.mxu0 0
  %852 = vmatpush1.bf16.msra.mxu0 0
  %853 = vmatprep.subr.bf16.mxu0 0
  %854 = vmatpush1.bf16.msra.mxu0 0
  %855 = vmatprep.subr.bf16.mxu0 0
  %856 = vmatpush1.bf16.msra.mxu0 0
  %857 = vmatprep.subr.bf16.mxu0 0
  %858 = vmatpush1.bf16.msra.mxu0 0
  %859 = vmatprep.subr.bf16.mxu0 0
  %860 = vmatpush1.bf16.msra.mxu0 0
  %861 = vmatprep.subr.bf16.mxu0 0
  %862 = vmatpush1.bf16.msra.mxu0 0
  %863 = vmatprep.mubr.bf16.mxu0 0
  %864 = vmatmul.mubr.bf16.gmra.mrb[0].mxu0 %v15
  %v865 = vpop.f32.mrb[0].mxu0
  %v866 = vadd.f32 %v148, %v865
  %v867 = vpop.f32.mrb[0].mxu0
  %v868 = vadd.f32 %v148, %v867
  %v869 = vpop.f32.mrb[0].mxu0
  %v870 = vpop.f32.mrb[0].mxu0
  %871 = vdwg.mxu0
  %872 = vmatprep.subr.bf16.mxu0 %v539
  %873 = vmatpush1.bf16.msra.mxu0 %v538
  %874 = vmatprep.subr.bf16.mxu0 %v555
  %875 = vmatpush1.bf16.msra.mxu0 %v554
  %876 = vmatprep.subr.bf16.mxu0 %v571
  %877 = vmatpush1.bf16.msra.mxu0 %v570
  %878 = vmatprep.subr.bf16.mxu0 %v587
  %879 = vmatpush1.bf16.msra.mxu0 %v586
  %880 = vmatprep.subr.bf16.mxu0 %v603
  %881 = vmatpush1.bf16.msra.mxu0 %v602
  %882 = vmatprep.subr.bf16.mxu0 %v619
  %883 = vmatpush1.bf16.msra.mxu0 %v618
  %884 = vmatprep.subr.bf16.mxu0 %v635
  %885 = vmatpush1.bf16.msra.mxu0 %v634
  %886 = vmatprep.subr.bf16.mxu0 %v651
  %887 = vmatpush1.bf16.msra.mxu0 %v650
  %888 = vmatprep.subr.bf16.mxu0 0
  %889 = vmatpush1.bf16.msra.mxu0 0
  %890 = vmatprep.subr.bf16.mxu0 0
  %891 = vmatpush1.bf16.msra.mxu0 0
  %892 = vmatprep.subr.bf16.mxu0 0
  %893 = vmatpush1.bf16.msra.mxu0 0
  %894 = vmatprep.subr.bf16.mxu0 0
  %895 = vmatpush1.bf16.msra.mxu0 0
  %896 = vmatprep.subr.bf16.mxu0 0
  %897 = vmatpush1.bf16.msra.mxu0 0
  %898 = vmatprep.subr.bf16.mxu0 0
  %899 = vmatpush1.bf16.msra.mxu0 0
  %900 = vmatprep.subr.bf16.mxu0 0
  %901 = vmatpush1.bf16.msra.mxu0 0
  %902 = vmatprep.subr.bf16.mxu0 0
  %903 = vmatpush1.bf16.msra.mxu0 0
  %904 = vmatprep.mubr.bf16.mxu0 0
  %905 = vmatmul.mubr.bf16.gmra.mrb[0].mxu0 %v15
  %v906 = vpop.f32.mrb[0].mxu0
  %v907 = vadd.f32 %v148, %v906
  %v908 = vpop.f32.mrb[0].mxu0
  %v909 = vadd.f32 %v148, %v908
  %v910 = vpop.f32.mrb[0].mxu0
  %v911 = vpop.f32.mrb[0].mxu0
  %912 = vdwg.mxu0
  %913 = vmatprep.subr.bf16.mxu0 %v541
  %914 = vmatpush1.bf16.msra.mxu0 %v540
  %915 = vmatprep.subr.bf16.mxu0 %v557
  %916 = vmatpush1.bf16.msra.mxu0 %v556
  %917 = vmatprep.subr.bf16.mxu0 %v573
  %918 = vmatpush1.bf16.msra.mxu0 %v572
  %919 = vmatprep.subr.bf16.mxu0 %v589
  %920 = vmatpush1.bf16.msra.mxu0 %v588
  %921 = vmatprep.subr.bf16.mxu0 %v605
  %922 = vmatpush1.bf16.msra.mxu0 %v604
  %923 = vmatprep.subr.bf16.mxu0 %v621
  %924 = vmatpush1.bf16.msra.mxu0 %v620
  %925 = vmatprep.subr.bf16.mxu0 %v637
  %926 = vmatpush1.bf16.msra.mxu0 %v636
  %927 = vmatprep.subr.bf16.mxu0 %v653
  %928 = vmatpush1.bf16.msra.mxu0 %v652
  %929 = vmatprep.subr.bf16.mxu0 0
  %930 = vmatpush1.bf16.msra.mxu0 0
  %931 = vmatprep.subr.bf16.mxu0 0
  %932 = vmatpush1.bf16.msra.mxu0 0
  %933 = vmatprep.subr.bf16.mxu0 0
  %934 = vmatpush1.bf16.msra.mxu0 0
  %935 = vmatprep.subr.bf16.mxu0 0
  %936 = vmatpush1.bf16.msra.mxu0 0
  %937 = vmatprep.subr.bf16.mxu0 0
  %938 = vmatpush1.bf16.msra.mxu0 0
  %939 = vmatprep.subr.bf16.mxu0 0
  %940 = vmatpush1.bf16.msra.mxu0 0
  %941 = vmatprep.subr.bf16.mxu0 0
  %942 = vmatpush1.bf16.msra.mxu0 0
  %943 = vmatprep.subr.bf16.mxu0 0
  %944 = vmatpush1.bf16.msra.mxu0 0
  %945 = vmatprep.mubr.bf16.mxu0 0
  %946 = vmatmul.mubr.bf16.gmra.mrb[0].mxu0 %v15
  %v947 = vpop.f32.mrb[0].mxu0
  %v948 = vadd.f32 %v148, %v947
  %v949 = vpop.f32.mrb[0].mxu0
  %v950 = vadd.f32 %v148, %v949
  %v951 = vpop.f32.mrb[0].mxu0
  %v952 = vpop.f32.mrb[0].mxu0
  %953 = vdwg.mxu0
  %954 = vmatprep.subr.bf16.mxu0 %v543
  %955 = vmatpush1.bf16.msra.mxu0 %v542
  %956 = vmatprep.subr.bf16.mxu0 %v559
  %957 = vmatpush1.bf16.msra.mxu0 %v558
  %958 = vmatprep.subr.bf16.mxu0 %v575
  %959 = vmatpush1.bf16.msra.mxu0 %v574
  %960 = vmatprep.subr.bf16.mxu0 %v591
  %961 = vmatpush1.bf16.msra.mxu0 %v590
  %962 = vmatprep.subr.bf16.mxu0 %v607
  %963 = vmatpush1.bf16.msra.mxu0 %v606
  %964 = vmatprep.subr.bf16.mxu0 %v623
  %965 = vmatpush1.bf16.msra.mxu0 %v622
  %966 = vmatprep.subr.bf16.mxu0 %v639
  %967 = vmatpush1.bf16.msra.mxu0 %v638
  %968 = vmatprep.subr.bf16.mxu0 %v655
  %969 = vmatpush1.bf16.msra.mxu0 %v654
  %970 = vmatprep.subr.bf16.mxu0 0
  %971 = vmatpush1.bf16.msra.mxu0 0
  %972 = vmatprep.subr.bf16.mxu0 0
  %973 = vmatpush1.bf16.msra.mxu0 0
  %974 = vmatprep.subr.bf16.mxu0 0
  %975 = vmatpush1.bf16.msra.mxu0 0
  %976 = vmatprep.subr.bf16.mxu0 0
  %977 = vmatpush1.bf16.msra.mxu0 0
  %978 = vmatprep.subr.bf16.mxu0 0
  %979 = vmatpush1.bf16.msra.mxu0 0
  %980 = vmatprep.subr.bf16.mxu0 0
  %981 = vmatpush1.bf16.msra.mxu0 0
  %982 = vmatprep.subr.bf16.mxu0 0
  %983 = vmatpush1.bf16.msra.mxu0 0
  %984 = vmatprep.subr.bf16.mxu0 0
  %985 = vmatpush1.bf16.msra.mxu0 0
  %986 = vmatprep.mubr.bf16.mxu0 0
  %987 = vmatmul.mubr.bf16.gmra.mrb[0].mxu0 %v15
  %v988 = vpop.f32.mrb[0].mxu0
  %v989 = vadd.f32 %v148, %v988
  %v990 = vpop.f32.mrb[0].mxu0
  %v991 = vadd.f32 %v148, %v990
  %v992 = vpop.f32.mrb[0].mxu0
  %v993 = vpop.f32.mrb[0].mxu0
  %994 = vdwg.mxu0
  %995 = vmatprep.subr.bf16.mxu0 %v545
  %996 = vmatpush1.bf16.msra.mxu0 %v544
  %997 = vmatprep.subr.bf16.mxu0 %v561
  %998 = vmatpush1.bf16.msra.mxu0 %v560
  %999 = vmatprep.subr.bf16.mxu0 %v577
  %1000 = vmatpush1.bf16.msra.mxu0 %v576
  %1001 = vmatprep.subr.bf16.mxu0 %v593
  %1002 = vmatpush1.bf16.msra.mxu0 %v592
  %1003 = vmatprep.subr.bf16.mxu0 %v609
  %1004 = vmatpush1.bf16.msra.mxu0 %v608
  %1005 = vmatprep.subr.bf16.mxu0 %v625
  %1006 = vmatpush1.bf16.msra.mxu0 %v624
  %1007 = vmatprep.subr.bf16.mxu0 %v641
  %1008 = vmatpush1.bf16.msra.mxu0 %v640
  %1009 = vmatprep.subr.bf16.mxu0 %v657
  %1010 = vmatpush1.bf16.msra.mxu0 %v656
  %1011 = vmatprep.subr.bf16.mxu0 0
  %1012 = vmatpush1.bf16.msra.mxu0 0
  %1013 = vmatprep.subr.bf16.mxu0 0
  %1014 = vmatpush1.bf16.msra.mxu0 0
  %1015 = vmatprep.subr.bf16.mxu0 0
  %1016 = vmatpush1.bf16.msra.mxu0 0
  %1017 = vmatprep.subr.bf16.mxu0 0
  %1018 = vmatpush1.bf16.msra.mxu0 0
  %1019 = vmatprep.subr.bf16.mxu0 0
  %1020 = vmatpush1.bf16.msra.mxu0 0
  %1021 = vmatprep.subr.bf16.mxu0 0
  %1022 = vmatpush1.bf16.msra.mxu0 0
  %1023 = vmatprep.subr.bf16.mxu0 0
  %1024 = vmatpush1.bf16.msra.mxu0 0
  %1025 = vmatprep.subr.bf16.mxu0 0
  %1026 = vmatpush1.bf16.msra.mxu0 0
  %1027 = vmatprep.mubr.bf16.mxu0 0
  %1028 = vmatmul.mubr.bf16.gmra.mrb[0].mxu0 %v15
  %v1029 = vpop.f32.mrb[0].mxu0
  %v1030 = vadd.f32 %v148, %v1029
  %v1031 = vpop.f32.mrb[0].mxu0
  %v1032 = vadd.f32 %v148, %v1031
  %v1033 = vpop.f32.mrb[0].mxu0
  %v1034 = vpop.f32.mrb[0].mxu0
  %1035 = vdwg.mxu0
  %1036 = vmatprep.subr.bf16.mxu0 %v547
  %1037 = vmatpush1.bf16.msra.mxu0 %v546
  %1038 = vmatprep.subr.bf16.mxu0 %v563
  %1039 = vmatpush1.bf16.msra.mxu0 %v562
  %1040 = vmatprep.subr.bf16.mxu0 %v579
  %1041 = vmatpush1.bf16.msra.mxu0 %v578
  %1042 = vmatprep.subr.bf16.mxu0 %v595
  %1043 = vmatpush1.bf16.msra.mxu0 %v594
  %1044 = vmatprep.subr.bf16.mxu0 %v611
  %1045 = vmatpush1.bf16.msra.mxu0 %v610
  %1046 = vmatprep.subr.bf16.mxu0 %v627
  %1047 = vmatpush1.bf16.msra.mxu0 %v626
  %1048 = vmatprep.subr.bf16.mxu0 %v643
  %1049 = vmatpush1.bf16.msra.mxu0 %v642
  %1050 = vmatprep.subr.bf16.mxu0 %v659
  %1051 = vmatpush1.bf16.msra.mxu0 %v658
  %1052 = vmatprep.subr.bf16.mxu0 0
  %1053 = vmatpush1.bf16.msra.mxu0 0
  %1054 = vmatprep.subr.bf16.mxu0 0
  %1055 = vmatpush1.bf16.msra.mxu0 0
  %1056 = vmatprep.subr.bf16.mxu0 0
  %1057 = vmatpush1.bf16.msra.mxu0 0
  %1058 = vmatprep.subr.bf16.mxu0 0
  %1059 = vmatpush1.bf16.msra.mxu0 0
  %1060 = vmatprep.subr.bf16.mxu0 0
  %1061 = vmatpush1.bf16.msra.mxu0 0
  %1062 = vmatprep.subr.bf16.mxu0 0
  %1063 = vmatpush1.bf16.msra.mxu0 0
  %1064 = vmatprep.subr.bf16.mxu0 0
  %1065 = vmatpush1.bf16.msra.mxu0 0
  %1066 = vmatprep.subr.bf16.mxu0 0
  %1067 = vmatpush1.bf16.msra.mxu0 0
  %1068 = vmatprep.mubr.bf16.mxu0 0
  %1069 = vmatmul.mubr.bf16.gmra.mrb[0].mxu0 %v15
  %v1070 = vpop.f32.mrb[0].mxu0
  %v1071 = vadd.f32 %v148, %v1070
  %v1072 = vpop.f32.mrb[0].mxu0
  %v1073 = vadd.f32 %v148, %v1072
  %v1074 = vpop.f32.mrb[0].mxu0
  %v1075 = vpop.f32.mrb[0].mxu0
  %1076 = vdwg.mxu0
  %1077 = vmatprep.subr.bf16.mxu0 %v549
  %1078 = vmatpush1.bf16.msra.mxu0 %v548
  %1079 = vmatprep.subr.bf16.mxu0 %v565
  %1080 = vmatpush1.bf16.msra.mxu0 %v564
  %1081 = vmatprep.subr.bf16.mxu0 %v581
  %1082 = vmatpush1.bf16.msra.mxu0 %v580
  %1083 = vmatprep.subr.bf16.mxu0 %v597
  %1084 = vmatpush1.bf16.msra.mxu0 %v596
  %1085 = vmatprep.subr.bf16.mxu0 %v613
  %1086 = vmatpush1.bf16.msra.mxu0 %v612
  %1087 = vmatprep.subr.bf16.mxu0 %v629
  %1088 = vmatpush1.bf16.msra.mxu0 %v628
  %1089 = vmatprep.subr.bf16.mxu0 %v645
  %1090 = vmatpush1.bf16.msra.mxu0 %v644
  %1091 = vmatprep.subr.bf16.mxu0 %v661
  %1092 = vmatpush1.bf16.msra.mxu0 %v660
  %1093 = vmatprep.subr.bf16.mxu0 0
  %1094 = vmatpush1.bf16.msra.mxu0 0
  %1095 = vmatprep.subr.bf16.mxu0 0
  %1096 = vmatpush1.bf16.msra.mxu0 0
  %1097 = vmatprep.subr.bf16.mxu0 0
  %1098 = vmatpush1.bf16.msra.mxu0 0
  %1099 = vmatprep.subr.bf16.mxu0 0
  %1100 = vmatpush1.bf16.msra.mxu0 0
  %1101 = vmatprep.subr.bf16.mxu0 0
  %1102 = vmatpush1.bf16.msra.mxu0 0
  %1103 = vmatprep.subr.bf16.mxu0 0
  %1104 = vmatpush1.bf16.msra.mxu0 0
  %1105 = vmatprep.subr.bf16.mxu0 0
  %1106 = vmatpush1.bf16.msra.mxu0 0
  %1107 = vmatprep.subr.bf16.mxu0 0
  %1108 = vmatpush1.bf16.msra.mxu0 0
  %1109 = vmatprep.mubr.bf16.mxu0 0
  %1110 = vmatmul.mubr.bf16.gmra.mrb[0].mxu0 %v15
  %v1111 = vpop.f32.mrb[0].mxu0
  %v1112 = vadd.f32 %v148, %v1111
  %v1113 = vpop.f32.mrb[0].mxu0
  %v1114 = vadd.f32 %v148, %v1113
  %v1115 = vpop.f32.mrb[0].mxu0
  %v1116 = vpop.f32.mrb[0].mxu0
  %1117 = vdwg.mxu0
  %v1118 = vtanh.pop %v825
  %v1119 = vtanh.pop %v827
  %v1120 = vtanh.pop %v866
  %v1121 = vtanh.pop %v868
  %v1122 = vtanh.pop %v907
  %v1123 = vtanh.pop %v909
  %v1124 = vtanh.pop %v948
  %v1125 = vtanh.pop %v950
  %v1126 = vtanh.pop %v989
  %v1127 = vtanh.pop %v991
  %v1128 = vtanh.pop %v1030
  %v1129 = vtanh.pop %v1032
  %v1130 = vtanh.pop %v1071
  %v1131 = vtanh.pop %v1073
  %v1132 = vtanh.pop %v1112
  %v1133 = vtanh.pop %v1114
  %v1150 = vcombine.low %v1118, %v1119
  %v1151 = vcombine.low %v1120, %v1121
  %v1152 = vcombine.low %v1122, %v1123
  %v1153 = vcombine.low %v1124, %v1125
  %v1154 = vcombine.low %v1126, %v1127
  %v1155 = vcombine.low %v1128, %v1129
  %v1156 = vcombine.low %v1130, %v1131
  %v1157 = vcombine.low %v1132, %v1133
  %1166 = vst [vmem:[%s3] sm:$0x77] %v1150
  %1167 = vst [vmem:[%s3 + $0x8] sm:$0x77] %v1151
  %1168 = vst [vmem:[%s3 + $0x10] sm:$0x77] %v1152
  %1169 = vst [vmem:[%s3 + $0x18] sm:$0x77] %v1153
  %1170 = vst [vmem:[%s3 + $0x20] sm:$0x77] %v1154
  %1171 = vst [vmem:[%s3 + $0x28] sm:$0x77] %v1155
  %1172 = vst [vmem:[%s3 + $0x30] sm:$0x77] %v1156
  %1173 = vst [vmem:[%s3 + $0x38] sm:$0x77] %v1157
  // Predicated region
  $region14: #{netG_v2_forward.9} parent=0 // pred_check
    _
  $region15: #{netG_v2_forward.9} parent=0 // pred_check_branch
    %1175 = sbr.rel (0) target = $region17
  $region16: #{netG_v2_forward.9} parent=0 // pred_region
    _
  $region17: #{netG_v2_forward.9} parent=0 // pred_fallthru
    _
  // Predicated region
  $region18: #{netG_v2_forward.9} parent=0 // pred_check
    _
  $region19: #{netG_v2_forward.9} parent=0 // pred_check_branch
    %1177 = sbr.rel (0) target = $region21
  $region20: #{netG_v2_forward.9} parent=0 // pred_region
    _
  $region21: #{netG_v2_forward.9} parent=0 // pred_fallthru
    _

</llo_original>
